<compile_context>
chip_gen: v7x
topology: tpu7x:2x2x1
jax: 0.10.0
libtpu: 0.0.40
codegen_flags: <defaults>
</compile_context>

<pallas_src>
import functools

import jax
import jax.numpy as jnp
import numpy as np
from jax.experimental import pallas as pl
from jax.experimental.pallas import tpu as pltpu


# ------------------------------ fused kernel --------------------------------

def _basic_block_kernel(x_ref, w1_ref, s1_ref, b1_ref, w2_ref, s2_ref, b2_ref,
                        *rest, H, W, Ho, Wo, stride, has_shortcut):
    """Fused BasicBlock body for one image.

    x_ref:   (1, H, W, Cin)            input tile (compute dtype)
    w1_ref:  (3, 3, Cin, Cout)         conv1 weights
    w2_ref:  (3, 3, Cout, Cout)        conv2 weights
    s*/b*:   (1, Cout) f32             folded BatchNorm scale/bias
    ws_ref:  (Cin, Cout)               1x1 shortcut weights (if projection)
    out_ref: (1, Ho, Wo, Cout)
    scratch: xpad (H+2, W+2, Cin) f32, y1pad (Ho+2, Wo+2, Cout) f32,
             acc (Ho, Wo, Cout) f32
    """
    if has_shortcut:
        ws_ref, ss_ref, bs_ref, out_ref, xpad_ref, y1pad_ref, acc_ref = rest
    else:
        out_ref, xpad_ref, y1pad_ref, acc_ref = rest

    mxu_dtype = w1_ref.dtype  # bf16 (or f32) MXU operands, f32 accumulation

    # ---- zero-padded input tile in VMEM (replaces wrapper-side jnp.pad) ----
    xpad_ref[...] = jnp.zeros_like(xpad_ref)
    xpad_ref[pl.ds(1, H), pl.ds(1, W), :] = x_ref[0].astype(jnp.float32)

    def strided_window(ref, off_h, off_w, nh, nw):
        if stride == 1:
            return ref[pl.ds(off_h, nh), pl.ds(off_w, nw), :]
        return ref[pl.ds(off_h, nh, stride=stride),
                   pl.ds(off_w, nw, stride=stride), :]

    # ---- conv1: 3x3 / stride / pad 1, fused BN + ReLU (in-kernel stride) ---
    acc_ref[...] = jnp.zeros_like(acc_ref)
    for kh in range(3):
        for kw in range(3):
            patch = strided_window(xpad_ref, kh, kw, Ho, Wo).astype(mxu_dtype)
            acc_ref[...] += jnp.dot(patch, w1_ref[kh, kw],
                                    preferred_element_type=jnp.float32)
    y1 = jnp.maximum(acc_ref[...] * s1_ref[0, :] + b1_ref[0, :], 0.0)

    # ---- stash conv1 output (+ zero halo) in VMEM: no HBM round trip -------
    y1pad_ref[...] = jnp.zeros_like(y1pad_ref)
    y1pad_ref[pl.ds(1, Ho), pl.ds(1, Wo), :] = y1

    # ---- shortcut branch, fused: 1x1 strided conv + BN, or identity --------
    if has_shortcut:
        xs = strided_window(xpad_ref, 1, 1, Ho, Wo).astype(ws_ref.dtype)
        sc = jnp.dot(xs, ws_ref[...], preferred_element_type=jnp.float32)
        sc = sc * ss_ref[0, :] + bs_ref[0, :]
    else:
        sc = x_ref[0].astype(jnp.float32)

    # ---- conv2: 3x3 / stride 1 / pad 1, fused BN + residual add + ReLU -----
    acc_ref[...] = jnp.zeros_like(acc_ref)
    for kh in range(3):
        for kw in range(3):
            patch = y1pad_ref[pl.ds(kh, Ho), pl.ds(kw, Wo), :].astype(w2_ref.dtype)
            acc_ref[...] += jnp.dot(patch, w2_ref[kh, kw],
                                    preferred_element_type=jnp.float32)
    y2 = acc_ref[...] * s2_ref[0, :] + b2_ref[0, :] + sc
    out_ref[0] = jnp.maximum(y2, 0.0).astype(out_ref.dtype)


# ------------------------------ wrappers -------------------------------------

def fold_bn(gamma, beta, mean, var, eps=1e-5):
    scale = gamma / jnp.sqrt(var + eps)
    bias = beta - mean * scale
    return scale.reshape(1, -1), bias.reshape(1, -1)


def basic_block_nhwc(x, params, stride, *, compute_dtype=None):
    """Fused BasicBlock forward on NHWC input (eval-mode folded BatchNorm)."""
    N, H, W, Cin = x.shape
    Cout = params["w1"].shape[-1]
    Ho = (H - 1) // stride + 1
    Wo = (W - 1) // stride + 1
    has_shortcut = (stride != 1) or (Cin != Cout)
    cdt = compute_dtype if compute_dtype is not None else x.dtype

    def spec4(shape):
        return pl.BlockSpec(shape, lambda n: (0, 0, 0, 0))

    def spec2(shape):
        return pl.BlockSpec(shape, lambda n: (0, 0))

    in_specs = [
        pl.BlockSpec((1, H, W, Cin), lambda n: (n, 0, 0, 0)),
        spec4((3, 3, Cin, Cout)),
        spec2((1, Cout)), spec2((1, Cout)),
        spec4((3, 3, Cout, Cout)),
        spec2((1, Cout)), spec2((1, Cout)),
    ]
    args = [x.astype(cdt),
            params["w1"].astype(cdt), params["s1"], params["b1"],
            params["w2"].astype(cdt), params["s2"], params["b2"]]
    if has_shortcut:
        in_specs += [spec2((Cin, Cout)), spec2((1, Cout)), spec2((1, Cout))]
        args += [params["ws"].astype(cdt), params["ss"], params["bs"]]

    kernel = functools.partial(
        _basic_block_kernel, H=H, W=W, Ho=Ho, Wo=Wo,
        stride=stride, has_shortcut=has_shortcut)

    return pl.pallas_call(
        kernel,
        out_shape=jax.ShapeDtypeStruct((N, Ho, Wo, Cout), cdt),
        grid=(N,),
        in_specs=in_specs,
        out_specs=pl.BlockSpec((1, Ho, Wo, Cout), lambda n: (n, 0, 0, 0)),
        scratch_shapes=[
            pltpu.VMEM((H + 2, W + 2, Cin), jnp.float32),     # padded input
            pltpu.VMEM((Ho + 2, Wo + 2, Cout), jnp.float32),  # padded conv1 out
            pltpu.VMEM((Ho, Wo, Cout), jnp.float32),          # accumulator
        ],
        compiler_params=pltpu.CompilerParams(dimension_semantics=("parallel",)),
    )(*args)


def basic_block_forward(x_nchw, params, stride, *, compute_dtype=None):
    """NCHW wrapper matching the PyTorch module interface.

    NOTE: in a chained ResNet keep activations NHWC end-to-end and call
    basic_block_nhwc directly; transpose only at the model boundary.
    """
    x = jnp.transpose(x_nchw, (0, 2, 3, 1))
    out = basic_block_nhwc(x, params, stride, compute_dtype=compute_dtype)
    return jnp.transpose(out, (0, 3, 1, 2))


# ------------------------------ reference (plain JAX) ------------------------

def _ref_conv(x_nhwc, w_hwio, stride, padding):
    return jax.lax.conv_general_dilated(
        x_nhwc, w_hwio, (stride, stride), padding,
        dimension_numbers=("NHWC", "HWIO", "NHWC"))


def ref_basic_block(x_nchw, params, stride):
    x = jnp.transpose(x_nchw, (0, 2, 3, 1))
    in_ch = x.shape[-1]
    out_ch = params["w1"].shape[-1]
    y = _ref_conv(x, params["w1"], stride, [(1, 1), (1, 1)])
    y = jnp.maximum(y * params["s1"][0] + params["b1"][0], 0.0)
    y = _ref_conv(y, params["w2"], 1, [(1, 1), (1, 1)])
    y = y * params["s2"][0] + params["b2"][0]
    if stride != 1 or in_ch != out_ch:
        sc = _ref_conv(x, params["ws"][None, None], stride, "VALID")
        sc = sc * params["ss"][0] + params["bs"][0]
    else:
        sc = x
    out = jnp.maximum(y + sc, 0.0)
    return jnp.transpose(out, (0, 3, 1, 2))


# ------------------------------ main -----------------------------------------

if __name__ == "__main__":
    key = jax.random.PRNGKey(0)
    ks = jax.random.split(key, 12)

    def bn_params(k, c):
        k0, k1, k2, k3 = jax.random.split(k, 4)
        gamma = 1.0 + 0.1 * jax.random.normal(k0, (c,), jnp.float32)
        beta = 0.1 * jax.random.normal(k1, (c,), jnp.float32)
        mean = 0.1 * jax.random.normal(k2, (c,), jnp.float32)
        var = jax.random.uniform(k3, (c,), jnp.float32, 0.5, 1.5)
        return fold_bn(gamma, beta, mean, var)

    # --- case 1: stride-2 block with projection shortcut (4 -> 8 channels) ---
    N, C_in, H, W = 2, 4, 16, 16
    C_out, stride = 8, 2
    s1, b1 = bn_params(ks[3], C_out)
    s2, b2 = bn_params(ks[4], C_out)
    ss, bs = bn_params(ks[5], C_out)
    params = dict(
        w1=0.1 * jax.random.normal(ks[0], (3, 3, C_in, C_out), jnp.float32),
        w2=0.1 * jax.random.normal(ks[1], (3, 3, C_out, C_out), jnp.float32),
        ws=0.1 * jax.random.normal(ks[2], (C_in, C_out), jnp.float32),
        s1=s1, b1=b1, s2=s2, b2=b2, ss=ss, bs=bs,
    )
    x = jax.random.normal(ks[6], (N, C_in, H, W), jnp.float32)

    out = jax.block_until_ready(basic_block_forward(x, params, stride))
    ref = jax.block_until_ready(ref_basic_block(x, params, stride))
    assert out.shape == (N, C_out, H // stride, W // stride), out.shape
    np.testing.assert_allclose(np.asarray(out), np.asarray(ref),
                               rtol=1e-4, atol=1e-4)

    # bf16 activations / weights with f32 accumulation (MXU-friendly path).
    out_bf16 = jax.block_until_ready(
        basic_block_forward(x, params, stride, compute_dtype=jnp.bfloat16))
    np.testing.assert_allclose(np.asarray(out_bf16.astype(jnp.float32)),
                               np.asarray(ref), rtol=1e-1, atol=1e-1)

    # --- case 2: stride-1 block with identity shortcut (8 -> 8 channels) -----
    C2 = 8
    s1i, b1i = bn_params(ks[9], C2)
    s2i, b2i = bn_params(ks[10], C2)
    params_id = dict(
        w1=0.1 * jax.random.normal(ks[7], (3, 3, C2, C2), jnp.float32),
        w2=0.1 * jax.random.normal(ks[8], (3, 3, C2, C2), jnp.float32),
        s1=s1i, b1=b1i, s2=s2i, b2=b2i,
    )
    x2 = jax.random.normal(ks[11], (N, C2, H, W), jnp.float32)
    out2 = jax.block_until_ready(basic_block_forward(x2, params_id, 1))
    ref2 = jax.block_until_ready(ref_basic_block(x2, params_id, 1))
    np.testing.assert_allclose(np.asarray(out2), np.asarray(ref2),
                               rtol=1e-4, atol=1e-4)

    print("KERNEL_OK")
</pallas_src>

<mosaic_0001>
module attributes {stable_mosaic.version = 11 : i64} {
  func.func @_basic_block_kernel(%arg0: i32, %arg1: memref<1x16x16x4xf32, #tpu.memory_space<vmem>>, %arg2: memref<3x3x4x8xf32, #tpu.memory_space<vmem>>, %arg3: memref<1x8xf32, #tpu.memory_space<vmem>>, %arg4: memref<1x8xf32, #tpu.memory_space<vmem>>, %arg5: memref<3x3x8x8xf32, #tpu.memory_space<vmem>>, %arg6: memref<1x8xf32, #tpu.memory_space<vmem>>, %arg7: memref<1x8xf32, #tpu.memory_space<vmem>>, %arg8: memref<4x8xf32, #tpu.memory_space<vmem>>, %arg9: memref<1x8xf32, #tpu.memory_space<vmem>>, %arg10: memref<1x8xf32, #tpu.memory_space<vmem>>, %arg11: memref<1x8x8x8xf32, #tpu.memory_space<vmem>>, %arg12: memref<18x18x4xf32, #tpu.memory_space<vmem>>, %arg13: memref<10x10x8xf32, #tpu.memory_space<vmem>>, %arg14: memref<8x8x8xf32, #tpu.memory_space<vmem>>) attributes {dimension_semantics = [#tpu.dimension_semantics<parallel>], iteration_bounds = array<i64: 2>, scalar_prefetch = 0 : i64, scratch_operands = 3 : i64, tpu.core_type = #tpu.core_type<tc>, window_params = [{transform_indices = @transform_0, window_bounds = array<i64: 1, 16, 16, 4>}, {pipeline_mode = #tpu.pipeline_mode<synchronous>, transform_indices = @transform_1, window_bounds = array<i64: 3, 3, 4, 8>}, {pipeline_mode = #tpu.pipeline_mode<synchronous>, transform_indices = @transform_2, window_bounds = array<i64: 1, 8>}, {pipeline_mode = #tpu.pipeline_mode<synchronous>, transform_indices = @transform_3, window_bounds = array<i64: 1, 8>}, {pipeline_mode = #tpu.pipeline_mode<synchronous>, transform_indices = @transform_4, window_bounds = array<i64: 3, 3, 8, 8>}, {pipeline_mode = #tpu.pipeline_mode<synchronous>, transform_indices = @transform_5, window_bounds = array<i64: 1, 8>}, {pipeline_mode = #tpu.pipeline_mode<synchronous>, transform_indices = @transform_6, window_bounds = array<i64: 1, 8>}, {pipeline_mode = #tpu.pipeline_mode<synchronous>, transform_indices = @transform_7, window_bounds = array<i64: 4, 8>}, {pipeline_mode = #tpu.pipeline_mode<synchronous>, transform_indices = @transform_8, window_bounds = array<i64: 1, 8>}, {pipeline_mode = #tpu.pipeline_mode<synchronous>, transform_indices = @transform_9, window_bounds = array<i64: 1, 8>}, {transform_indices = @transform_10, window_bounds = array<i64: 1, 8, 8, 8>}]} {
    %cst = arith.constant 0.000000e+00 : f32
    %0 = vector.broadcast %cst : f32 to vector<18x18x4xf32>
    %c0 = arith.constant 0 : index
    %c0_0 = arith.constant 0 : index
    %c0_1 = arith.constant 0 : index
    %1 = vector.load %arg12[%c0, %c0_0, %c0_1] : memref<18x18x4xf32, #tpu.memory_space<vmem>>, vector<18x18x4xf32>
    tpu.vector_store %arg12[%c0, %c0_0, %c0_1], %0 {strides = array<i32>} : memref<18x18x4xf32, #tpu.memory_space<vmem>>, vector<18x18x4xf32>,
    %c0_2 = arith.constant 0 : index
    %c0_3 = arith.constant 0 : index
    %c0_4 = arith.constant 0 : index
    %c0_5 = arith.constant 0 : index
    %2 = vector.load %arg1[%c0_2, %c0_3, %c0_4, %c0_5] : memref<1x16x16x4xf32, #tpu.memory_space<vmem>>, vector<1x16x16x4xf32>
    %3 = vector.shape_cast %2 : vector<1x16x16x4xf32> to vector<16x16x4xf32>
    %c1 = arith.constant 1 : index
    %c1_6 = arith.constant 1 : index
    %c0_7 = arith.constant 0 : index
    %4 = vector.load %arg12[%c1, %c1_6, %c0_7] : memref<18x18x4xf32, #tpu.memory_space<vmem>>, vector<16x16x4xf32>
    tpu.vector_store %arg12[%c1, %c1_6, %c0_7], %3 {strides = array<i32>} : memref<18x18x4xf32, #tpu.memory_space<vmem>>, vector<16x16x4xf32>,
    %cst_8 = arith.constant 0.000000e+00 : f32
    %5 = vector.broadcast %cst_8 : f32 to vector<8x8x8xf32>
    %c0_9 = arith.constant 0 : index
    %c0_10 = arith.constant 0 : index
    %c0_11 = arith.constant 0 : index
    %6 = vector.load %arg14[%c0_9, %c0_10, %c0_11] : memref<8x8x8xf32, #tpu.memory_space<vmem>>, vector<8x8x8xf32>
    tpu.vector_store %arg14[%c0_9, %c0_10, %c0_11], %5 {strides = array<i32>} : memref<8x8x8xf32, #tpu.memory_space<vmem>>, vector<8x8x8xf32>,
    %c0_12 = arith.constant 0 : index
    %c0_13 = arith.constant 0 : index
    %c0_14 = arith.constant 0 : index
    %7 = tpu.strided_load %arg12[%c0_12, %c0_13, %c0_14] {strides = array<i32: 2, 2, 1>} : memref<18x18x4xf32, #tpu.memory_space<vmem>>, vector<8x8x4xf32>
    %c0_15 = arith.constant 0 : index
    %c0_16 = arith.constant 0 : index
    %c0_17 = arith.constant 0 : index
    %8 = vector.load %arg14[%c0_15, %c0_16, %c0_17] : memref<8x8x8xf32, #tpu.memory_space<vmem>>, vector<8x8x8xf32>
    %c0_18 = arith.constant 0 : index
    %c0_19 = arith.constant 0 : index
    %c0_20 = arith.constant 0 : index
    %c0_21 = arith.constant 0 : index
    %9 = vector.load %arg2[%c0_18, %c0_19, %c0_20, %c0_21] : memref<3x3x4x8xf32, #tpu.memory_space<vmem>>, vector<1x1x4x8xf32>
    %10 = vector.shape_cast %9 : vector<1x1x4x8xf32> to vector<4x8xf32>
    %cst_22 = arith.constant dense<0.000000e+00> : vector<8x8x8xf32>
    %11 = tpu.matmul %7, %10, %cst_22 {dimension_numbers = #tpu.dot_dimension_numbers<[2], [0], [0, 1], [1], [0, 0, 0, 1, 1, 1], [], []>} : vector<8x8x4xf32>, vector<4x8xf32>, vector<8x8x8xf32> -> vector<8x8x8xf32>
    %12 = arith.addf %8, %11 : vector<8x8x8xf32>
    %c0_23 = arith.constant 0 : index
    %c0_24 = arith.constant 0 : index
    %c0_25 = arith.constant 0 : index
    %13 = vector.load %arg14[%c0_23, %c0_24, %c0_25] : memref<8x8x8xf32, #tpu.memory_space<vmem>>, vector<8x8x8xf32>
    tpu.vector_store %arg14[%c0_23, %c0_24, %c0_25], %12 {strides = array<i32>} : memref<8x8x8xf32, #tpu.memory_space<vmem>>, vector<8x8x8xf32>,
    %c0_26 = arith.constant 0 : index
    %c1_27 = arith.constant 1 : index
    %c0_28 = arith.constant 0 : index
    %14 = tpu.strided_load %arg12[%c0_26, %c1_27, %c0_28] {strides = array<i32: 2, 2, 1>} : memref<18x18x4xf32, #tpu.memory_space<vmem>>, vector<8x8x4xf32>
    %c0_29 = arith.constant 0 : index
    %c0_30 = arith.constant 0 : index
    %c0_31 = arith.constant 0 : index
    %15 = vector.load %arg14[%c0_29, %c0_30, %c0_31] : memref<8x8x8xf32, #tpu.memory_space<vmem>>, vector<8x8x8xf32>
    %c0_32 = arith.constant 0 : index
    %c1_33 = arith.constant 1 : index
    %c0_34 = arith.constant 0 : index
    %c0_35 = arith.constant 0 : index
    %16 = vector.load %arg2[%c0_32, %c1_33, %c0_34, %c0_35] : memref<3x3x4x8xf32, #tpu.memory_space<vmem>>, vector<1x1x4x8xf32>
    %17 = vector.shape_cast %16 : vector<1x1x4x8xf32> to vector<4x8xf32>
    %cst_36 = arith.constant dense<0.000000e+00> : vector<8x8x8xf32>
    %18 = tpu.matmul %14, %17, %cst_36 {dimension_numbers = #tpu.dot_dimension_numbers<[2], [0], [0, 1], [1], [0, 0, 0, 1, 1, 1], [], []>} : vector<8x8x4xf32>, vector<4x8xf32>, vector<8x8x8xf32> -> vector<8x8x8xf32>
    %19 = arith.addf %15, %18 : vector<8x8x8xf32>
    %c0_37 = arith.constant 0 : index
    %c0_38 = arith.constant 0 : index
    %c0_39 = arith.constant 0 : index
    %20 = vector.load %arg14[%c0_37, %c0_38, %c0_39] : memref<8x8x8xf32, #tpu.memory_space<vmem>>, vector<8x8x8xf32>
    tpu.vector_store %arg14[%c0_37, %c0_38, %c0_39], %19 {strides = array<i32>} : memref<8x8x8xf32, #tpu.memory_space<vmem>>, vector<8x8x8xf32>,
    %c0_40 = arith.constant 0 : index
    %c2 = arith.constant 2 : index
    %c0_41 = arith.constant 0 : index
    %21 = tpu.strided_load %arg12[%c0_40, %c2, %c0_41] {strides = array<i32: 2, 2, 1>} : memref<18x18x4xf32, #tpu.memory_space<vmem>>, vector<8x8x4xf32>
    %c0_42 = arith.constant 0 : index
    %c0_43 = arith.constant 0 : index
    %c0_44 = arith.constant 0 : index
    %22 = vector.load %arg14[%c0_42, %c0_43, %c0_44] : memref<8x8x8xf32, #tpu.memory_space<vmem>>, vector<8x8x8xf32>
    %c0_45 = arith.constant 0 : index
    %c2_46 = arith.constant 2 : index
    %c0_47 = arith.constant 0 : index
    %c0_48 = arith.constant 0 : index
    %23 = vector.load %arg2[%c0_45, %c2_46, %c0_47, %c0_48] : memref<3x3x4x8xf32, #tpu.memory_space<vmem>>, vector<1x1x4x8xf32>
    %24 = vector.shape_cast %23 : vector<1x1x4x8xf32> to vector<4x8xf32>
    %cst_49 = arith.constant dense<0.000000e+00> : vector<8x8x8xf32>
    %25 = tpu.matmul %21, %24, %cst_49 {dimension_numbers = #tpu.dot_dimension_numbers<[2], [0], [0, 1], [1], [0, 0, 0, 1, 1, 1], [], []>} : vector<8x8x4xf32>, vector<4x8xf32>, vector<8x8x8xf32> -> vector<8x8x8xf32>
    %26 = arith.addf %22, %25 : vector<8x8x8xf32>
    %c0_50 = arith.constant 0 : index
    %c0_51 = arith.constant 0 : index
    %c0_52 = arith.constant 0 : index
    %27 = vector.load %arg14[%c0_50, %c0_51, %c0_52] : memref<8x8x8xf32, #tpu.memory_space<vmem>>, vector<8x8x8xf32>
    tpu.vector_store %arg14[%c0_50, %c0_51, %c0_52], %26 {strides = array<i32>} : memref<8x8x8xf32, #tpu.memory_space<vmem>>, vector<8x8x8xf32>,
    %c1_53 = arith.constant 1 : index
    %c0_54 = arith.constant 0 : index
    %c0_55 = arith.constant 0 : index
    %28 = tpu.strided_load %arg12[%c1_53, %c0_54, %c0_55] {strides = array<i32: 2, 2, 1>} : memref<18x18x4xf32, #tpu.memory_space<vmem>>, vector<8x8x4xf32>
    %c0_56 = arith.constant 0 : index
    %c0_57 = arith.constant 0 : index
    %c0_58 = arith.constant 0 : index
    %29 = vector.load %arg14[%c0_56, %c0_57, %c0_58] : memref<8x8x8xf32, #tpu.memory_space<vmem>>, vector<8x8x8xf32>
    %c1_59 = arith.constant 1 : index
    %c0_60 = arith.constant 0 : index
    %c0_61 = arith.constant 0 : index
    %c0_62 = arith.constant 0 : index
    %30 = vector.load %arg2[%c1_59, %c0_60, %c0_61, %c0_62] : memref<3x3x4x8xf32, #tpu.memory_space<vmem>>, vector<1x1x4x8xf32>
    %31 = vector.shape_cast %30 : vector<1x1x4x8xf32> to vector<4x8xf32>
    %cst_63 = arith.constant dense<0.000000e+00> : vector<8x8x8xf32>
    %32 = tpu.matmul %28, %31, %cst_63 {dimension_numbers = #tpu.dot_dimension_numbers<[2], [0], [0, 1], [1], [0, 0, 0, 1, 1, 1], [], []>} : vector<8x8x4xf32>, vector<4x8xf32>, vector<8x8x8xf32> -> vector<8x8x8xf32>
    %33 = arith.addf %29, %32 : vector<8x8x8xf32>
    %c0_64 = arith.constant 0 : index
    %c0_65 = arith.constant 0 : index
    %c0_66 = arith.constant 0 : index
    %34 = vector.load %arg14[%c0_64, %c0_65, %c0_66] : memref<8x8x8xf32, #tpu.memory_space<vmem>>, vector<8x8x8xf32>
    tpu.vector_store %arg14[%c0_64, %c0_65, %c0_66], %33 {strides = array<i32>} : memref<8x8x8xf32, #tpu.memory_space<vmem>>, vector<8x8x8xf32>,
    %c1_67 = arith.constant 1 : index
    %c1_68 = arith.constant 1 : index
    %c0_69 = arith.constant 0 : index
    %35 = tpu.strided_load %arg12[%c1_67, %c1_68, %c0_69] {strides = array<i32: 2, 2, 1>} : memref<18x18x4xf32, #tpu.memory_space<vmem>>, vector<8x8x4xf32>
    %c0_70 = arith.constant 0 : index
    %c0_71 = arith.constant 0 : index
    %c0_72 = arith.constant 0 : index
    %36 = vector.load %arg14[%c0_70, %c0_71, %c0_72] : memref<8x8x8xf32, #tpu.memory_space<vmem>>, vector<8x8x8xf32>
    %c1_73 = arith.constant 1 : index
    %c1_74 = arith.constant 1 : index
    %c0_75 = arith.constant 0 : index
    %c0_76 = arith.constant 0 : index
    %37 = vector.load %arg2[%c1_73, %c1_74, %c0_75, %c0_76] : memref<3x3x4x8xf32, #tpu.memory_space<vmem>>, vector<1x1x4x8xf32>
    %38 = vector.shape_cast %37 : vector<1x1x4x8xf32> to vector<4x8xf32>
    %cst_77 = arith.constant dense<0.000000e+00> : vector<8x8x8xf32>
    %39 = tpu.matmul %35, %38, %cst_77 {dimension_numbers = #tpu.dot_dimension_numbers<[2], [0], [0, 1], [1], [0, 0, 0, 1, 1, 1], [], []>} : vector<8x8x4xf32>, vector<4x8xf32>, vector<8x8x8xf32> -> vector<8x8x8xf32>
    %40 = arith.addf %36, %39 : vector<8x8x8xf32>
    %c0_78 = arith.constant 0 : index
    %c0_79 = arith.constant 0 : index
    %c0_80 = arith.constant 0 : index
    %41 = vector.load %arg14[%c0_78, %c0_79, %c0_80] : memref<8x8x8xf32, #tpu.memory_space<vmem>>, vector<8x8x8xf32>
    tpu.vector_store %arg14[%c0_78, %c0_79, %c0_80], %40 {strides = array<i32>} : memref<8x8x8xf32, #tpu.memory_space<vmem>>, vector<8x8x8xf32>,
    %c1_81 = arith.constant 1 : index
    %c2_82 = arith.constant 2 : index
    %c0_83 = arith.constant 0 : index
    %42 = tpu.strided_load %arg12[%c1_81, %c2_82, %c0_83] {strides = array<i32: 2, 2, 1>} : memref<18x18x4xf32, #tpu.memory_space<vmem>>, vector<8x8x4xf32>
    %c0_84 = arith.constant 0 : index
    %c0_85 = arith.constant 0 : index
    %c0_86 = arith.constant 0 : index
    %43 = vector.load %arg14[%c0_84, %c0_85, %c0_86] : memref<8x8x8xf32, #tpu.memory_space<vmem>>, vector<8x8x8xf32>
    %c1_87 = arith.constant 1 : index
    %c2_88 = arith.constant 2 : index
    %c0_89 = arith.constant 0 : index
    %c0_90 = arith.constant 0 : index
    %44 = vector.load %arg2[%c1_87, %c2_88, %c0_89, %c0_90] : memref<3x3x4x8xf32, #tpu.memory_space<vmem>>, vector<1x1x4x8xf32>
    %45 = vector.shape_cast %44 : vector<1x1x4x8xf32> to vector<4x8xf32>
    %cst_91 = arith.constant dense<0.000000e+00> : vector<8x8x8xf32>
    %46 = tpu.matmul %42, %45, %cst_91 {dimension_numbers = #tpu.dot_dimension_numbers<[2], [0], [0, 1], [1], [0, 0, 0, 1, 1, 1], [], []>} : vector<8x8x4xf32>, vector<4x8xf32>, vector<8x8x8xf32> -> vector<8x8x8xf32>
    %47 = arith.addf %43, %46 : vector<8x8x8xf32>
    %c0_92 = arith.constant 0 : index
    %c0_93 = arith.constant 0 : index
    %c0_94 = arith.constant 0 : index
    %48 = vector.load %arg14[%c0_92, %c0_93, %c0_94] : memref<8x8x8xf32, #tpu.memory_space<vmem>>, vector<8x8x8xf32>
    tpu.vector_store %arg14[%c0_92, %c0_93, %c0_94], %47 {strides = array<i32>} : memref<8x8x8xf32, #tpu.memory_space<vmem>>, vector<8x8x8xf32>,
    %c2_95 = arith.constant 2 : index
    %c0_96 = arith.constant 0 : index
    %c0_97 = arith.constant 0 : index
    %49 = tpu.strided_load %arg12[%c2_95, %c0_96, %c0_97] {strides = array<i32: 2, 2, 1>} : memref<18x18x4xf32, #tpu.memory_space<vmem>>, vector<8x8x4xf32>
    %c0_98 = arith.constant 0 : index
    %c0_99 = arith.constant 0 : index
    %c0_100 = arith.constant 0 : index
    %50 = vector.load %arg14[%c0_98, %c0_99, %c0_100] : memref<8x8x8xf32, #tpu.memory_space<vmem>>, vector<8x8x8xf32>
    %c2_101 = arith.constant 2 : index
    %c0_102 = arith.constant 0 : index
    %c0_103 = arith.constant 0 : index
    %c0_104 = arith.constant 0 : index
    %51 = vector.load %arg2[%c2_101, %c0_102, %c0_103, %c0_104] : memref<3x3x4x8xf32, #tpu.memory_space<vmem>>, vector<1x1x4x8xf32>
    %52 = vector.shape_cast %51 : vector<1x1x4x8xf32> to vector<4x8xf32>
    %cst_105 = arith.constant dense<0.000000e+00> : vector<8x8x8xf32>
    %53 = tpu.matmul %49, %52, %cst_105 {dimension_numbers = #tpu.dot_dimension_numbers<[2], [0], [0, 1], [1], [0, 0, 0, 1, 1, 1], [], []>} : vector<8x8x4xf32>, vector<4x8xf32>, vector<8x8x8xf32> -> vector<8x8x8xf32>
    %54 = arith.addf %50, %53 : vector<8x8x8xf32>
    %c0_106 = arith.constant 0 : index
    %c0_107 = arith.constant 0 : index
    %c0_108 = arith.constant 0 : index
    %55 = vector.load %arg14[%c0_106, %c0_107, %c0_108] : memref<8x8x8xf32, #tpu.memory_space<vmem>>, vector<8x8x8xf32>
    tpu.vector_store %arg14[%c0_106, %c0_107, %c0_108], %54 {strides = array<i32>} : memref<8x8x8xf32, #tpu.memory_space<vmem>>, vector<8x8x8xf32>,
    %c2_109 = arith.constant 2 : index
    %c1_110 = arith.constant 1 : index
    %c0_111 = arith.constant 0 : index
    %56 = tpu.strided_load %arg12[%c2_109, %c1_110, %c0_111] {strides = array<i32: 2, 2, 1>} : memref<18x18x4xf32, #tpu.memory_space<vmem>>, vector<8x8x4xf32>
    %c0_112 = arith.constant 0 : index
    %c0_113 = arith.constant 0 : index
    %c0_114 = arith.constant 0 : index
    %57 = vector.load %arg14[%c0_112, %c0_113, %c0_114] : memref<8x8x8xf32, #tpu.memory_space<vmem>>, vector<8x8x8xf32>
    %c2_115 = arith.constant 2 : index
    %c1_116 = arith.constant 1 : index
    %c0_117 = arith.constant 0 : index
    %c0_118 = arith.constant 0 : index
    %58 = vector.load %arg2[%c2_115, %c1_116, %c0_117, %c0_118] : memref<3x3x4x8xf32, #tpu.memory_space<vmem>>, vector<1x1x4x8xf32>
    %59 = vector.shape_cast %58 : vector<1x1x4x8xf32> to vector<4x8xf32>
    %cst_119 = arith.constant dense<0.000000e+00> : vector<8x8x8xf32>
    %60 = tpu.matmul %56, %59, %cst_119 {dimension_numbers = #tpu.dot_dimension_numbers<[2], [0], [0, 1], [1], [0, 0, 0, 1, 1, 1], [], []>} : vector<8x8x4xf32>, vector<4x8xf32>, vector<8x8x8xf32> -> vector<8x8x8xf32>
    %61 = arith.addf %57, %60 : vector<8x8x8xf32>
    %c0_120 = arith.constant 0 : index
    %c0_121 = arith.constant 0 : index
    %c0_122 = arith.constant 0 : index
    %62 = vector.load %arg14[%c0_120, %c0_121, %c0_122] : memref<8x8x8xf32, #tpu.memory_space<vmem>>, vector<8x8x8xf32>
    tpu.vector_store %arg14[%c0_120, %c0_121, %c0_122], %61 {strides = array<i32>} : memref<8x8x8xf32, #tpu.memory_space<vmem>>, vector<8x8x8xf32>,
    %c2_123 = arith.constant 2 : index
    %c2_124 = arith.constant 2 : index
    %c0_125 = arith.constant 0 : index
    %63 = tpu.strided_load %arg12[%c2_123, %c2_124, %c0_125] {strides = array<i32: 2, 2, 1>} : memref<18x18x4xf32, #tpu.memory_space<vmem>>, vector<8x8x4xf32>
    %c0_126 = arith.constant 0 : index
    %c0_127 = arith.constant 0 : index
    %c0_128 = arith.constant 0 : index
    %64 = vector.load %arg14[%c0_126, %c0_127, %c0_128] : memref<8x8x8xf32, #tpu.memory_space<vmem>>, vector<8x8x8xf32>
    %c2_129 = arith.constant 2 : index
    %c2_130 = arith.constant 2 : index
    %c0_131 = arith.constant 0 : index
    %c0_132 = arith.constant 0 : index
    %65 = vector.load %arg2[%c2_129, %c2_130, %c0_131, %c0_132] : memref<3x3x4x8xf32, #tpu.memory_space<vmem>>, vector<1x1x4x8xf32>
    %66 = vector.shape_cast %65 : vector<1x1x4x8xf32> to vector<4x8xf32>
    %cst_133 = arith.constant dense<0.000000e+00> : vector<8x8x8xf32>
    %67 = tpu.matmul %63, %66, %cst_133 {dimension_numbers = #tpu.dot_dimension_numbers<[2], [0], [0, 1], [1], [0, 0, 0, 1, 1, 1], [], []>} : vector<8x8x4xf32>, vector<4x8xf32>, vector<8x8x8xf32> -> vector<8x8x8xf32>
    %68 = arith.addf %64, %67 : vector<8x8x8xf32>
    %c0_134 = arith.constant 0 : index
    %c0_135 = arith.constant 0 : index
    %c0_136 = arith.constant 0 : index
    %69 = vector.load %arg14[%c0_134, %c0_135, %c0_136] : memref<8x8x8xf32, #tpu.memory_space<vmem>>, vector<8x8x8xf32>
    tpu.vector_store %arg14[%c0_134, %c0_135, %c0_136], %68 {strides = array<i32>} : memref<8x8x8xf32, #tpu.memory_space<vmem>>, vector<8x8x8xf32>,
    %c0_137 = arith.constant 0 : index
    %c0_138 = arith.constant 0 : index
    %c0_139 = arith.constant 0 : index
    %70 = vector.load %arg14[%c0_137, %c0_138, %c0_139] : memref<8x8x8xf32, #tpu.memory_space<vmem>>, vector<8x8x8xf32>
    %c0_140 = arith.constant 0 : index
    %c0_141 = arith.constant 0 : index
    %71 = vector.load %arg3[%c0_140, %c0_141] : memref<1x8xf32, #tpu.memory_space<vmem>>, vector<1x8xf32>
    %72 = vector.shape_cast %71 : vector<1x8xf32> to vector<8xf32>
    %73 = vector.shape_cast %72 : vector<8xf32> to vector<1x1x8xf32>
    %74 = vector.broadcast %73 : vector<1x1x8xf32> to vector<8x8x8xf32>
    %75 = arith.mulf %70, %74 : vector<8x8x8xf32>
    %c0_142 = arith.constant 0 : index
    %c0_143 = arith.constant 0 : index
    %76 = vector.load %arg4[%c0_142, %c0_143] : memref<1x8xf32, #tpu.memory_space<vmem>>, vector<1x8xf32>
    %77 = vector.shape_cast %76 : vector<1x8xf32> to vector<8xf32>
    %78 = vector.shape_cast %77 : vector<8xf32> to vector<1x1x8xf32>
    %79 = vector.broadcast %78 : vector<1x1x8xf32> to vector<8x8x8xf32>
    %80 = arith.addf %75, %79 : vector<8x8x8xf32>
    %cst_144 = arith.constant 0.000000e+00 : f32
    %81 = vector.broadcast %cst_144 : f32 to vector<8x8x8xf32>
    %82 = arith.maximumf %80, %81 : vector<8x8x8xf32>
    %cst_145 = arith.constant 0.000000e+00 : f32
    %83 = vector.broadcast %cst_145 : f32 to vector<10x10x8xf32>
    %c0_146 = arith.constant 0 : index
    %c0_147 = arith.constant 0 : index
    %c0_148 = arith.constant 0 : index
    %84 = vector.load %arg13[%c0_146, %c0_147, %c0_148] : memref<10x10x8xf32, #tpu.memory_space<vmem>>, vector<10x10x8xf32>
    tpu.vector_store %arg13[%c0_146, %c0_147, %c0_148], %83 {strides = array<i32>} : memref<10x10x8xf32, #tpu.memory_space<vmem>>, vector<10x10x8xf32>,
    %c1_149 = arith.constant 1 : index
    %c1_150 = arith.constant 1 : index
    %c0_151 = arith.constant 0 : index
    %85 = vector.load %arg13[%c1_149, %c1_150, %c0_151] : memref<10x10x8xf32, #tpu.memory_space<vmem>>, vector<8x8x8xf32>
    tpu.vector_store %arg13[%c1_149, %c1_150, %c0_151], %82 {strides = array<i32>} : memref<10x10x8xf32, #tpu.memory_space<vmem>>, vector<8x8x8xf32>,
    %c1_152 = arith.constant 1 : index
    %c1_153 = arith.constant 1 : index
    %c0_154 = arith.constant 0 : index
    %86 = tpu.strided_load %arg12[%c1_152, %c1_153, %c0_154] {strides = array<i32: 2, 2, 1>} : memref<18x18x4xf32, #tpu.memory_space<vmem>>, vector<8x8x4xf32>
    %c0_155 = arith.constant 0 : index
    %c0_156 = arith.constant 0 : index
    %87 = vector.load %arg8[%c0_155, %c0_156] : memref<4x8xf32, #tpu.memory_space<vmem>>, vector<4x8xf32>
    %cst_157 = arith.constant dense<0.000000e+00> : vector<8x8x8xf32>
    %88 = tpu.matmul %86, %87, %cst_157 {dimension_numbers = #tpu.dot_dimension_numbers<[2], [0], [0, 1], [1], [0, 0, 0, 1, 1, 1], [], []>} : vector<8x8x4xf32>, vector<4x8xf32>, vector<8x8x8xf32> -> vector<8x8x8xf32>
    %c0_158 = arith.constant 0 : index
    %c0_159 = arith.constant 0 : index
    %89 = vector.load %arg9[%c0_158, %c0_159] : memref<1x8xf32, #tpu.memory_space<vmem>>, vector<1x8xf32>
    %90 = vector.shape_cast %89 : vector<1x8xf32> to vector<8xf32>
    %91 = vector.shape_cast %90 : vector<8xf32> to vector<1x1x8xf32>
    %92 = vector.broadcast %91 : vector<1x1x8xf32> to vector<8x8x8xf32>
    %93 = arith.mulf %88, %92 : vector<8x8x8xf32>
    %c0_160 = arith.constant 0 : index
    %c0_161 = arith.constant 0 : index
    %94 = vector.load %arg10[%c0_160, %c0_161] : memref<1x8xf32, #tpu.memory_space<vmem>>, vector<1x8xf32>
    %95 = vector.shape_cast %94 : vector<1x8xf32> to vector<8xf32>
    %96 = vector.shape_cast %95 : vector<8xf32> to vector<1x1x8xf32>
    %97 = vector.broadcast %96 : vector<1x1x8xf32> to vector<8x8x8xf32>
    %98 = arith.addf %93, %97 : vector<8x8x8xf32>
    %cst_162 = arith.constant 0.000000e+00 : f32
    %99 = vector.broadcast %cst_162 : f32 to vector<8x8x8xf32>
    %c0_163 = arith.constant 0 : index
    %c0_164 = arith.constant 0 : index
    %c0_165 = arith.constant 0 : index
    %100 = vector.load %arg14[%c0_163, %c0_164, %c0_165] : memref<8x8x8xf32, #tpu.memory_space<vmem>>, vector<8x8x8xf32>
    tpu.vector_store %arg14[%c0_163, %c0_164, %c0_165], %99 {strides = array<i32>} : memref<8x8x8xf32, #tpu.memory_space<vmem>>, vector<8x8x8xf32>,
    %c0_166 = arith.constant 0 : index
    %c0_167 = arith.constant 0 : index
    %c0_168 = arith.constant 0 : index
    %101 = vector.load %arg13[%c0_166, %c0_167, %c0_168] : memref<10x10x8xf32, #tpu.memory_space<vmem>>, vector<8x8x8xf32>
    %c0_169 = arith.constant 0 : index
    %c0_170 = arith.constant 0 : index
    %c0_171 = arith.constant 0 : index
    %102 = vector.load %arg14[%c0_169, %c0_170, %c0_171] : memref<8x8x8xf32, #tpu.memory_space<vmem>>, vector<8x8x8xf32>
    %c0_172 = arith.constant 0 : index
    %c0_173 = arith.constant 0 : index
    %c0_174 = arith.constant 0 : index
    %c0_175 = arith.constant 0 : index
    %103 = vector.load %arg5[%c0_172, %c0_173, %c0_174, %c0_175] : memref<3x3x8x8xf32, #tpu.memory_space<vmem>>, vector<1x1x8x8xf32>
    %104 = vector.shape_cast %103 : vector<1x1x8x8xf32> to vector<8x8xf32>
    %cst_176 = arith.constant dense<0.000000e+00> : vector<8x8x8xf32>
    %105 = tpu.matmul %101, %104, %cst_176 {dimension_numbers = #tpu.dot_dimension_numbers<[2], [0], [0, 1], [1], [0, 0, 0, 1, 1, 1], [], []>} : vector<8x8x8xf32>, vector<8x8xf32>, vector<8x8x8xf32> -> vector<8x8x8xf32>
    %106 = arith.addf %102, %105 : vector<8x8x8xf32>
    %c0_177 = arith.constant 0 : index
    %c0_178 = arith.constant 0 : index
    %c0_179 = arith.constant 0 : index
    %107 = vector.load %arg14[%c0_177, %c0_178, %c0_179] : memref<8x8x8xf32, #tpu.memory_space<vmem>>, vector<8x8x8xf32>
    tpu.vector_store %arg14[%c0_177, %c0_178, %c0_179], %106 {strides = array<i32>} : memref<8x8x8xf32, #tpu.memory_space<vmem>>, vector<8x8x8xf32>,
    %c0_180 = arith.constant 0 : index
    %c1_181 = arith.constant 1 : index
    %c0_182 = arith.constant 0 : index
    %108 = vector.load %arg13[%c0_180, %c1_181, %c0_182] : memref<10x10x8xf32, #tpu.memory_space<vmem>>, vector<8x8x8xf32>
    %c0_183 = arith.constant 0 : index
    %c0_184 = arith.constant 0 : index
    %c0_185 = arith.constant 0 : index
    %109 = vector.load %arg14[%c0_183, %c0_184, %c0_185] : memref<8x8x8xf32, #tpu.memory_space<vmem>>, vector<8x8x8xf32>
    %c0_186 = arith.constant 0 : index
    %c1_187 = arith.constant 1 : index
    %c0_188 = arith.constant 0 : index
    %c0_189 = arith.constant 0 : index
    %110 = vector.load %arg5[%c0_186, %c1_187, %c0_188, %c0_189] : memref<3x3x8x8xf32, #tpu.memory_space<vmem>>, vector<1x1x8x8xf32>
    %111 = vector.shape_cast %110 : vector<1x1x8x8xf32> to vector<8x8xf32>
    %cst_190 = arith.constant dense<0.000000e+00> : vector<8x8x8xf32>
    %112 = tpu.matmul %108, %111, %cst_190 {dimension_numbers = #tpu.dot_dimension_numbers<[2], [0], [0, 1], [1], [0, 0, 0, 1, 1, 1], [], []>} : vector<8x8x8xf32>, vector<8x8xf32>, vector<8x8x8xf32> -> vector<8x8x8xf32>
    %113 = arith.addf %109, %112 : vector<8x8x8xf32>
    %c0_191 = arith.constant 0 : index
    %c0_192 = arith.constant 0 : index
    %c0_193 = arith.constant 0 : index
    %114 = vector.load %arg14[%c0_191, %c0_192, %c0_193] : memref<8x8x8xf32, #tpu.memory_space<vmem>>, vector<8x8x8xf32>
    tpu.vector_store %arg14[%c0_191, %c0_192, %c0_193], %113 {strides = array<i32>} : memref<8x8x8xf32, #tpu.memory_space<vmem>>, vector<8x8x8xf32>,
    %c0_194 = arith.constant 0 : index
    %c2_195 = arith.constant 2 : index
    %c0_196 = arith.constant 0 : index
    %115 = vector.load %arg13[%c0_194, %c2_195, %c0_196] : memref<10x10x8xf32, #tpu.memory_space<vmem>>, vector<8x8x8xf32>
    %c0_197 = arith.constant 0 : index
    %c0_198 = arith.constant 0 : index
    %c0_199 = arith.constant 0 : index
    %116 = vector.load %arg14[%c0_197, %c0_198, %c0_199] : memref<8x8x8xf32, #tpu.memory_space<vmem>>, vector<8x8x8xf32>
    %c0_200 = arith.constant 0 : index
    %c2_201 = arith.constant 2 : index
    %c0_202 = arith.constant 0 : index
    %c0_203 = arith.constant 0 : index
    %117 = vector.load %arg5[%c0_200, %c2_201, %c0_202, %c0_203] : memref<3x3x8x8xf32, #tpu.memory_space<vmem>>, vector<1x1x8x8xf32>
    %118 = vector.shape_cast %117 : vector<1x1x8x8xf32> to vector<8x8xf32>
    %cst_204 = arith.constant dense<0.000000e+00> : vector<8x8x8xf32>
    %119 = tpu.matmul %115, %118, %cst_204 {dimension_numbers = #tpu.dot_dimension_numbers<[2], [0], [0, 1], [1], [0, 0, 0, 1, 1, 1], [], []>} : vector<8x8x8xf32>, vector<8x8xf32>, vector<8x8x8xf32> -> vector<8x8x8xf32>
    %120 = arith.addf %116, %119 : vector<8x8x8xf32>
    %c0_205 = arith.constant 0 : index
    %c0_206 = arith.constant 0 : index
    %c0_207 = arith.constant 0 : index
    %121 = vector.load %arg14[%c0_205, %c0_206, %c0_207] : memref<8x8x8xf32, #tpu.memory_space<vmem>>, vector<8x8x8xf32>
    tpu.vector_store %arg14[%c0_205, %c0_206, %c0_207], %120 {strides = array<i32>} : memref<8x8x8xf32, #tpu.memory_space<vmem>>, vector<8x8x8xf32>,
    %c1_208 = arith.constant 1 : index
    %c0_209 = arith.constant 0 : index
    %c0_210 = arith.constant 0 : index
    %122 = vector.load %arg13[%c1_208, %c0_209, %c0_210] : memref<10x10x8xf32, #tpu.memory_space<vmem>>, vector<8x8x8xf32>
    %c0_211 = arith.constant 0 : index
    %c0_212 = arith.constant 0 : index
    %c0_213 = arith.constant 0 : index
    %123 = vector.load %arg14[%c0_211, %c0_212, %c0_213] : memref<8x8x8xf32, #tpu.memory_space<vmem>>, vector<8x8x8xf32>
    %c1_214 = arith.constant 1 : index
    %c0_215 = arith.constant 0 : index
    %c0_216 = arith.constant 0 : index
    %c0_217 = arith.constant 0 : index
    %124 = vector.load %arg5[%c1_214, %c0_215, %c0_216, %c0_217] : memref<3x3x8x8xf32, #tpu.memory_space<vmem>>, vector<1x1x8x8xf32>
    %125 = vector.shape_cast %124 : vector<1x1x8x8xf32> to vector<8x8xf32>
    %cst_218 = arith.constant dense<0.000000e+00> : vector<8x8x8xf32>
    %126 = tpu.matmul %122, %125, %cst_218 {dimension_numbers = #tpu.dot_dimension_numbers<[2], [0], [0, 1], [1], [0, 0, 0, 1, 1, 1], [], []>} : vector<8x8x8xf32>, vector<8x8xf32>, vector<8x8x8xf32> -> vector<8x8x8xf32>
    %127 = arith.addf %123, %126 : vector<8x8x8xf32>
    %c0_219 = arith.constant 0 : index
    %c0_220 = arith.constant 0 : index
    %c0_221 = arith.constant 0 : index
    %128 = vector.load %arg14[%c0_219, %c0_220, %c0_221] : memref<8x8x8xf32, #tpu.memory_space<vmem>>, vector<8x8x8xf32>
    tpu.vector_store %arg14[%c0_219, %c0_220, %c0_221], %127 {strides = array<i32>} : memref<8x8x8xf32, #tpu.memory_space<vmem>>, vector<8x8x8xf32>,
    %c1_222 = arith.constant 1 : index
    %c1_223 = arith.constant 1 : index
    %c0_224 = arith.constant 0 : index
    %129 = vector.load %arg13[%c1_222, %c1_223, %c0_224] : memref<10x10x8xf32, #tpu.memory_space<vmem>>, vector<8x8x8xf32>
    %c0_225 = arith.constant 0 : index
    %c0_226 = arith.constant 0 : index
    %c0_227 = arith.constant 0 : index
    %130 = vector.load %arg14[%c0_225, %c0_226, %c0_227] : memref<8x8x8xf32, #tpu.memory_space<vmem>>, vector<8x8x8xf32>
    %c1_228 = arith.constant 1 : index
    %c1_229 = arith.constant 1 : index
    %c0_230 = arith.constant 0 : index
    %c0_231 = arith.constant 0 : index
    %131 = vector.load %arg5[%c1_228, %c1_229, %c0_230, %c0_231] : memref<3x3x8x8xf32, #tpu.memory_space<vmem>>, vector<1x1x8x8xf32>
    %132 = vector.shape_cast %131 : vector<1x1x8x8xf32> to vector<8x8xf32>
    %cst_232 = arith.constant dense<0.000000e+00> : vector<8x8x8xf32>
    %133 = tpu.matmul %129, %132, %cst_232 {dimension_numbers = #tpu.dot_dimension_numbers<[2], [0], [0, 1], [1], [0, 0, 0, 1, 1, 1], [], []>} : vector<8x8x8xf32>, vector<8x8xf32>, vector<8x8x8xf32> -> vector<8x8x8xf32>
    %134 = arith.addf %130, %133 : vector<8x8x8xf32>
    %c0_233 = arith.constant 0 : index
    %c0_234 = arith.constant 0 : index
    %c0_235 = arith.constant 0 : index
    %135 = vector.load %arg14[%c0_233, %c0_234, %c0_235] : memref<8x8x8xf32, #tpu.memory_space<vmem>>, vector<8x8x8xf32>
    tpu.vector_store %arg14[%c0_233, %c0_234, %c0_235], %134 {strides = array<i32>} : memref<8x8x8xf32, #tpu.memory_space<vmem>>, vector<8x8x8xf32>,
    %c1_236 = arith.constant 1 : index
    %c2_237 = arith.constant 2 : index
    %c0_238 = arith.constant 0 : index
    %136 = vector.load %arg13[%c1_236, %c2_237, %c0_238] : memref<10x10x8xf32, #tpu.memory_space<vmem>>, vector<8x8x8xf32>
    %c0_239 = arith.constant 0 : index
    %c0_240 = arith.constant 0 : index
    %c0_241 = arith.constant 0 : index
    %137 = vector.load %arg14[%c0_239, %c0_240, %c0_241] : memref<8x8x8xf32, #tpu.memory_space<vmem>>, vector<8x8x8xf32>
    %c1_242 = arith.constant 1 : index
    %c2_243 = arith.constant 2 : index
    %c0_244 = arith.constant 0 : index
    %c0_245 = arith.constant 0 : index
    %138 = vector.load %arg5[%c1_242, %c2_243, %c0_244, %c0_245] : memref<3x3x8x8xf32, #tpu.memory_space<vmem>>, vector<1x1x8x8xf32>
    %139 = vector.shape_cast %138 : vector<1x1x8x8xf32> to vector<8x8xf32>
    %cst_246 = arith.constant dense<0.000000e+00> : vector<8x8x8xf32>
    %140 = tpu.matmul %136, %139, %cst_246 {dimension_numbers = #tpu.dot_dimension_numbers<[2], [0], [0, 1], [1], [0, 0, 0, 1, 1, 1], [], []>} : vector<8x8x8xf32>, vector<8x8xf32>, vector<8x8x8xf32> -> vector<8x8x8xf32>
    %141 = arith.addf %137, %140 : vector<8x8x8xf32>
    %c0_247 = arith.constant 0 : index
    %c0_248 = arith.constant 0 : index
    %c0_249 = arith.constant 0 : index
    %142 = vector.load %arg14[%c0_247, %c0_248, %c0_249] : memref<8x8x8xf32, #tpu.memory_space<vmem>>, vector<8x8x8xf32>
    tpu.vector_store %arg14[%c0_247, %c0_248, %c0_249], %141 {strides = array<i32>} : memref<8x8x8xf32, #tpu.memory_space<vmem>>, vector<8x8x8xf32>,
    %c2_250 = arith.constant 2 : index
    %c0_251 = arith.constant 0 : index
    %c0_252 = arith.constant 0 : index
    %143 = vector.load %arg13[%c2_250, %c0_251, %c0_252] : memref<10x10x8xf32, #tpu.memory_space<vmem>>, vector<8x8x8xf32>
    %c0_253 = arith.constant 0 : index
    %c0_254 = arith.constant 0 : index
    %c0_255 = arith.constant 0 : index
    %144 = vector.load %arg14[%c0_253, %c0_254, %c0_255] : memref<8x8x8xf32, #tpu.memory_space<vmem>>, vector<8x8x8xf32>
    %c2_256 = arith.constant 2 : index
    %c0_257 = arith.constant 0 : index
    %c0_258 = arith.constant 0 : index
    %c0_259 = arith.constant 0 : index
    %145 = vector.load %arg5[%c2_256, %c0_257, %c0_258, %c0_259] : memref<3x3x8x8xf32, #tpu.memory_space<vmem>>, vector<1x1x8x8xf32>
    %146 = vector.shape_cast %145 : vector<1x1x8x8xf32> to vector<8x8xf32>
    %cst_260 = arith.constant dense<0.000000e+00> : vector<8x8x8xf32>
    %147 = tpu.matmul %143, %146, %cst_260 {dimension_numbers = #tpu.dot_dimension_numbers<[2], [0], [0, 1], [1], [0, 0, 0, 1, 1, 1], [], []>} : vector<8x8x8xf32>, vector<8x8xf32>, vector<8x8x8xf32> -> vector<8x8x8xf32>
    %148 = arith.addf %144, %147 : vector<8x8x8xf32>
    %c0_261 = arith.constant 0 : index
    %c0_262 = arith.constant 0 : index
    %c0_263 = arith.constant 0 : index
    %149 = vector.load %arg14[%c0_261, %c0_262, %c0_263] : memref<8x8x8xf32, #tpu.memory_space<vmem>>, vector<8x8x8xf32>
    tpu.vector_store %arg14[%c0_261, %c0_262, %c0_263], %148 {strides = array<i32>} : memref<8x8x8xf32, #tpu.memory_space<vmem>>, vector<8x8x8xf32>,
    %c2_264 = arith.constant 2 : index
    %c1_265 = arith.constant 1 : index
    %c0_266 = arith.constant 0 : index
    %150 = vector.load %arg13[%c2_264, %c1_265, %c0_266] : memref<10x10x8xf32, #tpu.memory_space<vmem>>, vector<8x8x8xf32>
    %c0_267 = arith.constant 0 : index
    %c0_268 = arith.constant 0 : index
    %c0_269 = arith.constant 0 : index
    %151 = vector.load %arg14[%c0_267, %c0_268, %c0_269] : memref<8x8x8xf32, #tpu.memory_space<vmem>>, vector<8x8x8xf32>
    %c2_270 = arith.constant 2 : index
    %c1_271 = arith.constant 1 : index
    %c0_272 = arith.constant 0 : index
    %c0_273 = arith.constant 0 : index
    %152 = vector.load %arg5[%c2_270, %c1_271, %c0_272, %c0_273] : memref<3x3x8x8xf32, #tpu.memory_space<vmem>>, vector<1x1x8x8xf32>
    %153 = vector.shape_cast %152 : vector<1x1x8x8xf32> to vector<8x8xf32>
    %cst_274 = arith.constant dense<0.000000e+00> : vector<8x8x8xf32>
    %154 = tpu.matmul %150, %153, %cst_274 {dimension_numbers = #tpu.dot_dimension_numbers<[2], [0], [0, 1], [1], [0, 0, 0, 1, 1, 1], [], []>} : vector<8x8x8xf32>, vector<8x8xf32>, vector<8x8x8xf32> -> vector<8x8x8xf32>
    %155 = arith.addf %151, %154 : vector<8x8x8xf32>
    %c0_275 = arith.constant 0 : index
    %c0_276 = arith.constant 0 : index
    %c0_277 = arith.constant 0 : index
    %156 = vector.load %arg14[%c0_275, %c0_276, %c0_277] : memref<8x8x8xf32, #tpu.memory_space<vmem>>, vector<8x8x8xf32>
    tpu.vector_store %arg14[%c0_275, %c0_276, %c0_277], %155 {strides = array<i32>} : memref<8x8x8xf32, #tpu.memory_space<vmem>>, vector<8x8x8xf32>,
    %c2_278 = arith.constant 2 : index
    %c2_279 = arith.constant 2 : index
    %c0_280 = arith.constant 0 : index
    %157 = vector.load %arg13[%c2_278, %c2_279, %c0_280] : memref<10x10x8xf32, #tpu.memory_space<vmem>>, vector<8x8x8xf32>
    %c0_281 = arith.constant 0 : index
    %c0_282 = arith.constant 0 : index
    %c0_283 = arith.constant 0 : index
    %158 = vector.load %arg14[%c0_281, %c0_282, %c0_283] : memref<8x8x8xf32, #tpu.memory_space<vmem>>, vector<8x8x8xf32>
    %c2_284 = arith.constant 2 : index
    %c2_285 = arith.constant 2 : index
    %c0_286 = arith.constant 0 : index
    %c0_287 = arith.constant 0 : index
    %159 = vector.load %arg5[%c2_284, %c2_285, %c0_286, %c0_287] : memref<3x3x8x8xf32, #tpu.memory_space<vmem>>, vector<1x1x8x8xf32>
    %160 = vector.shape_cast %159 : vector<1x1x8x8xf32> to vector<8x8xf32>
    %cst_288 = arith.constant dense<0.000000e+00> : vector<8x8x8xf32>
    %161 = tpu.matmul %157, %160, %cst_288 {dimension_numbers = #tpu.dot_dimension_numbers<[2], [0], [0, 1], [1], [0, 0, 0, 1, 1, 1], [], []>} : vector<8x8x8xf32>, vector<8x8xf32>, vector<8x8x8xf32> -> vector<8x8x8xf32>
    %162 = arith.addf %158, %161 : vector<8x8x8xf32>
    %c0_289 = arith.constant 0 : index
    %c0_290 = arith.constant 0 : index
    %c0_291 = arith.constant 0 : index
    %163 = vector.load %arg14[%c0_289, %c0_290, %c0_291] : memref<8x8x8xf32, #tpu.memory_space<vmem>>, vector<8x8x8xf32>
    tpu.vector_store %arg14[%c0_289, %c0_290, %c0_291], %162 {strides = array<i32>} : memref<8x8x8xf32, #tpu.memory_space<vmem>>, vector<8x8x8xf32>,
    %c0_292 = arith.constant 0 : index
    %c0_293 = arith.constant 0 : index
    %c0_294 = arith.constant 0 : index
    %164 = vector.load %arg14[%c0_292, %c0_293, %c0_294] : memref<8x8x8xf32, #tpu.memory_space<vmem>>, vector<8x8x8xf32>
    %c0_295 = arith.constant 0 : index
    %c0_296 = arith.constant 0 : index
    %165 = vector.load %arg6[%c0_295, %c0_296] : memref<1x8xf32, #tpu.memory_space<vmem>>, vector<1x8xf32>
    %166 = vector.shape_cast %165 : vector<1x8xf32> to vector<8xf32>
    %167 = vector.shape_cast %166 : vector<8xf32> to vector<1x1x8xf32>
    %168 = vector.broadcast %167 : vector<1x1x8xf32> to vector<8x8x8xf32>
    %169 = arith.mulf %164, %168 : vector<8x8x8xf32>
    %c0_297 = arith.constant 0 : index
    %c0_298 = arith.constant 0 : index
    %170 = vector.load %arg7[%c0_297, %c0_298] : memref<1x8xf32, #tpu.memory_space<vmem>>, vector<1x8xf32>
    %171 = vector.shape_cast %170 : vector<1x8xf32> to vector<8xf32>
    %172 = vector.shape_cast %171 : vector<8xf32> to vector<1x1x8xf32>
    %173 = vector.broadcast %172 : vector<1x1x8xf32> to vector<8x8x8xf32>
    %174 = arith.addf %169, %173 : vector<8x8x8xf32>
    %175 = arith.addf %174, %98 : vector<8x8x8xf32>
    %cst_299 = arith.constant 0.000000e+00 : f32
    %176 = vector.broadcast %cst_299 : f32 to vector<8x8x8xf32>
    %177 = arith.maximumf %175, %176 : vector<8x8x8xf32>
    %c0_300 = arith.constant 0 : index
    %c0_301 = arith.constant 0 : index
    %c0_302 = arith.constant 0 : index
    %c0_303 = arith.constant 0 : index
    %178 = vector.load %arg11[%c0_300, %c0_301, %c0_302, %c0_303] : memref<1x8x8x8xf32, #tpu.memory_space<vmem>>, vector<1x8x8x8xf32>
    %179 = vector.shape_cast %178 : vector<1x8x8x8xf32> to vector<8x8x8xf32>
    %180 = vector.shape_cast %177 : vector<8x8x8xf32> to vector<1x8x8x8xf32>
    tpu.vector_store %arg11[%c0_300, %c0_301, %c0_302, %c0_303], %180 {strides = array<i32>} : memref<1x8x8x8xf32, #tpu.memory_space<vmem>>, vector<1x8x8x8xf32>,
    return
  }
  func.func @transform_0(%arg0: i32) -> (i32, i32, i32, i32) {
    %c0_i32 = arith.constant 0 : i32
    %c0_i32_0 = arith.constant 0 : i32
    %c0_i32_1 = arith.constant 0 : i32
    %c0_i32_2 = arith.constant 0 : i32
    return %arg0, %c0_i32, %c0_i32_0, %c0_i32_1 : i32, i32, i32, i32
  }
  func.func @transform_1(%arg0: i32) -> (i32, i32, i32, i32) {
    %c0_i32 = arith.constant 0 : i32
    %c0_i32_0 = arith.constant 0 : i32
    %c0_i32_1 = arith.constant 0 : i32
    %c0_i32_2 = arith.constant 0 : i32
    %c0_i32_3 = arith.constant 0 : i32
    return %c0_i32, %c0_i32_0, %c0_i32_1, %c0_i32_2 : i32, i32, i32, i32
  }
  func.func @transform_2(%arg0: i32) -> (i32, i32) {
    %c0_i32 = arith.constant 0 : i32
    %c0_i32_0 = arith.constant 0 : i32
    %c0_i32_1 = arith.constant 0 : i32
    return %c0_i32, %c0_i32_0 : i32, i32
  }
  func.func @transform_3(%arg0: i32) -> (i32, i32) {
    %c0_i32 = arith.constant 0 : i32
    %c0_i32_0 = arith.constant 0 : i32
    %c0_i32_1 = arith.constant 0 : i32
    return %c0_i32, %c0_i32_0 : i32, i32
  }
  func.func @transform_4(%arg0: i32) -> (i32, i32, i32, i32) {
    %c0_i32 = arith.constant 0 : i32
    %c0_i32_0 = arith.constant 0 : i32
    %c0_i32_1 = arith.constant 0 : i32
    %c0_i32_2 = arith.constant 0 : i32
    %c0_i32_3 = arith.constant 0 : i32
    return %c0_i32, %c0_i32_0, %c0_i32_1, %c0_i32_2 : i32, i32, i32, i32
  }
  func.func @transform_5(%arg0: i32) -> (i32, i32) {
    %c0_i32 = arith.constant 0 : i32
    %c0_i32_0 = arith.constant 0 : i32
    %c0_i32_1 = arith.constant 0 : i32
    return %c0_i32, %c0_i32_0 : i32, i32
  }
  func.func @transform_6(%arg0: i32) -> (i32, i32) {
    %c0_i32 = arith.constant 0 : i32
    %c0_i32_0 = arith.constant 0 : i32
    %c0_i32_1 = arith.constant 0 : i32
    return %c0_i32, %c0_i32_0 : i32, i32
  }
  func.func @transform_7(%arg0: i32) -> (i32, i32) {
    %c0_i32 = arith.constant 0 : i32
    %c0_i32_0 = arith.constant 0 : i32
    %c0_i32_1 = arith.constant 0 : i32
    return %c0_i32, %c0_i32_0 : i32, i32
  }
  func.func @transform_8(%arg0: i32) -> (i32, i32) {
    %c0_i32 = arith.constant 0 : i32
    %c0_i32_0 = arith.constant 0 : i32
    %c0_i32_1 = arith.constant 0 : i32
    return %c0_i32, %c0_i32_0 : i32, i32
  }
  func.func @transform_9(%arg0: i32) -> (i32, i32) {
    %c0_i32 = arith.constant 0 : i32
    %c0_i32_0 = arith.constant 0 : i32
    %c0_i32_1 = arith.constant 0 : i32
    return %c0_i32, %c0_i32_0 : i32, i32
  }
  func.func @transform_10(%arg0: i32) -> (i32, i32, i32, i32) {
    %c0_i32 = arith.constant 0 : i32
    %c0_i32_0 = arith.constant 0 : i32
    %c0_i32_1 = arith.constant 0 : i32
    %c0_i32_2 = arith.constant 0 : i32
    return %arg0, %c0_i32, %c0_i32_0, %c0_i32_1 : i32, i32, i32, i32
  }
}

</mosaic_0001>

<llo_original>
// kernel: tpu_custom_call.1
$region0: #{tpu_custom_call.1}
  #allocation0 [shape = 'u32[]', space=smem, size = 0x4, offset = 0x4, fixed_abs, tag = 'smem constant byte address 0x4 - core index']
  #allocation1 [shape = 'u32[144,128]{1,0:T(1,128)}', space=vmem, size = 0x12000, scoped, tag = 'internal scratch']
  #allocation2 [shape = 'f32[18,18,4]{2,1,0:T(8,128)}', space=vmem, size = 0x36000, scoped, tag = 'scratch operand']
  #allocation3 [shape = 'f32[10,10,8]{2,1,0:T(8,128)}', space=vmem, size = 0x14000, scoped, tag = 'scratch operand']
  #allocation4 [shape = 'f32[8,8,8]{2,1,0:T(8,128)}', space=vmem, size = 0x8000, scoped, tag = 'scratch operand']
  %s0 = inlined_call_operand.vmem [shape: f32[2,16,16,4], index: 0, kind: input, shape index: {}]
  %s1 = inlined_call_operand.vmem [shape: f32[3,3,4,8], index: 1, kind: input, shape index: {}]
  %s2 = inlined_call_operand.vmem [shape: f32[1,8], index: 2, kind: input, shape index: {}]
  %s3 = inlined_call_operand.vmem [shape: f32[1,8], index: 3, kind: input, shape index: {}]
  %s4 = inlined_call_operand.vmem [shape: f32[3,3,8,8], index: 4, kind: input, shape index: {}]
  %s5 = inlined_call_operand.vmem [shape: f32[1,8], index: 5, kind: input, shape index: {}]
  %s6 = inlined_call_operand.vmem [shape: f32[1,8], index: 6, kind: input, shape index: {}]
  %s7 = inlined_call_operand.vmem [shape: f32[4,8], index: 7, kind: input, shape index: {}]
  %s8 = inlined_call_operand.vmem [shape: f32[1,8], index: 8, kind: input, shape index: {}]
  %s9 = inlined_call_operand.vmem [shape: f32[1,8], index: 9, kind: input, shape index: {}]
  %s10 = inlined_call_operand.hbm [shape: f32[2,8,8,8], index: 10, kind: output, shape index: {}]
  %s11 = sld [smem:[#allocation0]]
  $region73: #{tpu_custom_call.1} parent=0
    _
  %s13 = ssub.s32 1, %s11
  %s14 = scalar_select 0, %s13, %s11
  $region1: #{tpu_custom_call.1} parent=0
    #allocation5 [shape = 'u8[65536]{0}', space=vmem, size = 0x10000, scoped, tag = 'output window, operand 0']
    #allocation6 [shape = 's32[2]{0}', space=sflag, size = 0x8, scoped, tag = 'scoped memory for tpu_custom_call.1']
    %15 = vsyncpa [#allocation6], 0
    %s16 = scalar_lea.sflag [#allocation6], 1
    %17 = vsyncpa %s16, 0
    loop: start=0, step=1, limit=4
    $region2: #{tpu_custom_call.1} parent=1 // loop_pre_header
      _
    $region3: #{tpu_custom_call.1} parent=1 // loop_header
      %s19 = sphi 0, %s23
      %p20 = scmp.ge.s32.totalorder %s19, 4
      %s29 = sphi 0, %s31
      %s32 = sphi 0, %s29
      %s33 = sphi 0, %s32
      %s49 = sphi 0, %s33
      %s53 = sphi 0, %s53
      %s55 = sphi 0, %s53
      %s56 = sphi 0, %s55
      %s70 = sphi 0, %s56
      %s74 = sphi 0, %s74
      %s76 = sphi 0, %s74
      %s77 = sphi 0, %s76
      %s91 = sphi 0, %s77
      %s95 = sphi 0, %s95
      %s97 = sphi 0, %s95
      %s98 = sphi 0, %s97
      %s112 = sphi 0, %s98
      %s116 = sphi 0, %s116
      %s118 = sphi 0, %s116
      %s119 = sphi 0, %s118
      %s133 = sphi 0, %s119
      %s137 = sphi 0, %s137
      %s139 = sphi 0, %s137
      %s140 = sphi 0, %s139
      %s154 = sphi 0, %s140
      %s158 = sphi 0, %s158
      %s160 = sphi 0, %s158
      %s161 = sphi 0, %s160
      %s175 = sphi 0, %s161
      %s179 = sphi 0, %s179
      %s181 = sphi 0, %s179
      %s182 = sphi 0, %s181
      %s196 = sphi 0, %s182
      %s200 = sphi 0, %s200
      %s202 = sphi 0, %s200
      %s203 = sphi 0, %s202
      %s217 = sphi 0, %s203
      %s221 = sphi 0, %s221
      %s223 = sphi 0, %s221
      %s224 = sphi 0, %s223
      %s238 = sphi 0, %s224
      %s244 = sphi 0, %s246
      %s247 = sphi 0, %s244
      %s248 = sphi 0, %s247
      %s264 = sphi 0, %s248
    $region4: #{tpu_custom_call.1} parent=1 // loop_header_branch
      %22 = sbr.rel (%p20) target = $region8
    $region5: #{tpu_custom_call.1} parent=1 // loop_body
      %s24 = ssub.s32 %s19, 1
      %s25 = ssub.s32 %s19, 2
      %s26 = sadd.s32 %s19, 1
      %s27 = ssub.s32 %s19, %s26
      %p28 = scmp.eq.s32.totalorder %s27, 0
      %s30 = sadd.s32 %s29, 1
      %s31 = scalar_select %p28, %s29, %s30
      %p34 = pneg %p28
      %p35 = scmp.eq.s32.totalorder %s19, 1
      %p36 = por %p34, %p35
      %p37 = scmp.ne.s32.totalorder %s29, %s32
      %p38 = scmp.eq.s32.totalorder %s19, 0
      %p39 = por %p37, %p38
      %p40 = scmp.ne.s32.totalorder %s29, %s32
      %p41 = scmp.eq.s32.totalorder %s24, 1
      %p42 = por %p40, %p41
      %p43 = scmp.ne.s32.totalorder %s32, %s33
      %p44 = scmp.eq.s32.totalorder %s24, 0
      %p45 = por %p43, %p44
      %p46 = scmp.ne.s32.totalorder %s32, %s33
      %p47 = scmp.eq.s32.totalorder %s25, 1
      %p48 = por %p46, %p47
      %p50 = scmp.ne.s32.totalorder %s33, %s49
      %p51 = scmp.eq.s32.totalorder %s25, 0
      %p52 = por %p50, %p51
      %s54 = sadd.s32 %s53, 1
      %p57 = scmp.eq.s32.totalorder %s19, 1
      %p58 = scmp.ne.s32.totalorder %s53, %s55
      %p59 = scmp.eq.s32.totalorder %s19, 0
      %p60 = por %p58, %p59
      %p61 = scmp.ne.s32.totalorder %s53, %s55
      %p62 = scmp.eq.s32.totalorder %s24, 1
      %p63 = por %p61, %p62
      %p64 = scmp.ne.s32.totalorder %s55, %s56
      %p65 = scmp.eq.s32.totalorder %s24, 0
      %p66 = por %p64, %p65
      %p67 = scmp.ne.s32.totalorder %s55, %s56
      %p68 = scmp.eq.s32.totalorder %s25, 1
      %p69 = por %p67, %p68
      %p71 = scmp.ne.s32.totalorder %s56, %s70
      %p72 = scmp.eq.s32.totalorder %s25, 0
      %p73 = por %p71, %p72
      %s75 = sadd.s32 %s74, 1
      %p78 = scmp.eq.s32.totalorder %s19, 1
      %p79 = scmp.ne.s32.totalorder %s74, %s76
      %p80 = scmp.eq.s32.totalorder %s19, 0
      %p81 = por %p79, %p80
      %p82 = scmp.ne.s32.totalorder %s74, %s76
      %p83 = scmp.eq.s32.totalorder %s24, 1
      %p84 = por %p82, %p83
      %p85 = scmp.ne.s32.totalorder %s76, %s77
      %p86 = scmp.eq.s32.totalorder %s24, 0
      %p87 = por %p85, %p86
      %p88 = scmp.ne.s32.totalorder %s76, %s77
      %p89 = scmp.eq.s32.totalorder %s25, 1
      %p90 = por %p88, %p89
      %p92 = scmp.ne.s32.totalorder %s77, %s91
      %p93 = scmp.eq.s32.totalorder %s25, 0
      %p94 = por %p92, %p93
      %s96 = sadd.s32 %s95, 1
      %p99 = scmp.eq.s32.totalorder %s19, 1
      %p100 = scmp.ne.s32.totalorder %s95, %s97
      %p101 = scmp.eq.s32.totalorder %s19, 0
      %p102 = por %p100, %p101
      %p103 = scmp.ne.s32.totalorder %s95, %s97
      %p104 = scmp.eq.s32.totalorder %s24, 1
      %p105 = por %p103, %p104
      %p106 = scmp.ne.s32.totalorder %s97, %s98
      %p107 = scmp.eq.s32.totalorder %s24, 0
      %p108 = por %p106, %p107
      %p109 = scmp.ne.s32.totalorder %s97, %s98
      %p110 = scmp.eq.s32.totalorder %s25, 1
      %p111 = por %p109, %p110
      %p113 = scmp.ne.s32.totalorder %s98, %s112
      %p114 = scmp.eq.s32.totalorder %s25, 0
      %p115 = por %p113, %p114
      %s117 = sadd.s32 %s116, 1
      %p120 = scmp.eq.s32.totalorder %s19, 1
      %p121 = scmp.ne.s32.totalorder %s116, %s118
      %p122 = scmp.eq.s32.totalorder %s19, 0
      %p123 = por %p121, %p122
      %p124 = scmp.ne.s32.totalorder %s116, %s118
      %p125 = scmp.eq.s32.totalorder %s24, 1
      %p126 = por %p124, %p125
      %p127 = scmp.ne.s32.totalorder %s118, %s119
      %p128 = scmp.eq.s32.totalorder %s24, 0
      %p129 = por %p127, %p128
      %p130 = scmp.ne.s32.totalorder %s118, %s119
      %p131 = scmp.eq.s32.totalorder %s25, 1
      %p132 = por %p130, %p131
      %p134 = scmp.ne.s32.totalorder %s119, %s133
      %p135 = scmp.eq.s32.totalorder %s25, 0
      %p136 = por %p134, %p135
      %s138 = sadd.s32 %s137, 1
      %p141 = scmp.eq.s32.totalorder %s19, 1
      %p142 = scmp.ne.s32.totalorder %s137, %s139
      %p143 = scmp.eq.s32.totalorder %s19, 0
      %p144 = por %p142, %p143
      %p145 = scmp.ne.s32.totalorder %s137, %s139
      %p146 = scmp.eq.s32.totalorder %s24, 1
      %p147 = por %p145, %p146
      %p148 = scmp.ne.s32.totalorder %s139, %s140
      %p149 = scmp.eq.s32.totalorder %s24, 0
      %p150 = por %p148, %p149
      %p151 = scmp.ne.s32.totalorder %s139, %s140
      %p152 = scmp.eq.s32.totalorder %s25, 1
      %p153 = por %p151, %p152
      %p155 = scmp.ne.s32.totalorder %s140, %s154
      %p156 = scmp.eq.s32.totalorder %s25, 0
      %p157 = por %p155, %p156
      %s159 = sadd.s32 %s158, 1
      %p162 = scmp.eq.s32.totalorder %s19, 1
      %p163 = scmp.ne.s32.totalorder %s158, %s160
      %p164 = scmp.eq.s32.totalorder %s19, 0
      %p165 = por %p163, %p164
      %p166 = scmp.ne.s32.totalorder %s158, %s160
      %p167 = scmp.eq.s32.totalorder %s24, 1
      %p168 = por %p166, %p167
      %p169 = scmp.ne.s32.totalorder %s160, %s161
      %p170 = scmp.eq.s32.totalorder %s24, 0
      %p171 = por %p169, %p170
      %p172 = scmp.ne.s32.totalorder %s160, %s161
      %p173 = scmp.eq.s32.totalorder %s25, 1
      %p174 = por %p172, %p173
      %p176 = scmp.ne.s32.totalorder %s161, %s175
      %p177 = scmp.eq.s32.totalorder %s25, 0
      %p178 = por %p176, %p177
      %s180 = sadd.s32 %s179, 1
      %p183 = scmp.eq.s32.totalorder %s19, 1
      %p184 = scmp.ne.s32.totalorder %s179, %s181
      %p185 = scmp.eq.s32.totalorder %s19, 0
      %p186 = por %p184, %p185
      %p187 = scmp.ne.s32.totalorder %s179, %s181
      %p188 = scmp.eq.s32.totalorder %s24, 1
      %p189 = por %p187, %p188
      %p190 = scmp.ne.s32.totalorder %s181, %s182
      %p191 = scmp.eq.s32.totalorder %s24, 0
      %p192 = por %p190, %p191
      %p193 = scmp.ne.s32.totalorder %s181, %s182
      %p194 = scmp.eq.s32.totalorder %s25, 1
      %p195 = por %p193, %p194
      %p197 = scmp.ne.s32.totalorder %s182, %s196
      %p198 = scmp.eq.s32.totalorder %s25, 0
      %p199 = por %p197, %p198
      %s201 = sadd.s32 %s200, 1
      %p204 = scmp.eq.s32.totalorder %s19, 1
      %p205 = scmp.ne.s32.totalorder %s200, %s202
      %p206 = scmp.eq.s32.totalorder %s19, 0
      %p207 = por %p205, %p206
      %p208 = scmp.ne.s32.totalorder %s200, %s202
      %p209 = scmp.eq.s32.totalorder %s24, 1
      %p210 = por %p208, %p209
      %p211 = scmp.ne.s32.totalorder %s202, %s203
      %p212 = scmp.eq.s32.totalorder %s24, 0
      %p213 = por %p211, %p212
      %p214 = scmp.ne.s32.totalorder %s202, %s203
      %p215 = scmp.eq.s32.totalorder %s25, 1
      %p216 = por %p214, %p215
      %p218 = scmp.ne.s32.totalorder %s203, %s217
      %p219 = scmp.eq.s32.totalorder %s25, 0
      %p220 = por %p218, %p219
      %s222 = sadd.s32 %s221, 1
      %p225 = scmp.eq.s32.totalorder %s19, 1
      %p226 = scmp.ne.s32.totalorder %s221, %s223
      %p227 = scmp.eq.s32.totalorder %s19, 0
      %p228 = por %p226, %p227
      %p229 = scmp.ne.s32.totalorder %s221, %s223
      %p230 = scmp.eq.s32.totalorder %s24, 1
      %p231 = por %p229, %p230
      %p232 = scmp.ne.s32.totalorder %s223, %s224
      %p233 = scmp.eq.s32.totalorder %s24, 0
      %p234 = por %p232, %p233
      %p235 = scmp.ne.s32.totalorder %s223, %s224
      %p236 = scmp.eq.s32.totalorder %s25, 1
      %p237 = por %p235, %p236
      %p239 = scmp.ne.s32.totalorder %s224, %s238
      %p240 = scmp.eq.s32.totalorder %s25, 0
      %p241 = por %p239, %p240
      %s242 = ssub.s32 %s19, %s26
      %p243 = scmp.eq.s32.totalorder %s242, 0
      %s245 = sadd.s32 %s244, 1
      %s246 = scalar_select %p243, %s244, %s245
      %p249 = pneg %p243
      %p250 = scmp.eq.s32.totalorder %s19, 1
      %p251 = por %p249, %p250
      %p252 = scmp.ne.s32.totalorder %s244, %s247
      %p253 = scmp.eq.s32.totalorder %s19, 0
      %p254 = por %p252, %p253
      %p255 = scmp.ne.s32.totalorder %s244, %s247
      %p256 = scmp.eq.s32.totalorder %s24, 1
      %p257 = por %p255, %p256
      %p258 = scmp.ne.s32.totalorder %s247, %s248
      %p259 = scmp.eq.s32.totalorder %s24, 0
      %p260 = por %p258, %p259
      %p261 = scmp.ne.s32.totalorder %s247, %s248
      %p262 = scmp.eq.s32.totalorder %s25, 1
      %p263 = por %p261, %p262
      %p265 = scmp.ne.s32.totalorder %s248, %s264
      %p266 = scmp.eq.s32.totalorder %s25, 0
      %p267 = por %p265, %p266
      %p268 = scmp.le.s32.totalorder 1, %s19
      %p269 = scmp.lt.s32.totalorder %s19, 3
      %p270 = pnand %p268, %p269
      %p271 = pneg %p270
      // Predicated region
      $region9: #{tpu_custom_call.1} parent=5 // pred_check
        _
      $region10: #{tpu_custom_call.1} parent=5 // pred_check_branch
        %273 = sbr.rel (%p270) target = $region12
      $region11: #{tpu_custom_call.1} parent=5 // pred_region
        %s274 = ssub.s32 %s19, 1
        // Predicated region
        $region13: #{tpu_custom_call.1} parent=11 // pred_check
          %p275 = pneg %p66
        $region14: #{tpu_custom_call.1} parent=11 // pred_check_branch
          %277 = sbr.rel (%p275) target = $region16
        $region15: #{tpu_custom_call.1} parent=11 // pred_region
          _
        $region16: #{tpu_custom_call.1} parent=11 // pred_fallthru
          _
        // Predicated region
        $region17: #{tpu_custom_call.1} parent=11 // pred_check
          %p278 = pneg %p87
        $region18: #{tpu_custom_call.1} parent=11 // pred_check_branch
          %280 = sbr.rel (%p278) target = $region20
        $region19: #{tpu_custom_call.1} parent=11 // pred_region
          _
        $region20: #{tpu_custom_call.1} parent=11 // pred_fallthru
          _
        // Predicated region
        $region21: #{tpu_custom_call.1} parent=11 // pred_check
          %p281 = pneg %p108
        $region22: #{tpu_custom_call.1} parent=11 // pred_check_branch
          %283 = sbr.rel (%p281) target = $region24
        $region23: #{tpu_custom_call.1} parent=11 // pred_region
          _
        $region24: #{tpu_custom_call.1} parent=11 // pred_fallthru
          _
        // Predicated region
        $region25: #{tpu_custom_call.1} parent=11 // pred_check
          %p284 = pneg %p129
        $region26: #{tpu_custom_call.1} parent=11 // pred_check_branch
          %286 = sbr.rel (%p284) target = $region28
        $region27: #{tpu_custom_call.1} parent=11 // pred_region
          _
        $region28: #{tpu_custom_call.1} parent=11 // pred_fallthru
          _
        // Predicated region
        $region29: #{tpu_custom_call.1} parent=11 // pred_check
          %p287 = pneg %p150
        $region30: #{tpu_custom_call.1} parent=11 // pred_check_branch
          %289 = sbr.rel (%p287) target = $region32
        $region31: #{tpu_custom_call.1} parent=11 // pred_region
          _
        $region32: #{tpu_custom_call.1} parent=11 // pred_fallthru
          _
        // Predicated region
        $region33: #{tpu_custom_call.1} parent=11 // pred_check
          %p290 = pneg %p171
        $region34: #{tpu_custom_call.1} parent=11 // pred_check_branch
          %292 = sbr.rel (%p290) target = $region36
        $region35: #{tpu_custom_call.1} parent=11 // pred_region
          _
        $region36: #{tpu_custom_call.1} parent=11 // pred_fallthru
          _
        // Predicated region
        $region37: #{tpu_custom_call.1} parent=11 // pred_check
          %p293 = pneg %p192
        $region38: #{tpu_custom_call.1} parent=11 // pred_check_branch
          %295 = sbr.rel (%p293) target = $region40
        $region39: #{tpu_custom_call.1} parent=11 // pred_region
          _
        $region40: #{tpu_custom_call.1} parent=11 // pred_fallthru
          _
        // Predicated region
        $region41: #{tpu_custom_call.1} parent=11 // pred_check
          %p296 = pneg %p213
        $region42: #{tpu_custom_call.1} parent=11 // pred_check_branch
          %298 = sbr.rel (%p296) target = $region44
        $region43: #{tpu_custom_call.1} parent=11 // pred_region
          _
        $region44: #{tpu_custom_call.1} parent=11 // pred_fallthru
          _
        // Predicated region
        $region45: #{tpu_custom_call.1} parent=11 // pred_check
          %p299 = pneg %p234
        $region46: #{tpu_custom_call.1} parent=11 // pred_check_branch
          %301 = sbr.rel (%p299) target = $region48
        $region47: #{tpu_custom_call.1} parent=11 // pred_region
          _
        $region48: #{tpu_custom_call.1} parent=11 // pred_fallthru
          _
      $region12: #{tpu_custom_call.1} parent=5 // pred_fallthru
        _
      %p302 = scmp.lt.s32.totalorder %s19, 2
      // Predicated region
      $region49: #{tpu_custom_call.1} parent=5 // pred_check
        %p303 = pneg %p302
      $region50: #{tpu_custom_call.1} parent=5 // pred_check_branch
        %305 = sbr.rel (%p303) target = $region52
      $region51: #{tpu_custom_call.1} parent=5 // pred_region
        // Predicated region
        $region53: #{tpu_custom_call.1} parent=51 // pred_check
          %p306 = pneg %p39
        $region54: #{tpu_custom_call.1} parent=51 // pred_check_branch
          %308 = sbr.rel (%p306) target = $region56
        $region55: #{tpu_custom_call.1} parent=51 // pred_region
          %p309 = scmp.lt.s32.totalorder %s19, 1
          %s310 = scalar_select %p309, %s19, 1
          %s311 = smul.addr %s310, 32
          %s312 = smul.addr %s311, 8
          %s313 = scalar_lea.vmem %s0, %s312
        $region56: #{tpu_custom_call.1} parent=51 // pred_fallthru
          _
      $region52: #{tpu_custom_call.1} parent=5 // pred_fallthru
        _
      %p314 = scmp.le.s32.totalorder 1, %s19
      %p315 = scmp.lt.s32.totalorder %s19, 3
      %p316 = pnand %p314, %p315
      %p317 = pneg %p316
      // Predicated region
      $region57: #{tpu_custom_call.1} parent=5 // pred_check
        _
      $region58: #{tpu_custom_call.1} parent=5 // pred_check_branch
        %319 = sbr.rel (%p316) target = $region60
      $region59: #{tpu_custom_call.1} parent=5 // pred_region
        %s320 = ssub.s32 %s19, 1
        %p321 = scmp.lt.s32.totalorder %s24, 1
        %s322 = scalar_select %p321, %s24, 1
        %s323 = smul.addr %s322, 32
        %s324 = smul.addr %s323, 8
        %s325 = scalar_lea.vmem %s0, %s324
        %p326 = pneg %p45
        %p327 = pneg %p42
        %p328 = pneg %p66
        %p329 = pneg %p63
        %p330 = pneg %p87
        %p331 = pneg %p84
        %p332 = pneg %p108
        %p333 = pneg %p105
        %p334 = pneg %p129
        %p335 = pneg %p126
        %p336 = pneg %p150
        %p337 = pneg %p147
        %p338 = pneg %p171
        %p339 = pneg %p168
        %p340 = pneg %p192
        %p341 = pneg %p189
        %p342 = pneg %p213
        %p343 = pneg %p210
        %p344 = pneg %p234
        %p345 = pneg %p231
        %p346 = pneg %p260
        %p347 = pneg %p257
        %s348 = sand.u32 %s247, 1
        %s349 = scalar_lea.sflag [#allocation6], %s348
        %s350 = sand.u32 %s247, 1
        %s351 = smul.addr %s350, 64
        %s352 = scalar_lea.vmem [#allocation5], %s351
        %p353 = scmp.lt.s32.totalorder %s24, 1
        %s354 = scalar_select %p353, %s24, 1
        %s355 = smul.addr %s354, 32
        %s356 = smul.addr %s355, 8
        %s357 = scalar_lea.vmem %s0, %s356
        %vm358 = vcmask 31744
        %359 = vst.msk [vmem:[#allocation2] sm:$0xff] %vm358, 0.0
        %360 = vst.msk [vmem:[#allocation2 + $0x8] sm:$0xff] %vm358, 0.0
        %vm361 = vcmask 25600
        %362 = vst.msk [vmem:[#allocation2 + $0x10] sm:$0x3] %vm361, 0.0
        %363 = vst.msk [vmem:[#allocation2 + $0x18] sm:$0xff] %vm358, 0.0
        %364 = vst.msk [vmem:[#allocation2 + $0x20] sm:$0xff] %vm358, 0.0
        %365 = vst.msk [vmem:[#allocation2 + $0x28] sm:$0x3] %vm361, 0.0
        %366 = vst.msk [vmem:[#allocation2 + $0x30] sm:$0xff] %vm358, 0.0
        %367 = vst.msk [vmem:[#allocation2 + $0x38] sm:$0xff] %vm358, 0.0
        %368 = vst.msk [vmem:[#allocation2 + $0x40] sm:$0x3] %vm361, 0.0
        %369 = vst.msk [vmem:[#allocation2 + $0x48] sm:$0xff] %vm358, 0.0
        %370 = vst.msk [vmem:[#allocation2 + $0x50] sm:$0xff] %vm358, 0.0
        %371 = vst.msk [vmem:[#allocation2 + $0x58] sm:$0x3] %vm361, 0.0
        %372 = vst.msk [vmem:[#allocation2 + $0x60] sm:$0xff] %vm358, 0.0
        %373 = vst.msk [vmem:[#allocation2 + $0x68] sm:$0xff] %vm358, 0.0
        %374 = vst.msk [vmem:[#allocation2 + $0x70] sm:$0x3] %vm361, 0.0
        %375 = vst.msk [vmem:[#allocation2 + $0x78] sm:$0xff] %vm358, 0.0
        %376 = vst.msk [vmem:[#allocation2 + $0x80] sm:$0xff] %vm358, 0.0
        %377 = vst.msk [vmem:[#allocation2 + $0x88] sm:$0x3] %vm361, 0.0
        %378 = vst.msk [vmem:[#allocation2 + $0x90] sm:$0xff] %vm358, 0.0
        %379 = vst.msk [vmem:[#allocation2 + $0x98] sm:$0xff] %vm358, 0.0
        %380 = vst.msk [vmem:[#allocation2 + $0xa0] sm:$0x3] %vm361, 0.0
        %381 = vst.msk [vmem:[#allocation2 + $0xa8] sm:$0xff] %vm358, 0.0
        %382 = vst.msk [vmem:[#allocation2 + $0xb0] sm:$0xff] %vm358, 0.0
        %383 = vst.msk [vmem:[#allocation2 + $0xb8] sm:$0x3] %vm361, 0.0
        %384 = vst.msk [vmem:[#allocation2 + $0xc0] sm:$0xff] %vm358, 0.0
        %385 = vst.msk [vmem:[#allocation2 + $0xc8] sm:$0xff] %vm358, 0.0
        %386 = vst.msk [vmem:[#allocation2 + $0xd0] sm:$0x3] %vm361, 0.0
        %387 = vst.msk [vmem:[#allocation2 + $0xd8] sm:$0xff] %vm358, 0.0
        %388 = vst.msk [vmem:[#allocation2 + $0xe0] sm:$0xff] %vm358, 0.0
        %389 = vst.msk [vmem:[#allocation2 + $0xe8] sm:$0x3] %vm361, 0.0
        %390 = vst.msk [vmem:[#allocation2 + $0xf0] sm:$0xff] %vm358, 0.0
        %391 = vst.msk [vmem:[#allocation2 + $0xf8] sm:$0xff] %vm358, 0.0
        %392 = vst.msk [vmem:[#allocation2 + $0x100] sm:$0x3] %vm361, 0.0
        %393 = vst.msk [vmem:[#allocation2 + $0x108] sm:$0xff] %vm358, 0.0
        %394 = vst.msk [vmem:[#allocation2 + $0x110] sm:$0xff] %vm358, 0.0
        %395 = vst.msk [vmem:[#allocation2 + $0x118] sm:$0x3] %vm361, 0.0
        %396 = vst.msk [vmem:[#allocation2 + $0x120] sm:$0xff] %vm358, 0.0
        %397 = vst.msk [vmem:[#allocation2 + $0x128] sm:$0xff] %vm358, 0.0
        %398 = vst.msk [vmem:[#allocation2 + $0x130] sm:$0x3] %vm361, 0.0
        %399 = vst.msk [vmem:[#allocation2 + $0x138] sm:$0xff] %vm358, 0.0
        %400 = vst.msk [vmem:[#allocation2 + $0x140] sm:$0xff] %vm358, 0.0
        %401 = vst.msk [vmem:[#allocation2 + $0x148] sm:$0x3] %vm361, 0.0
        %402 = vst.msk [vmem:[#allocation2 + $0x150] sm:$0xff] %vm358, 0.0
        %403 = vst.msk [vmem:[#allocation2 + $0x158] sm:$0xff] %vm358, 0.0
        %404 = vst.msk [vmem:[#allocation2 + $0x160] sm:$0x3] %vm361, 0.0
        %405 = vst.msk [vmem:[#allocation2 + $0x168] sm:$0xff] %vm358, 0.0
        %406 = vst.msk [vmem:[#allocation2 + $0x170] sm:$0xff] %vm358, 0.0
        %407 = vst.msk [vmem:[#allocation2 + $0x178] sm:$0x3] %vm361, 0.0
        %408 = vst.msk [vmem:[#allocation2 + $0x180] sm:$0xff] %vm358, 0.0
        %409 = vst.msk [vmem:[#allocation2 + $0x188] sm:$0xff] %vm358, 0.0
        %410 = vst.msk [vmem:[#allocation2 + $0x190] sm:$0x3] %vm361, 0.0
        %411 = vst.msk [vmem:[#allocation2 + $0x198] sm:$0xff] %vm358, 0.0
        %412 = vst.msk [vmem:[#allocation2 + $0x1a0] sm:$0xff] %vm358, 0.0
        %413 = vst.msk [vmem:[#allocation2 + $0x1a8] sm:$0x3] %vm361, 0.0
        %v414 = vld [vmem:[%s357] sm:$0xff]
        %v415 = vld [vmem:[%s357 + $0x8] sm:$0xff]
        %v416 = vld [vmem:[%s357 + $0x10] sm:$0xff]
        %v417 = vld [vmem:[%s357 + $0x18] sm:$0xff]
        %v418 = vld [vmem:[%s357 + $0x20] sm:$0xff]
        %v419 = vld [vmem:[%s357 + $0x28] sm:$0xff]
        %v420 = vld [vmem:[%s357 + $0x30] sm:$0xff]
        %v421 = vld [vmem:[%s357 + $0x38] sm:$0xff]
        %v422 = vld [vmem:[%s357 + $0x40] sm:$0xff]
        %v423 = vld [vmem:[%s357 + $0x48] sm:$0xff]
        %v424 = vld [vmem:[%s357 + $0x50] sm:$0xff]
        %v425 = vld [vmem:[%s357 + $0x58] sm:$0xff]
        %v426 = vld [vmem:[%s357 + $0x60] sm:$0xff]
        %v427 = vld [vmem:[%s357 + $0x68] sm:$0xff]
        %v428 = vld [vmem:[%s357 + $0x70] sm:$0xff]
        %v429 = vld [vmem:[%s357 + $0x78] sm:$0xff]
        %v430 = vld [vmem:[%s357 + $0x80] sm:$0xff]
        %v431 = vld [vmem:[%s357 + $0x88] sm:$0xff]
        %v432 = vld [vmem:[%s357 + $0x90] sm:$0xff]
        %v433 = vld [vmem:[%s357 + $0x98] sm:$0xff]
        %v434 = vld [vmem:[%s357 + $0xa0] sm:$0xff]
        %v435 = vld [vmem:[%s357 + $0xa8] sm:$0xff]
        %v436 = vld [vmem:[%s357 + $0xb0] sm:$0xff]
        %v437 = vld [vmem:[%s357 + $0xb8] sm:$0xff]
        %v438 = vld [vmem:[%s357 + $0xc0] sm:$0xff]
        %v439 = vld [vmem:[%s357 + $0xc8] sm:$0xff]
        %v440 = vld [vmem:[%s357 + $0xd0] sm:$0xff]
        %v441 = vld [vmem:[%s357 + $0xd8] sm:$0xff]
        %v442 = vld [vmem:[%s357 + $0xe0] sm:$0xff]
        %v443 = vld [vmem:[%s357 + $0xe8] sm:$0xff]
        %v444 = vld [vmem:[%s357 + $0xf0] sm:$0xff]
        %v445 = vld [vmem:[%s357 + $0xf8] sm:$0xff]
        %s446 = scalar_lea.vmem [#allocation2], 24
        %447 = vst.msk [vmem:[%s446 + $0x1] sm:$0xff] %vm358, %v414
        %448 = vst.msk [vmem:[%s446 + $0x9] sm:$0xff] %vm358, %v415
        %449 = vst.msk [vmem:[%s446 + $0x19] sm:$0xff] %vm358, %v416
        %450 = vst.msk [vmem:[%s446 + $0x21] sm:$0xff] %vm358, %v417
        %451 = vst.msk [vmem:[%s446 + $0x31] sm:$0xff] %vm358, %v418
        %452 = vst.msk [vmem:[%s446 + $0x39] sm:$0xff] %vm358, %v419
        %453 = vst.msk [vmem:[%s446 + $0x49] sm:$0xff] %vm358, %v420
        %454 = vst.msk [vmem:[%s446 + $0x51] sm:$0xff] %vm358, %v421
        %455 = vst.msk [vmem:[%s446 + $0x61] sm:$0xff] %vm358, %v422
        %456 = vst.msk [vmem:[%s446 + $0x69] sm:$0xff] %vm358, %v423
        %457 = vst.msk [vmem:[%s446 + $0x79] sm:$0xff] %vm358, %v424
        %458 = vst.msk [vmem:[%s446 + $0x81] sm:$0xff] %vm358, %v425
        %459 = vst.msk [vmem:[%s446 + $0x91] sm:$0xff] %vm358, %v426
        %460 = vst.msk [vmem:[%s446 + $0x99] sm:$0xff] %vm358, %v427
        %461 = vst.msk [vmem:[%s446 + $0xa9] sm:$0xff] %vm358, %v428
        %462 = vst.msk [vmem:[%s446 + $0xb1] sm:$0xff] %vm358, %v429
        %463 = vst.msk [vmem:[%s446 + $0xc1] sm:$0xff] %vm358, %v430
        %464 = vst.msk [vmem:[%s446 + $0xc9] sm:$0xff] %vm358, %v431
        %465 = vst.msk [vmem:[%s446 + $0xd9] sm:$0xff] %vm358, %v432
        %466 = vst.msk [vmem:[%s446 + $0xe1] sm:$0xff] %vm358, %v433
        %467 = vst.msk [vmem:[%s446 + $0xf1] sm:$0xff] %vm358, %v434
        %468 = vst.msk [vmem:[%s446 + $0xf9] sm:$0xff] %vm358, %v435
        %469 = vst.msk [vmem:[%s446 + $0x109] sm:$0xff] %vm358, %v436
        %470 = vst.msk [vmem:[%s446 + $0x111] sm:$0xff] %vm358, %v437
        %471 = vst.msk [vmem:[%s446 + $0x121] sm:$0xff] %vm358, %v438
        %472 = vst.msk [vmem:[%s446 + $0x129] sm:$0xff] %vm358, %v439
        %473 = vst.msk [vmem:[%s446 + $0x139] sm:$0xff] %vm358, %v440
        %474 = vst.msk [vmem:[%s446 + $0x141] sm:$0xff] %vm358, %v441
        %475 = vst.msk [vmem:[%s446 + $0x151] sm:$0xff] %vm358, %v442
        %476 = vst.msk [vmem:[%s446 + $0x159] sm:$0xff] %vm358, %v443
        %477 = vst.msk [vmem:[%s446 + $0x169] sm:$0xff] %vm358, %v444
        %478 = vst.msk [vmem:[%s446 + $0x171] sm:$0xff] %vm358, %v445
        %vm479 = vcmask 64512
        %480 = vst.msk [vmem:[#allocation4] sm:$0xff] %vm479, 0.0
        %481 = vst.msk [vmem:[#allocation4 + $0x8] sm:$0xff] %vm479, 0.0
        %482 = vst.msk [vmem:[#allocation4 + $0x10] sm:$0xff] %vm479, 0.0
        %483 = vst.msk [vmem:[#allocation4 + $0x18] sm:$0xff] %vm479, 0.0
        %484 = vst.msk [vmem:[#allocation4 + $0x20] sm:$0xff] %vm479, 0.0
        %485 = vst.msk [vmem:[#allocation4 + $0x28] sm:$0xff] %vm479, 0.0
        %486 = vst.msk [vmem:[#allocation4 + $0x30] sm:$0xff] %vm479, 0.0
        %487 = vst.msk [vmem:[#allocation4 + $0x38] sm:$0xff] %vm479, 0.0
        %v488 = vld [vmem:[#allocation2] ss:$2 sm:$0xff]
        %s489 = scalar_lea.vmem [#allocation2], 48
        %v490 = vld [vmem:[%s489] ss:$2 sm:$0xff]
        %s491 = scalar_lea.vmem [#allocation2], 96
        %v492 = vld [vmem:[%s491] ss:$2 sm:$0xff]
        %s493 = scalar_lea.vmem [#allocation2], 144
        %v494 = vld [vmem:[%s493] ss:$2 sm:$0xff]
        %s495 = scalar_lea.vmem [#allocation2], 192
        %v496 = vld [vmem:[%s495] ss:$2 sm:$0xff]
        %s497 = scalar_lea.vmem [#allocation2], 240
        %v498 = vld [vmem:[%s497] ss:$2 sm:$0xff]
        %s499 = scalar_lea.vmem [#allocation2], 288
        %v500 = vld [vmem:[%s499] ss:$2 sm:$0xff]
        %s501 = scalar_lea.vmem [#allocation2], 336
        %v502 = vld [vmem:[%s501] ss:$2 sm:$0xff]
        %v503 = vld [vmem:[#allocation4] sm:$0xff]
        %v504 = vld [vmem:[#allocation4 + $0x8] sm:$0xff]
        %v505 = vld [vmem:[#allocation4 + $0x10] sm:$0xff]
        %v506 = vld [vmem:[#allocation4 + $0x18] sm:$0xff]
        %v507 = vld [vmem:[#allocation4 + $0x20] sm:$0xff]
        %v508 = vld [vmem:[#allocation4 + $0x28] sm:$0xff]
        %v509 = vld [vmem:[#allocation4 + $0x30] sm:$0xff]
        %v510 = vld [vmem:[#allocation4 + $0x38] sm:$0xff]
        %v511 = vld [vmem:[%s1] sm:$0xf]
        %v513 = vsel %vm358, %v488, 0
        %v516 = vsel %vm358, %v490, 0
        %v519 = vsel %vm358, %v492, 0
        %v522 = vsel %vm358, %v494, 0
        %v525 = vsel %vm358, %v496, 0
        %v528 = vsel %vm358, %v498, 0
        %v531 = vsel %vm358, %v500, 0
        %v534 = vsel %vm358, %v502, 0
        %vm536 = vcmask 1043456
        %v538 = vsel %vm536, %v511, 0
        %540 = vmatprep.subr.mxu0 0.0
        %541 = vmatpush1.msra.mxu0 %v538
        %542 = vmatprep.subr.mxu0 0.0
        %543 = vmatpush1.msra.mxu0 0.0
        %544 = vmatprep.subr.mxu0 0.0
        %545 = vmatpush1.msra.mxu0 0.0
        %546 = vmatprep.subr.mxu0 0.0
        %547 = vmatpush1.msra.mxu0 0.0
        %548 = vmatprep.subr.mxu0 0.0
        %549 = vmatpush1.msra.mxu0 0.0
        %550 = vmatprep.subr.mxu0 0.0
        %551 = vmatpush1.msra.mxu0 0.0
        %552 = vmatprep.subr.mxu0 0.0
        %553 = vmatpush1.msra.mxu0 0.0
        %554 = vmatprep.subr.mxu0 0.0
        %555 = vmatpush1.msra.mxu0 0.0
        %556 = vmatprep.subr.mxu0 0.0
        %557 = vmatpush1.msra.mxu0 0.0
        %558 = vmatprep.subr.mxu0 0.0
        %559 = vmatpush1.msra.mxu0 0.0
        %560 = vmatprep.subr.mxu0 0.0
        %561 = vmatpush1.msra.mxu0 0.0
        %562 = vmatprep.subr.mxu0 0.0
        %563 = vmatpush1.msra.mxu0 0.0
        %564 = vmatprep.subr.mxu0 0.0
        %565 = vmatpush1.msra.mxu0 0.0
        %566 = vmatprep.subr.mxu0 0.0
        %567 = vmatpush1.msra.mxu0 0.0
        %568 = vmatprep.subr.mxu0 0.0
        %569 = vmatpush1.msra.mxu0 0.0
        %570 = vmatprep.subr.mxu0 0.0
        %571 = vmatpush1.msra.mxu0 0.0
        %572 = vmatprep.subr.mxu0 0.0
        %573 = vmatpush1.msra.mxu0 0.0
        %574 = vmatprep.subr.mxu0 0.0
        %575 = vmatpush1.msra.mxu0 0.0
        %576 = vmatprep.subr.mxu0 0.0
        %577 = vmatpush1.msra.mxu0 0.0
        %578 = vmatprep.subr.mxu0 0.0
        %579 = vmatpush1.msra.mxu0 0.0
        %580 = vmatprep.subr.mxu0 0.0
        %581 = vmatpush1.msra.mxu0 0.0
        %582 = vmatprep.subr.mxu0 0.0
        %583 = vmatpush1.msra.mxu0 0.0
        %584 = vmatprep.subr.mxu0 0.0
        %585 = vmatpush1.msra.mxu0 0.0
        %586 = vmatprep.subr.mxu0 0.0
        %587 = vmatpush1.msra.mxu0 0.0
        %588 = vmatprep.subr.mxu0 0.0
        %589 = vmatpush1.msra.mxu0 0.0
        %590 = vmatprep.subr.mxu0 0.0
        %591 = vmatpush1.msra.mxu0 0.0
        %592 = vmatprep.subr.mxu0 0.0
        %593 = vmatpush1.msra.mxu0 0.0
        %594 = vmatprep.subr.mxu0 0.0
        %595 = vmatpush1.msra.mxu0 0.0
        %596 = vmatprep.subr.mxu0 0.0
        %597 = vmatpush1.msra.mxu0 0.0
        %598 = vmatprep.subr.mxu0 0.0
        %599 = vmatpush1.msra.mxu0 0.0
        %600 = vmatprep.subr.mxu0 0.0
        %601 = vmatpush1.msra.mxu0 0.0
        %602 = vmatprep.subr.mxu0 0.0
        %603 = vmatpush1.msra.mxu0 0.0
        %604 = vmatprep.mubr.f32.mxu0 0.0
        %605 = vmatmul.mubr.f32.gmra.mrb[0].mxu0 %v513
        %v606 = vpop.f32.mrb[0].mxu0
        %v607 = vadd.f32 0.0, %v606
        %v608 = vpop.f32.mrb[0].mxu0
        %609 = vmatprep.mubr.f32.mxu0 0.0
        %610 = vmatmul.mubr.f32.gmra.mrb[0].mxu0 %v516
        %v611 = vpop.f32.mrb[0].mxu0
        %v612 = vadd.f32 0.0, %v611
        %v613 = vpop.f32.mrb[0].mxu0
        %614 = vmatprep.mubr.f32.mxu0 0.0
        %615 = vmatmul.mubr.f32.gmra.mrb[0].mxu0 %v519
        %v616 = vpop.f32.mrb[0].mxu0
        %v617 = vadd.f32 0.0, %v616
        %v618 = vpop.f32.mrb[0].mxu0
        %619 = vmatprep.mubr.f32.mxu0 0.0
        %620 = vmatmul.mubr.f32.gmra.mrb[0].mxu0 %v522
        %v621 = vpop.f32.mrb[0].mxu0
        %v622 = vadd.f32 0.0, %v621
        %v623 = vpop.f32.mrb[0].mxu0
        %624 = vmatprep.mubr.f32.mxu0 0.0
        %625 = vmatmul.mubr.f32.gmra.mrb[0].mxu0 %v525
        %v626 = vpop.f32.mrb[0].mxu0
        %v627 = vadd.f32 0.0, %v626
        %v628 = vpop.f32.mrb[0].mxu0
        %629 = vmatprep.mubr.f32.mxu0 0.0
        %630 = vmatmul.mubr.f32.gmra.mrb[0].mxu0 %v528
        %v631 = vpop.f32.mrb[0].mxu0
        %v632 = vadd.f32 0.0, %v631
        %v633 = vpop.f32.mrb[0].mxu0
        %634 = vmatprep.mubr.f32.mxu0 0.0
        %635 = vmatmul.mubr.f32.gmra.mrb[0].mxu0 %v531
        %v636 = vpop.f32.mrb[0].mxu0
        %v637 = vadd.f32 0.0, %v636
        %v638 = vpop.f32.mrb[0].mxu0
        %639 = vmatprep.mubr.f32.mxu0 0.0
        %640 = vmatmul.mubr.f32.gmra.mrb[0].mxu0 %v534
        %v641 = vpop.f32.mrb[0].mxu0
        %v642 = vadd.f32 0.0, %v641
        %v643 = vpop.f32.mrb[0].mxu0
        %644 = vdwg.mxu0
        %v645 = vadd.f32 %v503, %v607
        %v646 = vadd.f32 %v504, %v612
        %v647 = vadd.f32 %v505, %v617
        %v648 = vadd.f32 %v506, %v622
        %v649 = vadd.f32 %v507, %v627
        %v650 = vadd.f32 %v508, %v632
        %v651 = vadd.f32 %v509, %v637
        %v652 = vadd.f32 %v510, %v642
        %653 = vst.msk [vmem:[#allocation4] sm:$0xff] %vm479, %v645
        %654 = vst.msk [vmem:[#allocation4 + $0x8] sm:$0xff] %vm479, %v646
        %655 = vst.msk [vmem:[#allocation4 + $0x10] sm:$0xff] %vm479, %v647
        %656 = vst.msk [vmem:[#allocation4 + $0x18] sm:$0xff] %vm479, %v648
        %657 = vst.msk [vmem:[#allocation4 + $0x20] sm:$0xff] %vm479, %v649
        %658 = vst.msk [vmem:[#allocation4 + $0x28] sm:$0xff] %vm479, %v650
        %659 = vst.msk [vmem:[#allocation4 + $0x30] sm:$0xff] %vm479, %v651
        %660 = vst.msk [vmem:[#allocation4 + $0x38] sm:$0xff] %vm479, %v652
        %s661 = scalar_lea.vmem [#allocation2], 1
        %v662 = vld [vmem:[%s661] ss:$2 sm:$0xff]
        %s663 = scalar_lea.vmem [#allocation2], 49
        %v664 = vld [vmem:[%s663] ss:$2 sm:$0xff]
        %s665 = scalar_lea.vmem [#allocation2], 97
        %v666 = vld [vmem:[%s665] ss:$2 sm:$0xff]
        %s667 = scalar_lea.vmem [#allocation2], 145
        %v668 = vld [vmem:[%s667] ss:$2 sm:$0xff]
        %s669 = scalar_lea.vmem [#allocation2], 193
        %v670 = vld [vmem:[%s669] ss:$2 sm:$0xff]
        %s671 = scalar_lea.vmem [#allocation2], 241
        %v672 = vld [vmem:[%s671] ss:$2 sm:$0xff]
        %s673 = scalar_lea.vmem [#allocation2], 289
        %v674 = vld [vmem:[%s673] ss:$2 sm:$0xff]
        %s675 = scalar_lea.vmem [#allocation2], 337
        %v676 = vld [vmem:[%s675] ss:$2 sm:$0xff]
        %v677 = vld [vmem:[#allocation4] sm:$0xff]
        %v678 = vld [vmem:[#allocation4 + $0x8] sm:$0xff]
        %v679 = vld [vmem:[#allocation4 + $0x10] sm:$0xff]
        %v680 = vld [vmem:[#allocation4 + $0x18] sm:$0xff]
        %v681 = vld [vmem:[#allocation4 + $0x20] sm:$0xff]
        %v682 = vld [vmem:[#allocation4 + $0x28] sm:$0xff]
        %v683 = vld [vmem:[#allocation4 + $0x30] sm:$0xff]
        %v684 = vld [vmem:[#allocation4 + $0x38] sm:$0xff]
        %s685 = scalar_lea.vmem %s1, 4
        %v686 = vld [vmem:[%s685] sm:$0xf]
        %v688 = vsel %vm358, %v662, 0
        %v691 = vsel %vm358, %v664, 0
        %v694 = vsel %vm358, %v666, 0
        %v697 = vsel %vm358, %v668, 0
        %v700 = vsel %vm358, %v670, 0
        %v703 = vsel %vm358, %v672, 0
        %v706 = vsel %vm358, %v674, 0
        %v709 = vsel %vm358, %v676, 0
        %v712 = vsel %vm536, %v686, 0
        %714 = vmatprep.subr.mxu0 0.0
        %715 = vmatpush1.msra.mxu0 %v712
        %716 = vmatprep.subr.mxu0 0.0
        %717 = vmatpush1.msra.mxu0 0.0
        %718 = vmatprep.subr.mxu0 0.0
        %719 = vmatpush1.msra.mxu0 0.0
        %720 = vmatprep.subr.mxu0 0.0
        %721 = vmatpush1.msra.mxu0 0.0
        %722 = vmatprep.subr.mxu0 0.0
        %723 = vmatpush1.msra.mxu0 0.0
        %724 = vmatprep.subr.mxu0 0.0
        %725 = vmatpush1.msra.mxu0 0.0
        %726 = vmatprep.subr.mxu0 0.0
        %727 = vmatpush1.msra.mxu0 0.0
        %728 = vmatprep.subr.mxu0 0.0
        %729 = vmatpush1.msra.mxu0 0.0
        %730 = vmatprep.subr.mxu0 0.0
        %731 = vmatpush1.msra.mxu0 0.0
        %732 = vmatprep.subr.mxu0 0.0
        %733 = vmatpush1.msra.mxu0 0.0
        %734 = vmatprep.subr.mxu0 0.0
        %735 = vmatpush1.msra.mxu0 0.0
        %736 = vmatprep.subr.mxu0 0.0
        %737 = vmatpush1.msra.mxu0 0.0
        %738 = vmatprep.subr.mxu0 0.0
        %739 = vmatpush1.msra.mxu0 0.0
        %740 = vmatprep.subr.mxu0 0.0
        %741 = vmatpush1.msra.mxu0 0.0
        %742 = vmatprep.subr.mxu0 0.0
        %743 = vmatpush1.msra.mxu0 0.0
        %744 = vmatprep.subr.mxu0 0.0
        %745 = vmatpush1.msra.mxu0 0.0
        %746 = vmatprep.subr.mxu0 0.0
        %747 = vmatpush1.msra.mxu0 0.0
        %748 = vmatprep.subr.mxu0 0.0
        %749 = vmatpush1.msra.mxu0 0.0
        %750 = vmatprep.subr.mxu0 0.0
        %751 = vmatpush1.msra.mxu0 0.0
        %752 = vmatprep.subr.mxu0 0.0
        %753 = vmatpush1.msra.mxu0 0.0
        %754 = vmatprep.subr.mxu0 0.0
        %755 = vmatpush1.msra.mxu0 0.0
        %756 = vmatprep.subr.mxu0 0.0
        %757 = vmatpush1.msra.mxu0 0.0
        %758 = vmatprep.subr.mxu0 0.0
        %759 = vmatpush1.msra.mxu0 0.0
        %760 = vmatprep.subr.mxu0 0.0
        %761 = vmatpush1.msra.mxu0 0.0
        %762 = vmatprep.subr.mxu0 0.0
        %763 = vmatpush1.msra.mxu0 0.0
        %764 = vmatprep.subr.mxu0 0.0
        %765 = vmatpush1.msra.mxu0 0.0
        %766 = vmatprep.subr.mxu0 0.0
        %767 = vmatpush1.msra.mxu0 0.0
        %768 = vmatprep.subr.mxu0 0.0
        %769 = vmatpush1.msra.mxu0 0.0
        %770 = vmatprep.subr.mxu0 0.0
        %771 = vmatpush1.msra.mxu0 0.0
        %772 = vmatprep.subr.mxu0 0.0
        %773 = vmatpush1.msra.mxu0 0.0
        %774 = vmatprep.subr.mxu0 0.0
        %775 = vmatpush1.msra.mxu0 0.0
        %776 = vmatprep.subr.mxu0 0.0
        %777 = vmatpush1.msra.mxu0 0.0
        %778 = vmatprep.mubr.f32.mxu0 0.0
        %779 = vmatmul.mubr.f32.gmra.mrb[0].mxu0 %v688
        %v780 = vpop.f32.mrb[0].mxu0
        %v781 = vadd.f32 0.0, %v780
        %v782 = vpop.f32.mrb[0].mxu0
        %783 = vmatprep.mubr.f32.mxu0 0.0
        %784 = vmatmul.mubr.f32.gmra.mrb[0].mxu0 %v691
        %v785 = vpop.f32.mrb[0].mxu0
        %v786 = vadd.f32 0.0, %v785
        %v787 = vpop.f32.mrb[0].mxu0
        %788 = vmatprep.mubr.f32.mxu0 0.0
        %789 = vmatmul.mubr.f32.gmra.mrb[0].mxu0 %v694
        %v790 = vpop.f32.mrb[0].mxu0
        %v791 = vadd.f32 0.0, %v790
        %v792 = vpop.f32.mrb[0].mxu0
        %793 = vmatprep.mubr.f32.mxu0 0.0
        %794 = vmatmul.mubr.f32.gmra.mrb[0].mxu0 %v697
        %v795 = vpop.f32.mrb[0].mxu0
        %v796 = vadd.f32 0.0, %v795
        %v797 = vpop.f32.mrb[0].mxu0
        %798 = vmatprep.mubr.f32.mxu0 0.0
        %799 = vmatmul.mubr.f32.gmra.mrb[0].mxu0 %v700
        %v800 = vpop.f32.mrb[0].mxu0
        %v801 = vadd.f32 0.0, %v800
        %v802 = vpop.f32.mrb[0].mxu0
        %803 = vmatprep.mubr.f32.mxu0 0.0
        %804 = vmatmul.mubr.f32.gmra.mrb[0].mxu0 %v703
        %v805 = vpop.f32.mrb[0].mxu0
        %v806 = vadd.f32 0.0, %v805
        %v807 = vpop.f32.mrb[0].mxu0
        %808 = vmatprep.mubr.f32.mxu0 0.0
        %809 = vmatmul.mubr.f32.gmra.mrb[0].mxu0 %v706
        %v810 = vpop.f32.mrb[0].mxu0
        %v811 = vadd.f32 0.0, %v810
        %v812 = vpop.f32.mrb[0].mxu0
        %813 = vmatprep.mubr.f32.mxu0 0.0
        %814 = vmatmul.mubr.f32.gmra.mrb[0].mxu0 %v709
        %v815 = vpop.f32.mrb[0].mxu0
        %v816 = vadd.f32 0.0, %v815
        %v817 = vpop.f32.mrb[0].mxu0
        %818 = vdwg.mxu0
        %v819 = vadd.f32 %v677, %v781
        %v820 = vadd.f32 %v678, %v786
        %v821 = vadd.f32 %v679, %v791
        %v822 = vadd.f32 %v680, %v796
        %v823 = vadd.f32 %v681, %v801
        %v824 = vadd.f32 %v682, %v806
        %v825 = vadd.f32 %v683, %v811
        %v826 = vadd.f32 %v684, %v816
        %827 = vst.msk [vmem:[#allocation4] sm:$0xff] %vm479, %v819
        %828 = vst.msk [vmem:[#allocation4 + $0x8] sm:$0xff] %vm479, %v820
        %829 = vst.msk [vmem:[#allocation4 + $0x10] sm:$0xff] %vm479, %v821
        %830 = vst.msk [vmem:[#allocation4 + $0x18] sm:$0xff] %vm479, %v822
        %831 = vst.msk [vmem:[#allocation4 + $0x20] sm:$0xff] %vm479, %v823
        %832 = vst.msk [vmem:[#allocation4 + $0x28] sm:$0xff] %vm479, %v824
        %833 = vst.msk [vmem:[#allocation4 + $0x30] sm:$0xff] %vm479, %v825
        %834 = vst.msk [vmem:[#allocation4 + $0x38] sm:$0xff] %vm479, %v826
        %s835 = scalar_lea.vmem [#allocation2], 2
        %v836 = vld [vmem:[%s835] ss:$2 sm:$0xff]
        %s837 = scalar_lea.vmem [#allocation2], 50
        %v838 = vld [vmem:[%s837] ss:$2 sm:$0xff]
        %s839 = scalar_lea.vmem [#allocation2], 98
        %v840 = vld [vmem:[%s839] ss:$2 sm:$0xff]
        %s841 = scalar_lea.vmem [#allocation2], 146
        %v842 = vld [vmem:[%s841] ss:$2 sm:$0xff]
        %s843 = scalar_lea.vmem [#allocation2], 194
        %v844 = vld [vmem:[%s843] ss:$2 sm:$0xff]
        %s845 = scalar_lea.vmem [#allocation2], 242
        %v846 = vld [vmem:[%s845] ss:$2 sm:$0xff]
        %s847 = scalar_lea.vmem [#allocation2], 290
        %v848 = vld [vmem:[%s847] ss:$2 sm:$0xff]
        %s849 = scalar_lea.vmem [#allocation2], 338
        %v850 = vld [vmem:[%s849] ss:$2 sm:$0xff]
        %v851 = vld [vmem:[#allocation4] sm:$0xff]
        %v852 = vld [vmem:[#allocation4 + $0x8] sm:$0xff]
        %v853 = vld [vmem:[#allocation4 + $0x10] sm:$0xff]
        %v854 = vld [vmem:[#allocation4 + $0x18] sm:$0xff]
        %v855 = vld [vmem:[#allocation4 + $0x20] sm:$0xff]
        %v856 = vld [vmem:[#allocation4 + $0x28] sm:$0xff]
        %v857 = vld [vmem:[#allocation4 + $0x30] sm:$0xff]
        %v858 = vld [vmem:[#allocation4 + $0x38] sm:$0xff]
        %s859 = scalar_lea.vmem %s1, 8
        %v860 = vld [vmem:[%s859] sm:$0xf]
        %v862 = vsel %vm358, %v836, 0
        %v865 = vsel %vm358, %v838, 0
        %v868 = vsel %vm358, %v840, 0
        %v871 = vsel %vm358, %v842, 0
        %v874 = vsel %vm358, %v844, 0
        %v877 = vsel %vm358, %v846, 0
        %v880 = vsel %vm358, %v848, 0
        %v883 = vsel %vm358, %v850, 0
        %v886 = vsel %vm536, %v860, 0
        %888 = vmatprep.subr.mxu0 0.0
        %889 = vmatpush1.msra.mxu0 %v886
        %890 = vmatprep.subr.mxu0 0.0
        %891 = vmatpush1.msra.mxu0 0.0
        %892 = vmatprep.subr.mxu0 0.0
        %893 = vmatpush1.msra.mxu0 0.0
        %894 = vmatprep.subr.mxu0 0.0
        %895 = vmatpush1.msra.mxu0 0.0
        %896 = vmatprep.subr.mxu0 0.0
        %897 = vmatpush1.msra.mxu0 0.0
        %898 = vmatprep.subr.mxu0 0.0
        %899 = vmatpush1.msra.mxu0 0.0
        %900 = vmatprep.subr.mxu0 0.0
        %901 = vmatpush1.msra.mxu0 0.0
        %902 = vmatprep.subr.mxu0 0.0
        %903 = vmatpush1.msra.mxu0 0.0
        %904 = vmatprep.subr.mxu0 0.0
        %905 = vmatpush1.msra.mxu0 0.0
        %906 = vmatprep.subr.mxu0 0.0
        %907 = vmatpush1.msra.mxu0 0.0
        %908 = vmatprep.subr.mxu0 0.0
        %909 = vmatpush1.msra.mxu0 0.0
        %910 = vmatprep.subr.mxu0 0.0
        %911 = vmatpush1.msra.mxu0 0.0
        %912 = vmatprep.subr.mxu0 0.0
        %913 = vmatpush1.msra.mxu0 0.0
        %914 = vmatprep.subr.mxu0 0.0
        %915 = vmatpush1.msra.mxu0 0.0
        %916 = vmatprep.subr.mxu0 0.0
        %917 = vmatpush1.msra.mxu0 0.0
        %918 = vmatprep.subr.mxu0 0.0
        %919 = vmatpush1.msra.mxu0 0.0
        %920 = vmatprep.subr.mxu0 0.0
        %921 = vmatpush1.msra.mxu0 0.0
        %922 = vmatprep.subr.mxu0 0.0
        %923 = vmatpush1.msra.mxu0 0.0
        %924 = vmatprep.subr.mxu0 0.0
        %925 = vmatpush1.msra.mxu0 0.0
        %926 = vmatprep.subr.mxu0 0.0
        %927 = vmatpush1.msra.mxu0 0.0
        %928 = vmatprep.subr.mxu0 0.0
        %929 = vmatpush1.msra.mxu0 0.0
        %930 = vmatprep.subr.mxu0 0.0
        %931 = vmatpush1.msra.mxu0 0.0
        %932 = vmatprep.subr.mxu0 0.0
        %933 = vmatpush1.msra.mxu0 0.0
        %934 = vmatprep.subr.mxu0 0.0
        %935 = vmatpush1.msra.mxu0 0.0
        %936 = vmatprep.subr.mxu0 0.0
        %937 = vmatpush1.msra.mxu0 0.0
        %938 = vmatprep.subr.mxu0 0.0
        %939 = vmatpush1.msra.mxu0 0.0
        %940 = vmatprep.subr.mxu0 0.0
        %941 = vmatpush1.msra.mxu0 0.0
        %942 = vmatprep.subr.mxu0 0.0
        %943 = vmatpush1.msra.mxu0 0.0
        %944 = vmatprep.subr.mxu0 0.0
        %945 = vmatpush1.msra.mxu0 0.0
        %946 = vmatprep.subr.mxu0 0.0
        %947 = vmatpush1.msra.mxu0 0.0
        %948 = vmatprep.subr.mxu0 0.0
        %949 = vmatpush1.msra.mxu0 0.0
        %950 = vmatprep.subr.mxu0 0.0
        %951 = vmatpush1.msra.mxu0 0.0
        %952 = vmatprep.mubr.f32.mxu0 0.0
        %953 = vmatmul.mubr.f32.gmra.mrb[0].mxu0 %v862
        %v954 = vpop.f32.mrb[0].mxu0
        %v955 = vadd.f32 0.0, %v954
        %v956 = vpop.f32.mrb[0].mxu0
        %957 = vmatprep.mubr.f32.mxu0 0.0
        %958 = vmatmul.mubr.f32.gmra.mrb[0].mxu0 %v865
        %v959 = vpop.f32.mrb[0].mxu0
        %v960 = vadd.f32 0.0, %v959
        %v961 = vpop.f32.mrb[0].mxu0
        %962 = vmatprep.mubr.f32.mxu0 0.0
        %963 = vmatmul.mubr.f32.gmra.mrb[0].mxu0 %v868
        %v964 = vpop.f32.mrb[0].mxu0
        %v965 = vadd.f32 0.0, %v964
        %v966 = vpop.f32.mrb[0].mxu0
        %967 = vmatprep.mubr.f32.mxu0 0.0
        %968 = vmatmul.mubr.f32.gmra.mrb[0].mxu0 %v871
        %v969 = vpop.f32.mrb[0].mxu0
        %v970 = vadd.f32 0.0, %v969
        %v971 = vpop.f32.mrb[0].mxu0
        %972 = vmatprep.mubr.f32.mxu0 0.0
        %973 = vmatmul.mubr.f32.gmra.mrb[0].mxu0 %v874
        %v974 = vpop.f32.mrb[0].mxu0
        %v975 = vadd.f32 0.0, %v974
        %v976 = vpop.f32.mrb[0].mxu0
        %977 = vmatprep.mubr.f32.mxu0 0.0
        %978 = vmatmul.mubr.f32.gmra.mrb[0].mxu0 %v877
        %v979 = vpop.f32.mrb[0].mxu0
        %v980 = vadd.f32 0.0, %v979
        %v981 = vpop.f32.mrb[0].mxu0
        %982 = vmatprep.mubr.f32.mxu0 0.0
        %983 = vmatmul.mubr.f32.gmra.mrb[0].mxu0 %v880
        %v984 = vpop.f32.mrb[0].mxu0
        %v985 = vadd.f32 0.0, %v984
        %v986 = vpop.f32.mrb[0].mxu0
        %987 = vmatprep.mubr.f32.mxu0 0.0
        %988 = vmatmul.mubr.f32.gmra.mrb[0].mxu0 %v883
        %v989 = vpop.f32.mrb[0].mxu0
        %v990 = vadd.f32 0.0, %v989
        %v991 = vpop.f32.mrb[0].mxu0
        %992 = vdwg.mxu0
        %v993 = vadd.f32 %v851, %v955
        %v994 = vadd.f32 %v852, %v960
        %v995 = vadd.f32 %v853, %v965
        %v996 = vadd.f32 %v854, %v970
        %v997 = vadd.f32 %v855, %v975
        %v998 = vadd.f32 %v856, %v980
        %v999 = vadd.f32 %v857, %v985
        %v1000 = vadd.f32 %v858, %v990
        %1001 = vst.msk [vmem:[#allocation4] sm:$0xff] %vm479, %v993
        %1002 = vst.msk [vmem:[#allocation4 + $0x8] sm:$0xff] %vm479, %v994
        %1003 = vst.msk [vmem:[#allocation4 + $0x10] sm:$0xff] %vm479, %v995
        %1004 = vst.msk [vmem:[#allocation4 + $0x18] sm:$0xff] %vm479, %v996
        %1005 = vst.msk [vmem:[#allocation4 + $0x20] sm:$0xff] %vm479, %v997
        %1006 = vst.msk [vmem:[#allocation4 + $0x28] sm:$0xff] %vm479, %v998
        %1007 = vst.msk [vmem:[#allocation4 + $0x30] sm:$0xff] %vm479, %v999
        %1008 = vst.msk [vmem:[#allocation4 + $0x38] sm:$0xff] %vm479, %v1000
        %v1009 = vld [vmem:[%s446] ss:$2 sm:$0xff]
        %s1010 = scalar_lea.vmem %s446, 48 [#allocation2]
        %v1011 = vld [vmem:[%s1010] ss:$2 sm:$0xff]
        %s1012 = scalar_lea.vmem %s446, 96 [#allocation2]
        %v1013 = vld [vmem:[%s1012] ss:$2 sm:$0xff]
        %s1014 = scalar_lea.vmem %s446, 144 [#allocation2]
        %v1015 = vld [vmem:[%s1014] ss:$2 sm:$0xff]
        %s1016 = scalar_lea.vmem %s446, 192 [#allocation2]
        %v1017 = vld [vmem:[%s1016] ss:$2 sm:$0xff]
        %s1018 = scalar_lea.vmem %s446, 240 [#allocation2]
        %v1019 = vld [vmem:[%s1018] ss:$2 sm:$0xff]
        %s1020 = scalar_lea.vmem %s446, 288 [#allocation2]
        %v1021 = vld [vmem:[%s1020] ss:$2 sm:$0xff]
        %s1022 = scalar_lea.vmem %s446, 336 [#allocation2]
        %v1023 = vld [vmem:[%s1022] ss:$2 sm:$0xff]
        %v1024 = vld [vmem:[#allocation4] sm:$0xff]
        %v1025 = vld [vmem:[#allocation4 + $0x8] sm:$0xff]
        %v1026 = vld [vmem:[#allocation4 + $0x10] sm:$0xff]
        %v1027 = vld [vmem:[#allocation4 + $0x18] sm:$0xff]
        %v1028 = vld [vmem:[#allocation4 + $0x20] sm:$0xff]
        %v1029 = vld [vmem:[#allocation4 + $0x28] sm:$0xff]
        %v1030 = vld [vmem:[#allocation4 + $0x30] sm:$0xff]
        %v1031 = vld [vmem:[#allocation4 + $0x38] sm:$0xff]
        %s1032 = scalar_lea.vmem %s1, 12
        %v1033 = vld [vmem:[%s1032] sm:$0xf]
        %v1035 = vsel %vm358, %v1009, 0
        %v1038 = vsel %vm358, %v1011, 0
        %v1041 = vsel %vm358, %v1013, 0
        %v1044 = vsel %vm358, %v1015, 0
        %v1047 = vsel %vm358, %v1017, 0
        %v1050 = vsel %vm358, %v1019, 0
        %v1053 = vsel %vm358, %v1021, 0
        %v1056 = vsel %vm358, %v1023, 0
        %v1059 = vsel %vm536, %v1033, 0
        %1061 = vmatprep.subr.mxu0 0.0
        %1062 = vmatpush1.msra.mxu0 %v1059
        %1063 = vmatprep.subr.mxu0 0.0
        %1064 = vmatpush1.msra.mxu0 0.0
        %1065 = vmatprep.subr.mxu0 0.0
        %1066 = vmatpush1.msra.mxu0 0.0
        %1067 = vmatprep.subr.mxu0 0.0
        %1068 = vmatpush1.msra.mxu0 0.0
        %1069 = vmatprep.subr.mxu0 0.0
        %1070 = vmatpush1.msra.mxu0 0.0
        %1071 = vmatprep.subr.mxu0 0.0
        %1072 = vmatpush1.msra.mxu0 0.0
        %1073 = vmatprep.subr.mxu0 0.0
        %1074 = vmatpush1.msra.mxu0 0.0
        %1075 = vmatprep.subr.mxu0 0.0
        %1076 = vmatpush1.msra.mxu0 0.0
        %1077 = vmatprep.subr.mxu0 0.0
        %1078 = vmatpush1.msra.mxu0 0.0
        %1079 = vmatprep.subr.mxu0 0.0
        %1080 = vmatpush1.msra.mxu0 0.0
        %1081 = vmatprep.subr.mxu0 0.0
        %1082 = vmatpush1.msra.mxu0 0.0
        %1083 = vmatprep.subr.mxu0 0.0
        %1084 = vmatpush1.msra.mxu0 0.0
        %1085 = vmatprep.subr.mxu0 0.0
        %1086 = vmatpush1.msra.mxu0 0.0
        %1087 = vmatprep.subr.mxu0 0.0
        %1088 = vmatpush1.msra.mxu0 0.0
        %1089 = vmatprep.subr.mxu0 0.0
        %1090 = vmatpush1.msra.mxu0 0.0
        %1091 = vmatprep.subr.mxu0 0.0
        %1092 = vmatpush1.msra.mxu0 0.0
        %1093 = vmatprep.subr.mxu0 0.0
        %1094 = vmatpush1.msra.mxu0 0.0
        %1095 = vmatprep.subr.mxu0 0.0
        %1096 = vmatpush1.msra.mxu0 0.0
        %1097 = vmatprep.subr.mxu0 0.0
        %1098 = vmatpush1.msra.mxu0 0.0
        %1099 = vmatprep.subr.mxu0 0.0
        %1100 = vmatpush1.msra.mxu0 0.0
        %1101 = vmatprep.subr.mxu0 0.0
        %1102 = vmatpush1.msra.mxu0 0.0
        %1103 = vmatprep.subr.mxu0 0.0
        %1104 = vmatpush1.msra.mxu0 0.0
        %1105 = vmatprep.subr.mxu0 0.0
        %1106 = vmatpush1.msra.mxu0 0.0
        %1107 = vmatprep.subr.mxu0 0.0
        %1108 = vmatpush1.msra.mxu0 0.0
        %1109 = vmatprep.subr.mxu0 0.0
        %1110 = vmatpush1.msra.mxu0 0.0
        %1111 = vmatprep.subr.mxu0 0.0
        %1112 = vmatpush1.msra.mxu0 0.0
        %1113 = vmatprep.subr.mxu0 0.0
        %1114 = vmatpush1.msra.mxu0 0.0
        %1115 = vmatprep.subr.mxu0 0.0
        %1116 = vmatpush1.msra.mxu0 0.0
        %1117 = vmatprep.subr.mxu0 0.0
        %1118 = vmatpush1.msra.mxu0 0.0
        %1119 = vmatprep.subr.mxu0 0.0
        %1120 = vmatpush1.msra.mxu0 0.0
        %1121 = vmatprep.subr.mxu0 0.0
        %1122 = vmatpush1.msra.mxu0 0.0
        %1123 = vmatprep.subr.mxu0 0.0
        %1124 = vmatpush1.msra.mxu0 0.0
        %1125 = vmatprep.mubr.f32.mxu0 0.0
        %1126 = vmatmul.mubr.f32.gmra.mrb[0].mxu0 %v1035
        %v1127 = vpop.f32.mrb[0].mxu0
        %v1128 = vadd.f32 0.0, %v1127
        %v1129 = vpop.f32.mrb[0].mxu0
        %1130 = vmatprep.mubr.f32.mxu0 0.0
        %1131 = vmatmul.mubr.f32.gmra.mrb[0].mxu0 %v1038
        %v1132 = vpop.f32.mrb[0].mxu0
        %v1133 = vadd.f32 0.0, %v1132
        %v1134 = vpop.f32.mrb[0].mxu0
        %1135 = vmatprep.mubr.f32.mxu0 0.0
        %1136 = vmatmul.mubr.f32.gmra.mrb[0].mxu0 %v1041
        %v1137 = vpop.f32.mrb[0].mxu0
        %v1138 = vadd.f32 0.0, %v1137
        %v1139 = vpop.f32.mrb[0].mxu0
        %1140 = vmatprep.mubr.f32.mxu0 0.0
        %1141 = vmatmul.mubr.f32.gmra.mrb[0].mxu0 %v1044
        %v1142 = vpop.f32.mrb[0].mxu0
        %v1143 = vadd.f32 0.0, %v1142
        %v1144 = vpop.f32.mrb[0].mxu0
        %1145 = vmatprep.mubr.f32.mxu0 0.0
        %1146 = vmatmul.mubr.f32.gmra.mrb[0].mxu0 %v1047
        %v1147 = vpop.f32.mrb[0].mxu0
        %v1148 = vadd.f32 0.0, %v1147
        %v1149 = vpop.f32.mrb[0].mxu0
        %1150 = vmatprep.mubr.f32.mxu0 0.0
        %1151 = vmatmul.mubr.f32.gmra.mrb[0].mxu0 %v1050
        %v1152 = vpop.f32.mrb[0].mxu0
        %v1153 = vadd.f32 0.0, %v1152
        %v1154 = vpop.f32.mrb[0].mxu0
        %1155 = vmatprep.mubr.f32.mxu0 0.0
        %1156 = vmatmul.mubr.f32.gmra.mrb[0].mxu0 %v1053
        %v1157 = vpop.f32.mrb[0].mxu0
        %v1158 = vadd.f32 0.0, %v1157
        %v1159 = vpop.f32.mrb[0].mxu0
        %1160 = vmatprep.mubr.f32.mxu0 0.0
        %1161 = vmatmul.mubr.f32.gmra.mrb[0].mxu0 %v1056
        %v1162 = vpop.f32.mrb[0].mxu0
        %v1163 = vadd.f32 0.0, %v1162
        %v1164 = vpop.f32.mrb[0].mxu0
        %1165 = vdwg.mxu0
        %v1166 = vadd.f32 %v1024, %v1128
        %v1167 = vadd.f32 %v1025, %v1133
        %v1168 = vadd.f32 %v1026, %v1138
        %v1169 = vadd.f32 %v1027, %v1143
        %v1170 = vadd.f32 %v1028, %v1148
        %v1171 = vadd.f32 %v1029, %v1153
        %v1172 = vadd.f32 %v1030, %v1158
        %v1173 = vadd.f32 %v1031, %v1163
        %1174 = vst.msk [vmem:[#allocation4] sm:$0xff] %vm479, %v1166
        %1175 = vst.msk [vmem:[#allocation4 + $0x8] sm:$0xff] %vm479, %v1167
        %1176 = vst.msk [vmem:[#allocation4 + $0x10] sm:$0xff] %vm479, %v1168
        %1177 = vst.msk [vmem:[#allocation4 + $0x18] sm:$0xff] %vm479, %v1169
        %1178 = vst.msk [vmem:[#allocation4 + $0x20] sm:$0xff] %vm479, %v1170
        %1179 = vst.msk [vmem:[#allocation4 + $0x28] sm:$0xff] %vm479, %v1171
        %1180 = vst.msk [vmem:[#allocation4 + $0x30] sm:$0xff] %vm479, %v1172
        %1181 = vst.msk [vmem:[#allocation4 + $0x38] sm:$0xff] %vm479, %v1173
        %s1182 = scalar_lea.vmem %s446, 1 [#allocation2]
        %v1183 = vld [vmem:[%s1182] ss:$2 sm:$0xff]
        %s1184 = scalar_lea.vmem %s446, 49 [#allocation2]
        %v1185 = vld [vmem:[%s1184] ss:$2 sm:$0xff]
        %s1186 = scalar_lea.vmem %s446, 97 [#allocation2]
        %v1187 = vld [vmem:[%s1186] ss:$2 sm:$0xff]
        %s1188 = scalar_lea.vmem %s446, 145 [#allocation2]
        %v1189 = vld [vmem:[%s1188] ss:$2 sm:$0xff]
        %s1190 = scalar_lea.vmem %s446, 193 [#allocation2]
        %v1191 = vld [vmem:[%s1190] ss:$2 sm:$0xff]
        %s1192 = scalar_lea.vmem %s446, 241 [#allocation2]
        %v1193 = vld [vmem:[%s1192] ss:$2 sm:$0xff]
        %s1194 = scalar_lea.vmem %s446, 289 [#allocation2]
        %v1195 = vld [vmem:[%s1194] ss:$2 sm:$0xff]
        %s1196 = scalar_lea.vmem %s446, 337 [#allocation2]
        %v1197 = vld [vmem:[%s1196] ss:$2 sm:$0xff]
        %v1198 = vld [vmem:[#allocation4] sm:$0xff]
        %v1199 = vld [vmem:[#allocation4 + $0x8] sm:$0xff]
        %v1200 = vld [vmem:[#allocation4 + $0x10] sm:$0xff]
        %v1201 = vld [vmem:[#allocation4 + $0x18] sm:$0xff]
        %v1202 = vld [vmem:[#allocation4 + $0x20] sm:$0xff]
        %v1203 = vld [vmem:[#allocation4 + $0x28] sm:$0xff]
        %v1204 = vld [vmem:[#allocation4 + $0x30] sm:$0xff]
        %v1205 = vld [vmem:[#allocation4 + $0x38] sm:$0xff]
        %s1206 = scalar_lea.vmem %s1, 16
        %v1207 = vld [vmem:[%s1206] sm:$0xf]
        %v1209 = vsel %vm358, %v1183, 0
        %v1212 = vsel %vm358, %v1185, 0
        %v1215 = vsel %vm358, %v1187, 0
        %v1218 = vsel %vm358, %v1189, 0
        %v1221 = vsel %vm358, %v1191, 0
        %v1224 = vsel %vm358, %v1193, 0
        %v1227 = vsel %vm358, %v1195, 0
        %v1230 = vsel %vm358, %v1197, 0
        %v1233 = vsel %vm536, %v1207, 0
        %1235 = vmatprep.subr.mxu0 0.0
        %1236 = vmatpush1.msra.mxu0 %v1233
        %1237 = vmatprep.subr.mxu0 0.0
        %1238 = vmatpush1.msra.mxu0 0.0
        %1239 = vmatprep.subr.mxu0 0.0
        %1240 = vmatpush1.msra.mxu0 0.0
        %1241 = vmatprep.subr.mxu0 0.0
        %1242 = vmatpush1.msra.mxu0 0.0
        %1243 = vmatprep.subr.mxu0 0.0
        %1244 = vmatpush1.msra.mxu0 0.0
        %1245 = vmatprep.subr.mxu0 0.0
        %1246 = vmatpush1.msra.mxu0 0.0
        %1247 = vmatprep.subr.mxu0 0.0
        %1248 = vmatpush1.msra.mxu0 0.0
        %1249 = vmatprep.subr.mxu0 0.0
        %1250 = vmatpush1.msra.mxu0 0.0
        %1251 = vmatprep.subr.mxu0 0.0
        %1252 = vmatpush1.msra.mxu0 0.0
        %1253 = vmatprep.subr.mxu0 0.0
        %1254 = vmatpush1.msra.mxu0 0.0
        %1255 = vmatprep.subr.mxu0 0.0
        %1256 = vmatpush1.msra.mxu0 0.0
        %1257 = vmatprep.subr.mxu0 0.0
        %1258 = vmatpush1.msra.mxu0 0.0
        %1259 = vmatprep.subr.mxu0 0.0
        %1260 = vmatpush1.msra.mxu0 0.0
        %1261 = vmatprep.subr.mxu0 0.0
        %1262 = vmatpush1.msra.mxu0 0.0
        %1263 = vmatprep.subr.mxu0 0.0
        %1264 = vmatpush1.msra.mxu0 0.0
        %1265 = vmatprep.subr.mxu0 0.0
        %1266 = vmatpush1.msra.mxu0 0.0
        %1267 = vmatprep.subr.mxu0 0.0
        %1268 = vmatpush1.msra.mxu0 0.0
        %1269 = vmatprep.subr.mxu0 0.0
        %1270 = vmatpush1.msra.mxu0 0.0
        %1271 = vmatprep.subr.mxu0 0.0
        %1272 = vmatpush1.msra.mxu0 0.0
        %1273 = vmatprep.subr.mxu0 0.0
        %1274 = vmatpush1.msra.mxu0 0.0
        %1275 = vmatprep.subr.mxu0 0.0
        %1276 = vmatpush1.msra.mxu0 0.0
        %1277 = vmatprep.subr.mxu0 0.0
        %1278 = vmatpush1.msra.mxu0 0.0
        %1279 = vmatprep.subr.mxu0 0.0
        %1280 = vmatpush1.msra.mxu0 0.0
        %1281 = vmatprep.subr.mxu0 0.0
        %1282 = vmatpush1.msra.mxu0 0.0
        %1283 = vmatprep.subr.mxu0 0.0
        %1284 = vmatpush1.msra.mxu0 0.0
        %1285 = vmatprep.subr.mxu0 0.0
        %1286 = vmatpush1.msra.mxu0 0.0
        %1287 = vmatprep.subr.mxu0 0.0
        %1288 = vmatpush1.msra.mxu0 0.0
        %1289 = vmatprep.subr.mxu0 0.0
        %1290 = vmatpush1.msra.mxu0 0.0
        %1291 = vmatprep.subr.mxu0 0.0
        %1292 = vmatpush1.msra.mxu0 0.0
        %1293 = vmatprep.subr.mxu0 0.0
        %1294 = vmatpush1.msra.mxu0 0.0
        %1295 = vmatprep.subr.mxu0 0.0
        %1296 = vmatpush1.msra.mxu0 0.0
        %1297 = vmatprep.subr.mxu0 0.0
        %1298 = vmatpush1.msra.mxu0 0.0
        %1299 = vmatprep.mubr.f32.mxu0 0.0
        %1300 = vmatmul.mubr.f32.gmra.mrb[0].mxu0 %v1209
        %v1301 = vpop.f32.mrb[0].mxu0
        %v1302 = vadd.f32 0.0, %v1301
        %v1303 = vpop.f32.mrb[0].mxu0
        %1304 = vmatprep.mubr.f32.mxu0 0.0
        %1305 = vmatmul.mubr.f32.gmra.mrb[0].mxu0 %v1212
        %v1306 = vpop.f32.mrb[0].mxu0
        %v1307 = vadd.f32 0.0, %v1306
        %v1308 = vpop.f32.mrb[0].mxu0
        %1309 = vmatprep.mubr.f32.mxu0 0.0
        %1310 = vmatmul.mubr.f32.gmra.mrb[0].mxu0 %v1215
        %v1311 = vpop.f32.mrb[0].mxu0
        %v1312 = vadd.f32 0.0, %v1311
        %v1313 = vpop.f32.mrb[0].mxu0
        %1314 = vmatprep.mubr.f32.mxu0 0.0
        %1315 = vmatmul.mubr.f32.gmra.mrb[0].mxu0 %v1218
        %v1316 = vpop.f32.mrb[0].mxu0
        %v1317 = vadd.f32 0.0, %v1316
        %v1318 = vpop.f32.mrb[0].mxu0
        %1319 = vmatprep.mubr.f32.mxu0 0.0
        %1320 = vmatmul.mubr.f32.gmra.mrb[0].mxu0 %v1221
        %v1321 = vpop.f32.mrb[0].mxu0
        %v1322 = vadd.f32 0.0, %v1321
        %v1323 = vpop.f32.mrb[0].mxu0
        %1324 = vmatprep.mubr.f32.mxu0 0.0
        %1325 = vmatmul.mubr.f32.gmra.mrb[0].mxu0 %v1224
        %v1326 = vpop.f32.mrb[0].mxu0
        %v1327 = vadd.f32 0.0, %v1326
        %v1328 = vpop.f32.mrb[0].mxu0
        %1329 = vmatprep.mubr.f32.mxu0 0.0
        %1330 = vmatmul.mubr.f32.gmra.mrb[0].mxu0 %v1227
        %v1331 = vpop.f32.mrb[0].mxu0
        %v1332 = vadd.f32 0.0, %v1331
        %v1333 = vpop.f32.mrb[0].mxu0
        %1334 = vmatprep.mubr.f32.mxu0 0.0
        %1335 = vmatmul.mubr.f32.gmra.mrb[0].mxu0 %v1230
        %v1336 = vpop.f32.mrb[0].mxu0
        %v1337 = vadd.f32 0.0, %v1336
        %v1338 = vpop.f32.mrb[0].mxu0
        %1339 = vdwg.mxu0
        %v1340 = vadd.f32 %v1198, %v1302
        %v1341 = vadd.f32 %v1199, %v1307
        %v1342 = vadd.f32 %v1200, %v1312
        %v1343 = vadd.f32 %v1201, %v1317
        %v1344 = vadd.f32 %v1202, %v1322
        %v1345 = vadd.f32 %v1203, %v1327
        %v1346 = vadd.f32 %v1204, %v1332
        %v1347 = vadd.f32 %v1205, %v1337
        %1348 = vst.msk [vmem:[#allocation4] sm:$0xff] %vm479, %v1340
        %1349 = vst.msk [vmem:[#allocation4 + $0x8] sm:$0xff] %vm479, %v1341
        %1350 = vst.msk [vmem:[#allocation4 + $0x10] sm:$0xff] %vm479, %v1342
        %1351 = vst.msk [vmem:[#allocation4 + $0x18] sm:$0xff] %vm479, %v1343
        %1352 = vst.msk [vmem:[#allocation4 + $0x20] sm:$0xff] %vm479, %v1344
        %1353 = vst.msk [vmem:[#allocation4 + $0x28] sm:$0xff] %vm479, %v1345
        %1354 = vst.msk [vmem:[#allocation4 + $0x30] sm:$0xff] %vm479, %v1346
        %1355 = vst.msk [vmem:[#allocation4 + $0x38] sm:$0xff] %vm479, %v1347
        %s1356 = scalar_lea.vmem %s446, 2 [#allocation2]
        %v1357 = vld [vmem:[%s1356] ss:$2 sm:$0xff]
        %s1358 = scalar_lea.vmem %s446, 50 [#allocation2]
        %v1359 = vld [vmem:[%s1358] ss:$2 sm:$0xff]
        %s1360 = scalar_lea.vmem %s446, 98 [#allocation2]
        %v1361 = vld [vmem:[%s1360] ss:$2 sm:$0xff]
        %s1362 = scalar_lea.vmem %s446, 146 [#allocation2]
        %v1363 = vld [vmem:[%s1362] ss:$2 sm:$0xff]
        %s1364 = scalar_lea.vmem %s446, 194 [#allocation2]
        %v1365 = vld [vmem:[%s1364] ss:$2 sm:$0xff]
        %s1366 = scalar_lea.vmem %s446, 242 [#allocation2]
        %v1367 = vld [vmem:[%s1366] ss:$2 sm:$0xff]
        %s1368 = scalar_lea.vmem %s446, 290 [#allocation2]
        %v1369 = vld [vmem:[%s1368] ss:$2 sm:$0xff]
        %s1370 = scalar_lea.vmem %s446, 338 [#allocation2]
        %v1371 = vld [vmem:[%s1370] ss:$2 sm:$0xff]
        %v1372 = vld [vmem:[#allocation4] sm:$0xff]
        %v1373 = vld [vmem:[#allocation4 + $0x8] sm:$0xff]
        %v1374 = vld [vmem:[#allocation4 + $0x10] sm:$0xff]
        %v1375 = vld [vmem:[#allocation4 + $0x18] sm:$0xff]
        %v1376 = vld [vmem:[#allocation4 + $0x20] sm:$0xff]
        %v1377 = vld [vmem:[#allocation4 + $0x28] sm:$0xff]
        %v1378 = vld [vmem:[#allocation4 + $0x30] sm:$0xff]
        %v1379 = vld [vmem:[#allocation4 + $0x38] sm:$0xff]
        %s1380 = scalar_lea.vmem %s1, 20
        %v1381 = vld [vmem:[%s1380] sm:$0xf]
        %v1383 = vsel %vm358, %v1357, 0
        %v1386 = vsel %vm358, %v1359, 0
        %v1389 = vsel %vm358, %v1361, 0
        %v1392 = vsel %vm358, %v1363, 0
        %v1395 = vsel %vm358, %v1365, 0
        %v1398 = vsel %vm358, %v1367, 0
        %v1401 = vsel %vm358, %v1369, 0
        %v1404 = vsel %vm358, %v1371, 0
        %v1407 = vsel %vm536, %v1381, 0
        %1409 = vmatprep.subr.mxu0 0.0
        %1410 = vmatpush1.msra.mxu0 %v1407
        %1411 = vmatprep.subr.mxu0 0.0
        %1412 = vmatpush1.msra.mxu0 0.0
        %1413 = vmatprep.subr.mxu0 0.0
        %1414 = vmatpush1.msra.mxu0 0.0
        %1415 = vmatprep.subr.mxu0 0.0
        %1416 = vmatpush1.msra.mxu0 0.0
        %1417 = vmatprep.subr.mxu0 0.0
        %1418 = vmatpush1.msra.mxu0 0.0
        %1419 = vmatprep.subr.mxu0 0.0
        %1420 = vmatpush1.msra.mxu0 0.0
        %1421 = vmatprep.subr.mxu0 0.0
        %1422 = vmatpush1.msra.mxu0 0.0
        %1423 = vmatprep.subr.mxu0 0.0
        %1424 = vmatpush1.msra.mxu0 0.0
        %1425 = vmatprep.subr.mxu0 0.0
        %1426 = vmatpush1.msra.mxu0 0.0
        %1427 = vmatprep.subr.mxu0 0.0
        %1428 = vmatpush1.msra.mxu0 0.0
        %1429 = vmatprep.subr.mxu0 0.0
        %1430 = vmatpush1.msra.mxu0 0.0
        %1431 = vmatprep.subr.mxu0 0.0
        %1432 = vmatpush1.msra.mxu0 0.0
        %1433 = vmatprep.subr.mxu0 0.0
        %1434 = vmatpush1.msra.mxu0 0.0
        %1435 = vmatprep.subr.mxu0 0.0
        %1436 = vmatpush1.msra.mxu0 0.0
        %1437 = vmatprep.subr.mxu0 0.0
        %1438 = vmatpush1.msra.mxu0 0.0
        %1439 = vmatprep.subr.mxu0 0.0
        %1440 = vmatpush1.msra.mxu0 0.0
        %1441 = vmatprep.subr.mxu0 0.0
        %1442 = vmatpush1.msra.mxu0 0.0
        %1443 = vmatprep.subr.mxu0 0.0
        %1444 = vmatpush1.msra.mxu0 0.0
        %1445 = vmatprep.subr.mxu0 0.0
        %1446 = vmatpush1.msra.mxu0 0.0
        %1447 = vmatprep.subr.mxu0 0.0
        %1448 = vmatpush1.msra.mxu0 0.0
        %1449 = vmatprep.subr.mxu0 0.0
        %1450 = vmatpush1.msra.mxu0 0.0
        %1451 = vmatprep.subr.mxu0 0.0
        %1452 = vmatpush1.msra.mxu0 0.0
        %1453 = vmatprep.subr.mxu0 0.0
        %1454 = vmatpush1.msra.mxu0 0.0
        %1455 = vmatprep.subr.mxu0 0.0
        %1456 = vmatpush1.msra.mxu0 0.0
        %1457 = vmatprep.subr.mxu0 0.0
        %1458 = vmatpush1.msra.mxu0 0.0
        %1459 = vmatprep.subr.mxu0 0.0
        %1460 = vmatpush1.msra.mxu0 0.0
        %1461 = vmatprep.subr.mxu0 0.0
        %1462 = vmatpush1.msra.mxu0 0.0
        %1463 = vmatprep.subr.mxu0 0.0
        %1464 = vmatpush1.msra.mxu0 0.0
        %1465 = vmatprep.subr.mxu0 0.0
        %1466 = vmatpush1.msra.mxu0 0.0
        %1467 = vmatprep.subr.mxu0 0.0
        %1468 = vmatpush1.msra.mxu0 0.0
        %1469 = vmatprep.subr.mxu0 0.0
        %1470 = vmatpush1.msra.mxu0 0.0
        %1471 = vmatprep.subr.mxu0 0.0
        %1472 = vmatpush1.msra.mxu0 0.0
        %1473 = vmatprep.mubr.f32.mxu0 0.0
        %1474 = vmatmul.mubr.f32.gmra.mrb[0].mxu0 %v1383
        %v1475 = vpop.f32.mrb[0].mxu0
        %v1476 = vadd.f32 0.0, %v1475
        %v1477 = vpop.f32.mrb[0].mxu0
        %1478 = vmatprep.mubr.f32.mxu0 0.0
        %1479 = vmatmul.mubr.f32.gmra.mrb[0].mxu0 %v1386
        %v1480 = vpop.f32.mrb[0].mxu0
        %v1481 = vadd.f32 0.0, %v1480
        %v1482 = vpop.f32.mrb[0].mxu0
        %1483 = vmatprep.mubr.f32.mxu0 0.0
        %1484 = vmatmul.mubr.f32.gmra.mrb[0].mxu0 %v1389
        %v1485 = vpop.f32.mrb[0].mxu0
        %v1486 = vadd.f32 0.0, %v1485
        %v1487 = vpop.f32.mrb[0].mxu0
        %1488 = vmatprep.mubr.f32.mxu0 0.0
        %1489 = vmatmul.mubr.f32.gmra.mrb[0].mxu0 %v1392
        %v1490 = vpop.f32.mrb[0].mxu0
        %v1491 = vadd.f32 0.0, %v1490
        %v1492 = vpop.f32.mrb[0].mxu0
        %1493 = vmatprep.mubr.f32.mxu0 0.0
        %1494 = vmatmul.mubr.f32.gmra.mrb[0].mxu0 %v1395
        %v1495 = vpop.f32.mrb[0].mxu0
        %v1496 = vadd.f32 0.0, %v1495
        %v1497 = vpop.f32.mrb[0].mxu0
        %1498 = vmatprep.mubr.f32.mxu0 0.0
        %1499 = vmatmul.mubr.f32.gmra.mrb[0].mxu0 %v1398
        %v1500 = vpop.f32.mrb[0].mxu0
        %v1501 = vadd.f32 0.0, %v1500
        %v1502 = vpop.f32.mrb[0].mxu0
        %1503 = vmatprep.mubr.f32.mxu0 0.0
        %1504 = vmatmul.mubr.f32.gmra.mrb[0].mxu0 %v1401
        %v1505 = vpop.f32.mrb[0].mxu0
        %v1506 = vadd.f32 0.0, %v1505
        %v1507 = vpop.f32.mrb[0].mxu0
        %1508 = vmatprep.mubr.f32.mxu0 0.0
        %1509 = vmatmul.mubr.f32.gmra.mrb[0].mxu0 %v1404
        %v1510 = vpop.f32.mrb[0].mxu0
        %v1511 = vadd.f32 0.0, %v1510
        %v1512 = vpop.f32.mrb[0].mxu0
        %1513 = vdwg.mxu0
        %v1514 = vadd.f32 %v1372, %v1476
        %v1515 = vadd.f32 %v1373, %v1481
        %v1516 = vadd.f32 %v1374, %v1486
        %v1517 = vadd.f32 %v1375, %v1491
        %v1518 = vadd.f32 %v1376, %v1496
        %v1519 = vadd.f32 %v1377, %v1501
        %v1520 = vadd.f32 %v1378, %v1506
        %v1521 = vadd.f32 %v1379, %v1511
        %1522 = vst.msk [vmem:[#allocation4] sm:$0xff] %vm479, %v1514
        %1523 = vst.msk [vmem:[#allocation4 + $0x8] sm:$0xff] %vm479, %v1515
        %1524 = vst.msk [vmem:[#allocation4 + $0x10] sm:$0xff] %vm479, %v1516
        %1525 = vst.msk [vmem:[#allocation4 + $0x18] sm:$0xff] %vm479, %v1517
        %1526 = vst.msk [vmem:[#allocation4 + $0x20] sm:$0xff] %vm479, %v1518
        %1527 = vst.msk [vmem:[#allocation4 + $0x28] sm:$0xff] %vm479, %v1519
        %1528 = vst.msk [vmem:[#allocation4 + $0x30] sm:$0xff] %vm479, %v1520
        %1529 = vst.msk [vmem:[#allocation4 + $0x38] sm:$0xff] %vm479, %v1521
        %s1530 = scalar_lea.vmem [#allocation2], 48
        %v1531 = vld [vmem:[%s1530] ss:$2 sm:$0xff]
        %s1532 = scalar_lea.vmem %s1530, 48 [#allocation2]
        %v1533 = vld [vmem:[%s1532] ss:$2 sm:$0xff]
        %s1534 = scalar_lea.vmem %s1530, 96 [#allocation2]
        %v1535 = vld [vmem:[%s1534] ss:$2 sm:$0xff]
        %s1536 = scalar_lea.vmem %s1530, 144 [#allocation2]
        %v1537 = vld [vmem:[%s1536] ss:$2 sm:$0xff]
        %s1538 = scalar_lea.vmem %s1530, 192 [#allocation2]
        %v1539 = vld [vmem:[%s1538] ss:$2 sm:$0xff]
        %s1540 = scalar_lea.vmem %s1530, 240 [#allocation2]
        %v1541 = vld [vmem:[%s1540] ss:$2 sm:$0xff]
        %s1542 = scalar_lea.vmem %s1530, 288 [#allocation2]
        %v1543 = vld [vmem:[%s1542] ss:$2 sm:$0xff]
        %s1544 = scalar_lea.vmem %s1530, 336 [#allocation2]
        %v1545 = vld [vmem:[%s1544] ss:$2 sm:$0xff]
        %v1546 = vld [vmem:[#allocation4] sm:$0xff]
        %v1547 = vld [vmem:[#allocation4 + $0x8] sm:$0xff]
        %v1548 = vld [vmem:[#allocation4 + $0x10] sm:$0xff]
        %v1549 = vld [vmem:[#allocation4 + $0x18] sm:$0xff]
        %v1550 = vld [vmem:[#allocation4 + $0x20] sm:$0xff]
        %v1551 = vld [vmem:[#allocation4 + $0x28] sm:$0xff]
        %v1552 = vld [vmem:[#allocation4 + $0x30] sm:$0xff]
        %v1553 = vld [vmem:[#allocation4 + $0x38] sm:$0xff]
        %s1554 = scalar_lea.vmem %s1, 24
        %v1555 = vld [vmem:[%s1554] sm:$0xf]
        %v1557 = vsel %vm358, %v1531, 0
        %v1560 = vsel %vm358, %v1533, 0
        %v1563 = vsel %vm358, %v1535, 0
        %v1566 = vsel %vm358, %v1537, 0
        %v1569 = vsel %vm358, %v1539, 0
        %v1572 = vsel %vm358, %v1541, 0
        %v1575 = vsel %vm358, %v1543, 0
        %v1578 = vsel %vm358, %v1545, 0
        %v1581 = vsel %vm536, %v1555, 0
        %1583 = vmatprep.subr.mxu0 0.0
        %1584 = vmatpush1.msra.mxu0 %v1581
        %1585 = vmatprep.subr.mxu0 0.0
        %1586 = vmatpush1.msra.mxu0 0.0
        %1587 = vmatprep.subr.mxu0 0.0
        %1588 = vmatpush1.msra.mxu0 0.0
        %1589 = vmatprep.subr.mxu0 0.0
        %1590 = vmatpush1.msra.mxu0 0.0
        %1591 = vmatprep.subr.mxu0 0.0
        %1592 = vmatpush1.msra.mxu0 0.0
        %1593 = vmatprep.subr.mxu0 0.0
        %1594 = vmatpush1.msra.mxu0 0.0
        %1595 = vmatprep.subr.mxu0 0.0
        %1596 = vmatpush1.msra.mxu0 0.0
        %1597 = vmatprep.subr.mxu0 0.0
        %1598 = vmatpush1.msra.mxu0 0.0
        %1599 = vmatprep.subr.mxu0 0.0
        %1600 = vmatpush1.msra.mxu0 0.0
        %1601 = vmatprep.subr.mxu0 0.0
        %1602 = vmatpush1.msra.mxu0 0.0
        %1603 = vmatprep.subr.mxu0 0.0
        %1604 = vmatpush1.msra.mxu0 0.0
        %1605 = vmatprep.subr.mxu0 0.0
        %1606 = vmatpush1.msra.mxu0 0.0
        %1607 = vmatprep.subr.mxu0 0.0
        %1608 = vmatpush1.msra.mxu0 0.0
        %1609 = vmatprep.subr.mxu0 0.0
        %1610 = vmatpush1.msra.mxu0 0.0
        %1611 = vmatprep.subr.mxu0 0.0
        %1612 = vmatpush1.msra.mxu0 0.0
        %1613 = vmatprep.subr.mxu0 0.0
        %1614 = vmatpush1.msra.mxu0 0.0
        %1615 = vmatprep.subr.mxu0 0.0
        %1616 = vmatpush1.msra.mxu0 0.0
        %1617 = vmatprep.subr.mxu0 0.0
        %1618 = vmatpush1.msra.mxu0 0.0
        %1619 = vmatprep.subr.mxu0 0.0
        %1620 = vmatpush1.msra.mxu0 0.0
        %1621 = vmatprep.subr.mxu0 0.0
        %1622 = vmatpush1.msra.mxu0 0.0
        %1623 = vmatprep.subr.mxu0 0.0
        %1624 = vmatpush1.msra.mxu0 0.0
        %1625 = vmatprep.subr.mxu0 0.0
        %1626 = vmatpush1.msra.mxu0 0.0
        %1627 = vmatprep.subr.mxu0 0.0
        %1628 = vmatpush1.msra.mxu0 0.0
        %1629 = vmatprep.subr.mxu0 0.0
        %1630 = vmatpush1.msra.mxu0 0.0
        %1631 = vmatprep.subr.mxu0 0.0
        %1632 = vmatpush1.msra.mxu0 0.0
        %1633 = vmatprep.subr.mxu0 0.0
        %1634 = vmatpush1.msra.mxu0 0.0
        %1635 = vmatprep.subr.mxu0 0.0
        %1636 = vmatpush1.msra.mxu0 0.0
        %1637 = vmatprep.subr.mxu0 0.0
        %1638 = vmatpush1.msra.mxu0 0.0
        %1639 = vmatprep.subr.mxu0 0.0
        %1640 = vmatpush1.msra.mxu0 0.0
        %1641 = vmatprep.subr.mxu0 0.0
        %1642 = vmatpush1.msra.mxu0 0.0
        %1643 = vmatprep.subr.mxu0 0.0
        %1644 = vmatpush1.msra.mxu0 0.0
        %1645 = vmatprep.subr.mxu0 0.0
        %1646 = vmatpush1.msra.mxu0 0.0
        %1647 = vmatprep.mubr.f32.mxu0 0.0
        %1648 = vmatmul.mubr.f32.gmra.mrb[0].mxu0 %v1557
        %v1649 = vpop.f32.mrb[0].mxu0
        %v1650 = vadd.f32 0.0, %v1649
        %v1651 = vpop.f32.mrb[0].mxu0
        %1652 = vmatprep.mubr.f32.mxu0 0.0
        %1653 = vmatmul.mubr.f32.gmra.mrb[0].mxu0 %v1560
        %v1654 = vpop.f32.mrb[0].mxu0
        %v1655 = vadd.f32 0.0, %v1654
        %v1656 = vpop.f32.mrb[0].mxu0
        %1657 = vmatprep.mubr.f32.mxu0 0.0
        %1658 = vmatmul.mubr.f32.gmra.mrb[0].mxu0 %v1563
        %v1659 = vpop.f32.mrb[0].mxu0
        %v1660 = vadd.f32 0.0, %v1659
        %v1661 = vpop.f32.mrb[0].mxu0
        %1662 = vmatprep.mubr.f32.mxu0 0.0
        %1663 = vmatmul.mubr.f32.gmra.mrb[0].mxu0 %v1566
        %v1664 = vpop.f32.mrb[0].mxu0
        %v1665 = vadd.f32 0.0, %v1664
        %v1666 = vpop.f32.mrb[0].mxu0
        %1667 = vmatprep.mubr.f32.mxu0 0.0
        %1668 = vmatmul.mubr.f32.gmra.mrb[0].mxu0 %v1569
        %v1669 = vpop.f32.mrb[0].mxu0
        %v1670 = vadd.f32 0.0, %v1669
        %v1671 = vpop.f32.mrb[0].mxu0
        %1672 = vmatprep.mubr.f32.mxu0 0.0
        %1673 = vmatmul.mubr.f32.gmra.mrb[0].mxu0 %v1572
        %v1674 = vpop.f32.mrb[0].mxu0
        %v1675 = vadd.f32 0.0, %v1674
        %v1676 = vpop.f32.mrb[0].mxu0
        %1677 = vmatprep.mubr.f32.mxu0 0.0
        %1678 = vmatmul.mubr.f32.gmra.mrb[0].mxu0 %v1575
        %v1679 = vpop.f32.mrb[0].mxu0
        %v1680 = vadd.f32 0.0, %v1679
        %v1681 = vpop.f32.mrb[0].mxu0
        %1682 = vmatprep.mubr.f32.mxu0 0.0
        %1683 = vmatmul.mubr.f32.gmra.mrb[0].mxu0 %v1578
        %v1684 = vpop.f32.mrb[0].mxu0
        %v1685 = vadd.f32 0.0, %v1684
        %v1686 = vpop.f32.mrb[0].mxu0
        %1687 = vdwg.mxu0
        %v1688 = vadd.f32 %v1546, %v1650
        %v1689 = vadd.f32 %v1547, %v1655
        %v1690 = vadd.f32 %v1548, %v1660
        %v1691 = vadd.f32 %v1549, %v1665
        %v1692 = vadd.f32 %v1550, %v1670
        %v1693 = vadd.f32 %v1551, %v1675
        %v1694 = vadd.f32 %v1552, %v1680
        %v1695 = vadd.f32 %v1553, %v1685
        %1696 = vst.msk [vmem:[#allocation4] sm:$0xff] %vm479, %v1688
        %1697 = vst.msk [vmem:[#allocation4 + $0x8] sm:$0xff] %vm479, %v1689
        %1698 = vst.msk [vmem:[#allocation4 + $0x10] sm:$0xff] %vm479, %v1690
        %1699 = vst.msk [vmem:[#allocation4 + $0x18] sm:$0xff] %vm479, %v1691
        %1700 = vst.msk [vmem:[#allocation4 + $0x20] sm:$0xff] %vm479, %v1692
        %1701 = vst.msk [vmem:[#allocation4 + $0x28] sm:$0xff] %vm479, %v1693
        %1702 = vst.msk [vmem:[#allocation4 + $0x30] sm:$0xff] %vm479, %v1694
        %1703 = vst.msk [vmem:[#allocation4 + $0x38] sm:$0xff] %vm479, %v1695
        %s1704 = scalar_lea.vmem %s1530, 1 [#allocation2]
        %v1705 = vld [vmem:[%s1704] ss:$2 sm:$0xff]
        %s1706 = scalar_lea.vmem %s1530, 49 [#allocation2]
        %v1707 = vld [vmem:[%s1706] ss:$2 sm:$0xff]
        %s1708 = scalar_lea.vmem %s1530, 97 [#allocation2]
        %v1709 = vld [vmem:[%s1708] ss:$2 sm:$0xff]
        %s1710 = scalar_lea.vmem %s1530, 145 [#allocation2]
        %v1711 = vld [vmem:[%s1710] ss:$2 sm:$0xff]
        %s1712 = scalar_lea.vmem %s1530, 193 [#allocation2]
        %v1713 = vld [vmem:[%s1712] ss:$2 sm:$0xff]
        %s1714 = scalar_lea.vmem %s1530, 241 [#allocation2]
        %v1715 = vld [vmem:[%s1714] ss:$2 sm:$0xff]
        %s1716 = scalar_lea.vmem %s1530, 289 [#allocation2]
        %v1717 = vld [vmem:[%s1716] ss:$2 sm:$0xff]
        %s1718 = scalar_lea.vmem %s1530, 337 [#allocation2]
        %v1719 = vld [vmem:[%s1718] ss:$2 sm:$0xff]
        %v1720 = vld [vmem:[#allocation4] sm:$0xff]
        %v1721 = vld [vmem:[#allocation4 + $0x8] sm:$0xff]
        %v1722 = vld [vmem:[#allocation4 + $0x10] sm:$0xff]
        %v1723 = vld [vmem:[#allocation4 + $0x18] sm:$0xff]
        %v1724 = vld [vmem:[#allocation4 + $0x20] sm:$0xff]
        %v1725 = vld [vmem:[#allocation4 + $0x28] sm:$0xff]
        %v1726 = vld [vmem:[#allocation4 + $0x30] sm:$0xff]
        %v1727 = vld [vmem:[#allocation4 + $0x38] sm:$0xff]
        %s1728 = scalar_lea.vmem %s1, 28
        %v1729 = vld [vmem:[%s1728] sm:$0xf]
        %v1731 = vsel %vm358, %v1705, 0
        %v1734 = vsel %vm358, %v1707, 0
        %v1737 = vsel %vm358, %v1709, 0
        %v1740 = vsel %vm358, %v1711, 0
        %v1743 = vsel %vm358, %v1713, 0
        %v1746 = vsel %vm358, %v1715, 0
        %v1749 = vsel %vm358, %v1717, 0
        %v1752 = vsel %vm358, %v1719, 0
        %v1755 = vsel %vm536, %v1729, 0
        %1757 = vmatprep.subr.mxu0 0.0
        %1758 = vmatpush1.msra.mxu0 %v1755
        %1759 = vmatprep.subr.mxu0 0.0
        %1760 = vmatpush1.msra.mxu0 0.0
        %1761 = vmatprep.subr.mxu0 0.0
        %1762 = vmatpush1.msra.mxu0 0.0
        %1763 = vmatprep.subr.mxu0 0.0
        %1764 = vmatpush1.msra.mxu0 0.0
        %1765 = vmatprep.subr.mxu0 0.0
        %1766 = vmatpush1.msra.mxu0 0.0
        %1767 = vmatprep.subr.mxu0 0.0
        %1768 = vmatpush1.msra.mxu0 0.0
        %1769 = vmatprep.subr.mxu0 0.0
        %1770 = vmatpush1.msra.mxu0 0.0
        %1771 = vmatprep.subr.mxu0 0.0
        %1772 = vmatpush1.msra.mxu0 0.0
        %1773 = vmatprep.subr.mxu0 0.0
        %1774 = vmatpush1.msra.mxu0 0.0
        %1775 = vmatprep.subr.mxu0 0.0
        %1776 = vmatpush1.msra.mxu0 0.0
        %1777 = vmatprep.subr.mxu0 0.0
        %1778 = vmatpush1.msra.mxu0 0.0
        %1779 = vmatprep.subr.mxu0 0.0
        %1780 = vmatpush1.msra.mxu0 0.0
        %1781 = vmatprep.subr.mxu0 0.0
        %1782 = vmatpush1.msra.mxu0 0.0
        %1783 = vmatprep.subr.mxu0 0.0
        %1784 = vmatpush1.msra.mxu0 0.0
        %1785 = vmatprep.subr.mxu0 0.0
        %1786 = vmatpush1.msra.mxu0 0.0
        %1787 = vmatprep.subr.mxu0 0.0
        %1788 = vmatpush1.msra.mxu0 0.0
        %1789 = vmatprep.subr.mxu0 0.0
        %1790 = vmatpush1.msra.mxu0 0.0
        %1791 = vmatprep.subr.mxu0 0.0
        %1792 = vmatpush1.msra.mxu0 0.0
        %1793 = vmatprep.subr.mxu0 0.0
        %1794 = vmatpush1.msra.mxu0 0.0
        %1795 = vmatprep.subr.mxu0 0.0
        %1796 = vmatpush1.msra.mxu0 0.0
        %1797 = vmatprep.subr.mxu0 0.0
        %1798 = vmatpush1.msra.mxu0 0.0
        %1799 = vmatprep.subr.mxu0 0.0
        %1800 = vmatpush1.msra.mxu0 0.0
        %1801 = vmatprep.subr.mxu0 0.0
        %1802 = vmatpush1.msra.mxu0 0.0
        %1803 = vmatprep.subr.mxu0 0.0
        %1804 = vmatpush1.msra.mxu0 0.0
        %1805 = vmatprep.subr.mxu0 0.0
        %1806 = vmatpush1.msra.mxu0 0.0
        %1807 = vmatprep.subr.mxu0 0.0
        %1808 = vmatpush1.msra.mxu0 0.0
        %1809 = vmatprep.subr.mxu0 0.0
        %1810 = vmatpush1.msra.mxu0 0.0
        %1811 = vmatprep.subr.mxu0 0.0
        %1812 = vmatpush1.msra.mxu0 0.0
        %1813 = vmatprep.subr.mxu0 0.0
        %1814 = vmatpush1.msra.mxu0 0.0
        %1815 = vmatprep.subr.mxu0 0.0
        %1816 = vmatpush1.msra.mxu0 0.0
        %1817 = vmatprep.subr.mxu0 0.0
        %1818 = vmatpush1.msra.mxu0 0.0
        %1819 = vmatprep.subr.mxu0 0.0
        %1820 = vmatpush1.msra.mxu0 0.0
        %1821 = vmatprep.mubr.f32.mxu0 0.0
        %1822 = vmatmul.mubr.f32.gmra.mrb[0].mxu0 %v1731
        %v1823 = vpop.f32.mrb[0].mxu0
        %v1824 = vadd.f32 0.0, %v1823
        %v1825 = vpop.f32.mrb[0].mxu0
        %1826 = vmatprep.mubr.f32.mxu0 0.0
        %1827 = vmatmul.mubr.f32.gmra.mrb[0].mxu0 %v1734
        %v1828 = vpop.f32.mrb[0].mxu0
        %v1829 = vadd.f32 0.0, %v1828
        %v1830 = vpop.f32.mrb[0].mxu0
        %1831 = vmatprep.mubr.f32.mxu0 0.0
        %1832 = vmatmul.mubr.f32.gmra.mrb[0].mxu0 %v1737
        %v1833 = vpop.f32.mrb[0].mxu0
        %v1834 = vadd.f32 0.0, %v1833
        %v1835 = vpop.f32.mrb[0].mxu0
        %1836 = vmatprep.mubr.f32.mxu0 0.0
        %1837 = vmatmul.mubr.f32.gmra.mrb[0].mxu0 %v1740
        %v1838 = vpop.f32.mrb[0].mxu0
        %v1839 = vadd.f32 0.0, %v1838
        %v1840 = vpop.f32.mrb[0].mxu0
        %1841 = vmatprep.mubr.f32.mxu0 0.0
        %1842 = vmatmul.mubr.f32.gmra.mrb[0].mxu0 %v1743
        %v1843 = vpop.f32.mrb[0].mxu0
        %v1844 = vadd.f32 0.0, %v1843
        %v1845 = vpop.f32.mrb[0].mxu0
        %1846 = vmatprep.mubr.f32.mxu0 0.0
        %1847 = vmatmul.mubr.f32.gmra.mrb[0].mxu0 %v1746
        %v1848 = vpop.f32.mrb[0].mxu0
        %v1849 = vadd.f32 0.0, %v1848
        %v1850 = vpop.f32.mrb[0].mxu0
        %1851 = vmatprep.mubr.f32.mxu0 0.0
        %1852 = vmatmul.mubr.f32.gmra.mrb[0].mxu0 %v1749
        %v1853 = vpop.f32.mrb[0].mxu0
        %v1854 = vadd.f32 0.0, %v1853
        %v1855 = vpop.f32.mrb[0].mxu0
        %1856 = vmatprep.mubr.f32.mxu0 0.0
        %1857 = vmatmul.mubr.f32.gmra.mrb[0].mxu0 %v1752
        %v1858 = vpop.f32.mrb[0].mxu0
        %v1859 = vadd.f32 0.0, %v1858
        %v1860 = vpop.f32.mrb[0].mxu0
        %1861 = vdwg.mxu0
        %v1862 = vadd.f32 %v1720, %v1824
        %v1863 = vadd.f32 %v1721, %v1829
        %v1864 = vadd.f32 %v1722, %v1834
        %v1865 = vadd.f32 %v1723, %v1839
        %v1866 = vadd.f32 %v1724, %v1844
        %v1867 = vadd.f32 %v1725, %v1849
        %v1868 = vadd.f32 %v1726, %v1854
        %v1869 = vadd.f32 %v1727, %v1859
        %1870 = vst.msk [vmem:[#allocation4] sm:$0xff] %vm479, %v1862
        %1871 = vst.msk [vmem:[#allocation4 + $0x8] sm:$0xff] %vm479, %v1863
        %1872 = vst.msk [vmem:[#allocation4 + $0x10] sm:$0xff] %vm479, %v1864
        %1873 = vst.msk [vmem:[#allocation4 + $0x18] sm:$0xff] %vm479, %v1865
        %1874 = vst.msk [vmem:[#allocation4 + $0x20] sm:$0xff] %vm479, %v1866
        %1875 = vst.msk [vmem:[#allocation4 + $0x28] sm:$0xff] %vm479, %v1867
        %1876 = vst.msk [vmem:[#allocation4 + $0x30] sm:$0xff] %vm479, %v1868
        %1877 = vst.msk [vmem:[#allocation4 + $0x38] sm:$0xff] %vm479, %v1869
        %s1878 = scalar_lea.vmem %s1530, 2 [#allocation2]
        %v1879 = vld [vmem:[%s1878] ss:$2 sm:$0xff]
        %s1880 = scalar_lea.vmem %s1530, 50 [#allocation2]
        %v1881 = vld [vmem:[%s1880] ss:$2 sm:$0xff]
        %s1882 = scalar_lea.vmem %s1530, 98 [#allocation2]
        %v1883 = vld [vmem:[%s1882] ss:$2 sm:$0xff]
        %s1884 = scalar_lea.vmem %s1530, 146 [#allocation2]
        %v1885 = vld [vmem:[%s1884] ss:$2 sm:$0xff]
        %s1886 = scalar_lea.vmem %s1530, 194 [#allocation2]
        %v1887 = vld [vmem:[%s1886] ss:$2 sm:$0xff]
        %s1888 = scalar_lea.vmem %s1530, 242 [#allocation2]
        %v1889 = vld [vmem:[%s1888] ss:$2 sm:$0xff]
        %s1890 = scalar_lea.vmem %s1530, 290 [#allocation2]
        %v1891 = vld [vmem:[%s1890] ss:$2 sm:$0xff]
        %s1892 = scalar_lea.vmem %s1530, 338 [#allocation2]
        %v1893 = vld [vmem:[%s1892] ss:$2 sm:$0xff]
        %v1894 = vld [vmem:[#allocation4] sm:$0xff]
        %v1895 = vld [vmem:[#allocation4 + $0x8] sm:$0xff]
        %v1896 = vld [vmem:[#allocation4 + $0x10] sm:$0xff]
        %v1897 = vld [vmem:[#allocation4 + $0x18] sm:$0xff]
        %v1898 = vld [vmem:[#allocation4 + $0x20] sm:$0xff]
        %v1899 = vld [vmem:[#allocation4 + $0x28] sm:$0xff]
        %v1900 = vld [vmem:[#allocation4 + $0x30] sm:$0xff]
        %v1901 = vld [vmem:[#allocation4 + $0x38] sm:$0xff]
        %s1902 = scalar_lea.vmem %s1, 32
        %v1903 = vld [vmem:[%s1902] sm:$0xf]
        %v1905 = vsel %vm358, %v1879, 0
        %v1908 = vsel %vm358, %v1881, 0
        %v1911 = vsel %vm358, %v1883, 0
        %v1914 = vsel %vm358, %v1885, 0
        %v1917 = vsel %vm358, %v1887, 0
        %v1920 = vsel %vm358, %v1889, 0
        %v1923 = vsel %vm358, %v1891, 0
        %v1926 = vsel %vm358, %v1893, 0
        %v1929 = vsel %vm536, %v1903, 0
        %1931 = vmatprep.subr.mxu0 0.0
        %1932 = vmatpush1.msra.mxu0 %v1929
        %1933 = vmatprep.subr.mxu0 0.0
        %1934 = vmatpush1.msra.mxu0 0.0
        %1935 = vmatprep.subr.mxu0 0.0
        %1936 = vmatpush1.msra.mxu0 0.0
        %1937 = vmatprep.subr.mxu0 0.0
        %1938 = vmatpush1.msra.mxu0 0.0
        %1939 = vmatprep.subr.mxu0 0.0
        %1940 = vmatpush1.msra.mxu0 0.0
        %1941 = vmatprep.subr.mxu0 0.0
        %1942 = vmatpush1.msra.mxu0 0.0
        %1943 = vmatprep.subr.mxu0 0.0
        %1944 = vmatpush1.msra.mxu0 0.0
        %1945 = vmatprep.subr.mxu0 0.0
        %1946 = vmatpush1.msra.mxu0 0.0
        %1947 = vmatprep.subr.mxu0 0.0
        %1948 = vmatpush1.msra.mxu0 0.0
        %1949 = vmatprep.subr.mxu0 0.0
        %1950 = vmatpush1.msra.mxu0 0.0
        %1951 = vmatprep.subr.mxu0 0.0
        %1952 = vmatpush1.msra.mxu0 0.0
        %1953 = vmatprep.subr.mxu0 0.0
        %1954 = vmatpush1.msra.mxu0 0.0
        %1955 = vmatprep.subr.mxu0 0.0
        %1956 = vmatpush1.msra.mxu0 0.0
        %1957 = vmatprep.subr.mxu0 0.0
        %1958 = vmatpush1.msra.mxu0 0.0
        %1959 = vmatprep.subr.mxu0 0.0
        %1960 = vmatpush1.msra.mxu0 0.0
        %1961 = vmatprep.subr.mxu0 0.0
        %1962 = vmatpush1.msra.mxu0 0.0
        %1963 = vmatprep.subr.mxu0 0.0
        %1964 = vmatpush1.msra.mxu0 0.0
        %1965 = vmatprep.subr.mxu0 0.0
        %1966 = vmatpush1.msra.mxu0 0.0
        %1967 = vmatprep.subr.mxu0 0.0
        %1968 = vmatpush1.msra.mxu0 0.0
        %1969 = vmatprep.subr.mxu0 0.0
        %1970 = vmatpush1.msra.mxu0 0.0
        %1971 = vmatprep.subr.mxu0 0.0
        %1972 = vmatpush1.msra.mxu0 0.0
        %1973 = vmatprep.subr.mxu0 0.0
        %1974 = vmatpush1.msra.mxu0 0.0
        %1975 = vmatprep.subr.mxu0 0.0
        %1976 = vmatpush1.msra.mxu0 0.0
        %1977 = vmatprep.subr.mxu0 0.0
        %1978 = vmatpush1.msra.mxu0 0.0
        %1979 = vmatprep.subr.mxu0 0.0
        %1980 = vmatpush1.msra.mxu0 0.0
        %1981 = vmatprep.subr.mxu0 0.0
        %1982 = vmatpush1.msra.mxu0 0.0
        %1983 = vmatprep.subr.mxu0 0.0
        %1984 = vmatpush1.msra.mxu0 0.0
        %1985 = vmatprep.subr.mxu0 0.0
        %1986 = vmatpush1.msra.mxu0 0.0
        %1987 = vmatprep.subr.mxu0 0.0
        %1988 = vmatpush1.msra.mxu0 0.0
        %1989 = vmatprep.subr.mxu0 0.0
        %1990 = vmatpush1.msra.mxu0 0.0
        %1991 = vmatprep.subr.mxu0 0.0
        %1992 = vmatpush1.msra.mxu0 0.0
        %1993 = vmatprep.subr.mxu0 0.0
        %1994 = vmatpush1.msra.mxu0 0.0
        %1995 = vmatprep.mubr.f32.mxu0 0.0
        %1996 = vmatmul.mubr.f32.gmra.mrb[0].mxu0 %v1905
        %v1997 = vpop.f32.mrb[0].mxu0
        %v1998 = vadd.f32 0.0, %v1997
        %v1999 = vpop.f32.mrb[0].mxu0
        %2000 = vmatprep.mubr.f32.mxu0 0.0
        %2001 = vmatmul.mubr.f32.gmra.mrb[0].mxu0 %v1908
        %v2002 = vpop.f32.mrb[0].mxu0
        %v2003 = vadd.f32 0.0, %v2002
        %v2004 = vpop.f32.mrb[0].mxu0
        %2005 = vmatprep.mubr.f32.mxu0 0.0
        %2006 = vmatmul.mubr.f32.gmra.mrb[0].mxu0 %v1911
        %v2007 = vpop.f32.mrb[0].mxu0
        %v2008 = vadd.f32 0.0, %v2007
        %v2009 = vpop.f32.mrb[0].mxu0
        %2010 = vmatprep.mubr.f32.mxu0 0.0
        %2011 = vmatmul.mubr.f32.gmra.mrb[0].mxu0 %v1914
        %v2012 = vpop.f32.mrb[0].mxu0
        %v2013 = vadd.f32 0.0, %v2012
        %v2014 = vpop.f32.mrb[0].mxu0
        %2015 = vmatprep.mubr.f32.mxu0 0.0
        %2016 = vmatmul.mubr.f32.gmra.mrb[0].mxu0 %v1917
        %v2017 = vpop.f32.mrb[0].mxu0
        %v2018 = vadd.f32 0.0, %v2017
        %v2019 = vpop.f32.mrb[0].mxu0
        %2020 = vmatprep.mubr.f32.mxu0 0.0
        %2021 = vmatmul.mubr.f32.gmra.mrb[0].mxu0 %v1920
        %v2022 = vpop.f32.mrb[0].mxu0
        %v2023 = vadd.f32 0.0, %v2022
        %v2024 = vpop.f32.mrb[0].mxu0
        %2025 = vmatprep.mubr.f32.mxu0 0.0
        %2026 = vmatmul.mubr.f32.gmra.mrb[0].mxu0 %v1923
        %v2027 = vpop.f32.mrb[0].mxu0
        %v2028 = vadd.f32 0.0, %v2027
        %v2029 = vpop.f32.mrb[0].mxu0
        %2030 = vmatprep.mubr.f32.mxu0 0.0
        %2031 = vmatmul.mubr.f32.gmra.mrb[0].mxu0 %v1926
        %v2032 = vpop.f32.mrb[0].mxu0
        %v2033 = vadd.f32 0.0, %v2032
        %v2034 = vpop.f32.mrb[0].mxu0
        %2035 = vdwg.mxu0
        %v2036 = vadd.f32 %v1894, %v1998
        %v2037 = vadd.f32 %v1895, %v2003
        %v2038 = vadd.f32 %v1896, %v2008
        %v2039 = vadd.f32 %v1897, %v2013
        %v2040 = vadd.f32 %v1898, %v2018
        %v2041 = vadd.f32 %v1899, %v2023
        %v2042 = vadd.f32 %v1900, %v2028
        %v2043 = vadd.f32 %v1901, %v2033
        %2044 = vst.msk [vmem:[#allocation4] sm:$0xff] %vm479, %v2036
        %2045 = vst.msk [vmem:[#allocation4 + $0x8] sm:$0xff] %vm479, %v2037
        %2046 = vst.msk [vmem:[#allocation4 + $0x10] sm:$0xff] %vm479, %v2038
        %2047 = vst.msk [vmem:[#allocation4 + $0x18] sm:$0xff] %vm479, %v2039
        %2048 = vst.msk [vmem:[#allocation4 + $0x20] sm:$0xff] %vm479, %v2040
        %2049 = vst.msk [vmem:[#allocation4 + $0x28] sm:$0xff] %vm479, %v2041
        %2050 = vst.msk [vmem:[#allocation4 + $0x30] sm:$0xff] %vm479, %v2042
        %2051 = vst.msk [vmem:[#allocation4 + $0x38] sm:$0xff] %vm479, %v2043
        %v2052 = vld [vmem:[#allocation4] sm:$0xff]
        %v2053 = vld [vmem:[#allocation4 + $0x8] sm:$0xff]
        %v2054 = vld [vmem:[#allocation4 + $0x10] sm:$0xff]
        %v2055 = vld [vmem:[#allocation4 + $0x18] sm:$0xff]
        %v2056 = vld [vmem:[#allocation4 + $0x20] sm:$0xff]
        %v2057 = vld [vmem:[#allocation4 + $0x28] sm:$0xff]
        %v2058 = vld [vmem:[#allocation4 + $0x30] sm:$0xff]
        %v2059 = vld [vmem:[#allocation4 + $0x38] sm:$0xff]
        %v2060 = vld [vmem:[%s2] sm:$0x1]
        %v2062 = vlaneseq
        %v2063 = vshrl.u32 %v2062, 7
        %v2064 = vsub.s32 0, %v2063
        %v2065 = vrot.slane %v2060, %v2064
        %v2067 = vmul.f32 %v2052, %v2065
        %v2068 = vmul.f32 %v2053, %v2065
        %v2069 = vmul.f32 %v2054, %v2065
        %v2070 = vmul.f32 %v2055, %v2065
        %v2071 = vmul.f32 %v2056, %v2065
        %v2072 = vmul.f32 %v2057, %v2065
        %v2073 = vmul.f32 %v2058, %v2065
        %v2074 = vmul.f32 %v2059, %v2065
        %v2075 = vld [vmem:[%s3] sm:$0x1]
        %v2077 = vlaneseq
        %v2078 = vshrl.u32 %v2077, 7
        %v2079 = vsub.s32 0, %v2078
        %v2080 = vrot.slane %v2075, %v2079
        %v2082 = vadd.f32 %v2067, %v2080
        %v2083 = vadd.f32 %v2068, %v2080
        %v2084 = vadd.f32 %v2069, %v2080
        %v2085 = vadd.f32 %v2070, %v2080
        %v2086 = vadd.f32 %v2071, %v2080
        %v2087 = vadd.f32 %v2072, %v2080
        %v2088 = vadd.f32 %v2073, %v2080
        %v2089 = vadd.f32 %v2074, %v2080
        %v2090 = vmax.f32 %v2082, 0.0
        %v2091 = vmax.f32 %v2083, 0.0
        %v2092 = vmax.f32 %v2084, 0.0
        %v2093 = vmax.f32 %v2085, 0.0
        %v2094 = vmax.f32 %v2086, 0.0
        %v2095 = vmax.f32 %v2087, 0.0
        %v2096 = vmax.f32 %v2088, 0.0
        %v2097 = vmax.f32 %v2089, 0.0
        %2098 = vst.msk [vmem:[#allocation3] sm:$0xff] %vm479, 0.0
        %vm2099 = vcmask 58368
        %2100 = vst.msk [vmem:[#allocation3 + $0x8] sm:$0x3] %vm2099, 0.0
        %2101 = vst.msk [vmem:[#allocation3 + $0x10] sm:$0xff] %vm479, 0.0
        %2102 = vst.msk [vmem:[#allocation3 + $0x18] sm:$0x3] %vm2099, 0.0
        %2103 = vst.msk [vmem:[#allocation3 + $0x20] sm:$0xff] %vm479, 0.0
        %2104 = vst.msk [vmem:[#allocation3 + $0x28] sm:$0x3] %vm2099, 0.0
        %2105 = vst.msk [vmem:[#allocation3 + $0x30] sm:$0xff] %vm479, 0.0
        %2106 = vst.msk [vmem:[#allocation3 + $0x38] sm:$0x3] %vm2099, 0.0
        %2107 = vst.msk [vmem:[#allocation3 + $0x40] sm:$0xff] %vm479, 0.0
        %2108 = vst.msk [vmem:[#allocation3 + $0x48] sm:$0x3] %vm2099, 0.0
        %2109 = vst.msk [vmem:[#allocation3 + $0x50] sm:$0xff] %vm479, 0.0
        %2110 = vst.msk [vmem:[#allocation3 + $0x58] sm:$0x3] %vm2099, 0.0
        %2111 = vst.msk [vmem:[#allocation3 + $0x60] sm:$0xff] %vm479, 0.0
        %2112 = vst.msk [vmem:[#allocation3 + $0x68] sm:$0x3] %vm2099, 0.0
        %2113 = vst.msk [vmem:[#allocation3 + $0x70] sm:$0xff] %vm479, 0.0
        %2114 = vst.msk [vmem:[#allocation3 + $0x78] sm:$0x3] %vm2099, 0.0
        %2115 = vst.msk [vmem:[#allocation3 + $0x80] sm:$0xff] %vm479, 0.0
        %2116 = vst.msk [vmem:[#allocation3 + $0x88] sm:$0x3] %vm2099, 0.0
        %2117 = vst.msk [vmem:[#allocation3 + $0x90] sm:$0xff] %vm479, 0.0
        %2118 = vst.msk [vmem:[#allocation3 + $0x98] sm:$0x3] %vm2099, 0.0
        %s2119 = scalar_lea.vmem [#allocation3], 16
        %2120 = vst.msk [vmem:[%s2119 + $0x1] sm:$0xff] %vm479, %v2090
        %2121 = vst.msk [vmem:[%s2119 + $0x11] sm:$0xff] %vm479, %v2091
        %2122 = vst.msk [vmem:[%s2119 + $0x21] sm:$0xff] %vm479, %v2092
        %2123 = vst.msk [vmem:[%s2119 + $0x31] sm:$0xff] %vm479, %v2093
        %2124 = vst.msk [vmem:[%s2119 + $0x41] sm:$0xff] %vm479, %v2094
        %2125 = vst.msk [vmem:[%s2119 + $0x51] sm:$0xff] %vm479, %v2095
        %2126 = vst.msk [vmem:[%s2119 + $0x61] sm:$0xff] %vm479, %v2096
        %2127 = vst.msk [vmem:[%s2119 + $0x71] sm:$0xff] %vm479, %v2097
        %v2128 = vld [vmem:[%s1182] ss:$2 sm:$0xff]
        %v2129 = vld [vmem:[%s1184] ss:$2 sm:$0xff]
        %v2130 = vld [vmem:[%s1186] ss:$2 sm:$0xff]
        %v2131 = vld [vmem:[%s1188] ss:$2 sm:$0xff]
        %v2132 = vld [vmem:[%s1190] ss:$2 sm:$0xff]
        %v2133 = vld [vmem:[%s1192] ss:$2 sm:$0xff]
        %v2134 = vld [vmem:[%s1194] ss:$2 sm:$0xff]
        %v2135 = vld [vmem:[%s1196] ss:$2 sm:$0xff]
        %v2136 = vld [vmem:[%s7] sm:$0xf]
        %v2138 = vsel %vm358, %v2128, 0
        %v2141 = vsel %vm358, %v2129, 0
        %v2144 = vsel %vm358, %v2130, 0
        %v2147 = vsel %vm358, %v2131, 0
        %v2150 = vsel %vm358, %v2132, 0
        %v2153 = vsel %vm358, %v2133, 0
        %v2156 = vsel %vm358, %v2134, 0
        %v2159 = vsel %vm358, %v2135, 0
        %v2162 = vsel %vm536, %v2136, 0
        %2164 = vmatprep.subr.mxu0 0.0
        %2165 = vmatpush1.msra.mxu0 %v2162
        %2166 = vmatprep.subr.mxu0 0.0
        %2167 = vmatpush1.msra.mxu0 0.0
        %2168 = vmatprep.subr.mxu0 0.0
        %2169 = vmatpush1.msra.mxu0 0.0
        %2170 = vmatprep.subr.mxu0 0.0
        %2171 = vmatpush1.msra.mxu0 0.0
        %2172 = vmatprep.subr.mxu0 0.0
        %2173 = vmatpush1.msra.mxu0 0.0
        %2174 = vmatprep.subr.mxu0 0.0
        %2175 = vmatpush1.msra.mxu0 0.0
        %2176 = vmatprep.subr.mxu0 0.0
        %2177 = vmatpush1.msra.mxu0 0.0
        %2178 = vmatprep.subr.mxu0 0.0
        %2179 = vmatpush1.msra.mxu0 0.0
        %2180 = vmatprep.subr.mxu0 0.0
        %2181 = vmatpush1.msra.mxu0 0.0
        %2182 = vmatprep.subr.mxu0 0.0
        %2183 = vmatpush1.msra.mxu0 0.0
        %2184 = vmatprep.subr.mxu0 0.0
        %2185 = vmatpush1.msra.mxu0 0.0
        %2186 = vmatprep.subr.mxu0 0.0
        %2187 = vmatpush1.msra.mxu0 0.0
        %2188 = vmatprep.subr.mxu0 0.0
        %2189 = vmatpush1.msra.mxu0 0.0
        %2190 = vmatprep.subr.mxu0 0.0
        %2191 = vmatpush1.msra.mxu0 0.0
        %2192 = vmatprep.subr.mxu0 0.0
        %2193 = vmatpush1.msra.mxu0 0.0
        %2194 = vmatprep.subr.mxu0 0.0
        %2195 = vmatpush1.msra.mxu0 0.0
        %2196 = vmatprep.subr.mxu0 0.0
        %2197 = vmatpush1.msra.mxu0 0.0
        %2198 = vmatprep.subr.mxu0 0.0
        %2199 = vmatpush1.msra.mxu0 0.0
        %2200 = vmatprep.subr.mxu0 0.0
        %2201 = vmatpush1.msra.mxu0 0.0
        %2202 = vmatprep.subr.mxu0 0.0
        %2203 = vmatpush1.msra.mxu0 0.0
        %2204 = vmatprep.subr.mxu0 0.0
        %2205 = vmatpush1.msra.mxu0 0.0
        %2206 = vmatprep.subr.mxu0 0.0
        %2207 = vmatpush1.msra.mxu0 0.0
        %2208 = vmatprep.subr.mxu0 0.0
        %2209 = vmatpush1.msra.mxu0 0.0
        %2210 = vmatprep.subr.mxu0 0.0
        %2211 = vmatpush1.msra.mxu0 0.0
        %2212 = vmatprep.subr.mxu0 0.0
        %2213 = vmatpush1.msra.mxu0 0.0
        %2214 = vmatprep.subr.mxu0 0.0
        %2215 = vmatpush1.msra.mxu0 0.0
        %2216 = vmatprep.subr.mxu0 0.0
        %2217 = vmatpush1.msra.mxu0 0.0
        %2218 = vmatprep.subr.mxu0 0.0
        %2219 = vmatpush1.msra.mxu0 0.0
        %2220 = vmatprep.subr.mxu0 0.0
        %2221 = vmatpush1.msra.mxu0 0.0
        %2222 = vmatprep.subr.mxu0 0.0
        %2223 = vmatpush1.msra.mxu0 0.0
        %2224 = vmatprep.subr.mxu0 0.0
        %2225 = vmatpush1.msra.mxu0 0.0
        %2226 = vmatprep.subr.mxu0 0.0
        %2227 = vmatpush1.msra.mxu0 0.0
        %2228 = vmatprep.mubr.f32.mxu0 0.0
        %2229 = vmatmul.mubr.f32.gmra.mrb[0].mxu0 %v2138
        %v2230 = vpop.f32.mrb[0].mxu0
        %v2231 = vadd.f32 0.0, %v2230
        %v2232 = vpop.f32.mrb[0].mxu0
        %2233 = vmatprep.mubr.f32.mxu0 0.0
        %2234 = vmatmul.mubr.f32.gmra.mrb[0].mxu0 %v2141
        %v2235 = vpop.f32.mrb[0].mxu0
        %v2236 = vadd.f32 0.0, %v2235
        %v2237 = vpop.f32.mrb[0].mxu0
        %2238 = vmatprep.mubr.f32.mxu0 0.0
        %2239 = vmatmul.mubr.f32.gmra.mrb[0].mxu0 %v2144
        %v2240 = vpop.f32.mrb[0].mxu0
        %v2241 = vadd.f32 0.0, %v2240
        %v2242 = vpop.f32.mrb[0].mxu0
        %2243 = vmatprep.mubr.f32.mxu0 0.0
        %2244 = vmatmul.mubr.f32.gmra.mrb[0].mxu0 %v2147
        %v2245 = vpop.f32.mrb[0].mxu0
        %v2246 = vadd.f32 0.0, %v2245
        %v2247 = vpop.f32.mrb[0].mxu0
        %2248 = vmatprep.mubr.f32.mxu0 0.0
        %2249 = vmatmul.mubr.f32.gmra.mrb[0].mxu0 %v2150
        %v2250 = vpop.f32.mrb[0].mxu0
        %v2251 = vadd.f32 0.0, %v2250
        %v2252 = vpop.f32.mrb[0].mxu0
        %2253 = vmatprep.mubr.f32.mxu0 0.0
        %2254 = vmatmul.mubr.f32.gmra.mrb[0].mxu0 %v2153
        %v2255 = vpop.f32.mrb[0].mxu0
        %v2256 = vadd.f32 0.0, %v2255
        %v2257 = vpop.f32.mrb[0].mxu0
        %2258 = vmatprep.mubr.f32.mxu0 0.0
        %2259 = vmatmul.mubr.f32.gmra.mrb[0].mxu0 %v2156
        %v2260 = vpop.f32.mrb[0].mxu0
        %v2261 = vadd.f32 0.0, %v2260
        %v2262 = vpop.f32.mrb[0].mxu0
        %2263 = vmatprep.mubr.f32.mxu0 0.0
        %2264 = vmatmul.mubr.f32.gmra.mrb[0].mxu0 %v2159
        %v2265 = vpop.f32.mrb[0].mxu0
        %v2266 = vadd.f32 0.0, %v2265
        %v2267 = vpop.f32.mrb[0].mxu0
        %2268 = vdwg.mxu0
        %v2269 = vld [vmem:[%s8] sm:$0x1]
        %v2271 = vlaneseq
        %v2272 = vshrl.u32 %v2271, 7
        %v2273 = vsub.s32 0, %v2272
        %v2274 = vrot.slane %v2269, %v2273
        %v2276 = vmul.f32 %v2231, %v2274
        %v2277 = vmul.f32 %v2236, %v2274
        %v2278 = vmul.f32 %v2241, %v2274
        %v2279 = vmul.f32 %v2246, %v2274
        %v2280 = vmul.f32 %v2251, %v2274
        %v2281 = vmul.f32 %v2256, %v2274
        %v2282 = vmul.f32 %v2261, %v2274
        %v2283 = vmul.f32 %v2266, %v2274
        %v2284 = vld [vmem:[%s9] sm:$0x1]
        %v2286 = vlaneseq
        %v2287 = vshrl.u32 %v2286, 7
        %v2288 = vsub.s32 0, %v2287
        %v2289 = vrot.slane %v2284, %v2288
        %v2291 = vadd.f32 %v2276, %v2289
        %v2292 = vadd.f32 %v2277, %v2289
        %v2293 = vadd.f32 %v2278, %v2289
        %v2294 = vadd.f32 %v2279, %v2289
        %v2295 = vadd.f32 %v2280, %v2289
        %v2296 = vadd.f32 %v2281, %v2289
        %v2297 = vadd.f32 %v2282, %v2289
        %v2298 = vadd.f32 %v2283, %v2289
        %2299 = vst.msk [vmem:[#allocation4] sm:$0xff] %vm479, 0.0
        %2300 = vst.msk [vmem:[#allocation4 + $0x8] sm:$0xff] %vm479, 0.0
        %2301 = vst.msk [vmem:[#allocation4 + $0x10] sm:$0xff] %vm479, 0.0
        %2302 = vst.msk [vmem:[#allocation4 + $0x18] sm:$0xff] %vm479, 0.0
        %2303 = vst.msk [vmem:[#allocation4 + $0x20] sm:$0xff] %vm479, 0.0
        %2304 = vst.msk [vmem:[#allocation4 + $0x28] sm:$0xff] %vm479, 0.0
        %2305 = vst.msk [vmem:[#allocation4 + $0x30] sm:$0xff] %vm479, 0.0
        %2306 = vst.msk [vmem:[#allocation4 + $0x38] sm:$0xff] %vm479, 0.0
        %v2307 = vld [vmem:[#allocation3] sm:$0xff]
        %v2308 = vld [vmem:[#allocation3 + $0x10] sm:$0xff]
        %v2309 = vld [vmem:[#allocation3 + $0x20] sm:$0xff]
        %v2310 = vld [vmem:[#allocation3 + $0x30] sm:$0xff]
        %v2311 = vld [vmem:[#allocation3 + $0x40] sm:$0xff]
        %v2312 = vld [vmem:[#allocation3 + $0x50] sm:$0xff]
        %v2313 = vld [vmem:[#allocation3 + $0x60] sm:$0xff]
        %v2314 = vld [vmem:[#allocation3 + $0x70] sm:$0xff]
        %v2315 = vld [vmem:[#allocation4] sm:$0xff]
        %v2316 = vld [vmem:[#allocation4 + $0x8] sm:$0xff]
        %v2317 = vld [vmem:[#allocation4 + $0x10] sm:$0xff]
        %v2318 = vld [vmem:[#allocation4 + $0x18] sm:$0xff]
        %v2319 = vld [vmem:[#allocation4 + $0x20] sm:$0xff]
        %v2320 = vld [vmem:[#allocation4 + $0x28] sm:$0xff]
        %v2321 = vld [vmem:[#allocation4 + $0x30] sm:$0xff]
        %v2322 = vld [vmem:[#allocation4 + $0x38] sm:$0xff]
        %v2323 = vld [vmem:[%s4] sm:$0xff]
        %v2325 = vsel %vm479, %v2307, 0
        %v2328 = vsel %vm479, %v2308, 0
        %v2331 = vsel %vm479, %v2309, 0
        %v2334 = vsel %vm479, %v2310, 0
        %v2337 = vsel %vm479, %v2311, 0
        %v2340 = vsel %vm479, %v2312, 0
        %v2343 = vsel %vm479, %v2313, 0
        %v2346 = vsel %vm479, %v2314, 0
        %2348 = vmatprep.subr.mxu0 0.0
        %2349 = vmatpush1.msra.mxu0 %v2323
        %2350 = vmatprep.subr.mxu0 0.0
        %2351 = vmatpush1.msra.mxu0 0.0
        %2352 = vmatprep.subr.mxu0 0.0
        %2353 = vmatpush1.msra.mxu0 0.0
        %2354 = vmatprep.subr.mxu0 0.0
        %2355 = vmatpush1.msra.mxu0 0.0
        %2356 = vmatprep.subr.mxu0 0.0
        %2357 = vmatpush1.msra.mxu0 0.0
        %2358 = vmatprep.subr.mxu0 0.0
        %2359 = vmatpush1.msra.mxu0 0.0
        %2360 = vmatprep.subr.mxu0 0.0
        %2361 = vmatpush1.msra.mxu0 0.0
        %2362 = vmatprep.subr.mxu0 0.0
        %2363 = vmatpush1.msra.mxu0 0.0
        %2364 = vmatprep.subr.mxu0 0.0
        %2365 = vmatpush1.msra.mxu0 0.0
        %2366 = vmatprep.subr.mxu0 0.0
        %2367 = vmatpush1.msra.mxu0 0.0
        %2368 = vmatprep.subr.mxu0 0.0
        %2369 = vmatpush1.msra.mxu0 0.0
        %2370 = vmatprep.subr.mxu0 0.0
        %2371 = vmatpush1.msra.mxu0 0.0
        %2372 = vmatprep.subr.mxu0 0.0
        %2373 = vmatpush1.msra.mxu0 0.0
        %2374 = vmatprep.subr.mxu0 0.0
        %2375 = vmatpush1.msra.mxu0 0.0
        %2376 = vmatprep.subr.mxu0 0.0
        %2377 = vmatpush1.msra.mxu0 0.0
        %2378 = vmatprep.subr.mxu0 0.0
        %2379 = vmatpush1.msra.mxu0 0.0
        %2380 = vmatprep.subr.mxu0 0.0
        %2381 = vmatpush1.msra.mxu0 0.0
        %2382 = vmatprep.subr.mxu0 0.0
        %2383 = vmatpush1.msra.mxu0 0.0
        %2384 = vmatprep.subr.mxu0 0.0
        %2385 = vmatpush1.msra.mxu0 0.0
        %2386 = vmatprep.subr.mxu0 0.0
        %2387 = vmatpush1.msra.mxu0 0.0
        %2388 = vmatprep.subr.mxu0 0.0
        %2389 = vmatpush1.msra.mxu0 0.0
        %2390 = vmatprep.subr.mxu0 0.0
        %2391 = vmatpush1.msra.mxu0 0.0
        %2392 = vmatprep.subr.mxu0 0.0
        %2393 = vmatpush1.msra.mxu0 0.0
        %2394 = vmatprep.subr.mxu0 0.0
        %2395 = vmatpush1.msra.mxu0 0.0
        %2396 = vmatprep.subr.mxu0 0.0
        %2397 = vmatpush1.msra.mxu0 0.0
        %2398 = vmatprep.subr.mxu0 0.0
        %2399 = vmatpush1.msra.mxu0 0.0
        %2400 = vmatprep.subr.mxu0 0.0
        %2401 = vmatpush1.msra.mxu0 0.0
        %2402 = vmatprep.subr.mxu0 0.0
        %2403 = vmatpush1.msra.mxu0 0.0
        %2404 = vmatprep.subr.mxu0 0.0
        %2405 = vmatpush1.msra.mxu0 0.0
        %2406 = vmatprep.subr.mxu0 0.0
        %2407 = vmatpush1.msra.mxu0 0.0
        %2408 = vmatprep.subr.mxu0 0.0
        %2409 = vmatpush1.msra.mxu0 0.0
        %2410 = vmatprep.subr.mxu0 0.0
        %2411 = vmatpush1.msra.mxu0 0.0
        %2412 = vmatprep.mubr.f32.mxu0 0.0
        %2413 = vmatmul.mubr.f32.gmra.mrb[0].mxu0 %v2325
        %v2414 = vpop.f32.mrb[0].mxu0
        %v2415 = vadd.f32 0.0, %v2414
        %v2416 = vpop.f32.mrb[0].mxu0
        %2417 = vmatprep.mubr.f32.mxu0 0.0
        %2418 = vmatmul.mubr.f32.gmra.mrb[0].mxu0 %v2328
        %v2419 = vpop.f32.mrb[0].mxu0
        %v2420 = vadd.f32 0.0, %v2419
        %v2421 = vpop.f32.mrb[0].mxu0
        %2422 = vmatprep.mubr.f32.mxu0 0.0
        %2423 = vmatmul.mubr.f32.gmra.mrb[0].mxu0 %v2331
        %v2424 = vpop.f32.mrb[0].mxu0
        %v2425 = vadd.f32 0.0, %v2424
        %v2426 = vpop.f32.mrb[0].mxu0
        %2427 = vmatprep.mubr.f32.mxu0 0.0
        %2428 = vmatmul.mubr.f32.gmra.mrb[0].mxu0 %v2334
        %v2429 = vpop.f32.mrb[0].mxu0
        %v2430 = vadd.f32 0.0, %v2429
        %v2431 = vpop.f32.mrb[0].mxu0
        %2432 = vmatprep.mubr.f32.mxu0 0.0
        %2433 = vmatmul.mubr.f32.gmra.mrb[0].mxu0 %v2337
        %v2434 = vpop.f32.mrb[0].mxu0
        %v2435 = vadd.f32 0.0, %v2434
        %v2436 = vpop.f32.mrb[0].mxu0
        %2437 = vmatprep.mubr.f32.mxu0 0.0
        %2438 = vmatmul.mubr.f32.gmra.mrb[0].mxu0 %v2340
        %v2439 = vpop.f32.mrb[0].mxu0
        %v2440 = vadd.f32 0.0, %v2439
        %v2441 = vpop.f32.mrb[0].mxu0
        %2442 = vmatprep.mubr.f32.mxu0 0.0
        %2443 = vmatmul.mubr.f32.gmra.mrb[0].mxu0 %v2343
        %v2444 = vpop.f32.mrb[0].mxu0
        %v2445 = vadd.f32 0.0, %v2444
        %v2446 = vpop.f32.mrb[0].mxu0
        %2447 = vmatprep.mubr.f32.mxu0 0.0
        %2448 = vmatmul.mubr.f32.gmra.mrb[0].mxu0 %v2346
        %v2449 = vpop.f32.mrb[0].mxu0
        %v2450 = vadd.f32 0.0, %v2449
        %v2451 = vpop.f32.mrb[0].mxu0
        %2452 = vdwg.mxu0
        %v2453 = vadd.f32 %v2315, %v2415
        %v2454 = vadd.f32 %v2316, %v2420
        %v2455 = vadd.f32 %v2317, %v2425
        %v2456 = vadd.f32 %v2318, %v2430
        %v2457 = vadd.f32 %v2319, %v2435
        %v2458 = vadd.f32 %v2320, %v2440
        %v2459 = vadd.f32 %v2321, %v2445
        %v2460 = vadd.f32 %v2322, %v2450
        %2461 = vst.msk [vmem:[#allocation4] sm:$0xff] %vm479, %v2453
        %2462 = vst.msk [vmem:[#allocation4 + $0x8] sm:$0xff] %vm479, %v2454
        %2463 = vst.msk [vmem:[#allocation4 + $0x10] sm:$0xff] %vm479, %v2455
        %2464 = vst.msk [vmem:[#allocation4 + $0x18] sm:$0xff] %vm479, %v2456
        %2465 = vst.msk [vmem:[#allocation4 + $0x20] sm:$0xff] %vm479, %v2457
        %2466 = vst.msk [vmem:[#allocation4 + $0x28] sm:$0xff] %vm479, %v2458
        %2467 = vst.msk [vmem:[#allocation4 + $0x30] sm:$0xff] %vm479, %v2459
        %2468 = vst.msk [vmem:[#allocation4 + $0x38] sm:$0xff] %vm479, %v2460
        %v2469 = vld [vmem:[#allocation3 + $0x1] sm:$0xff]
        %v2470 = vld [vmem:[#allocation3 + $0x11] sm:$0xff]
        %v2471 = vld [vmem:[#allocation3 + $0x21] sm:$0xff]
        %v2472 = vld [vmem:[#allocation3 + $0x31] sm:$0xff]
        %v2473 = vld [vmem:[#allocation3 + $0x41] sm:$0xff]
        %v2474 = vld [vmem:[#allocation3 + $0x51] sm:$0xff]
        %v2475 = vld [vmem:[#allocation3 + $0x61] sm:$0xff]
        %v2476 = vld [vmem:[#allocation3 + $0x71] sm:$0xff]
        %v2477 = vld [vmem:[#allocation4] sm:$0xff]
        %v2478 = vld [vmem:[#allocation4 + $0x8] sm:$0xff]
        %v2479 = vld [vmem:[#allocation4 + $0x10] sm:$0xff]
        %v2480 = vld [vmem:[#allocation4 + $0x18] sm:$0xff]
        %v2481 = vld [vmem:[#allocation4 + $0x20] sm:$0xff]
        %v2482 = vld [vmem:[#allocation4 + $0x28] sm:$0xff]
        %v2483 = vld [vmem:[#allocation4 + $0x30] sm:$0xff]
        %v2484 = vld [vmem:[#allocation4 + $0x38] sm:$0xff]
        %s2485 = scalar_lea.vmem %s4, 8
        %v2486 = vld [vmem:[%s2485] sm:$0xff]
        %v2488 = vsel %vm479, %v2469, 0
        %v2491 = vsel %vm479, %v2470, 0
        %v2494 = vsel %vm479, %v2471, 0
        %v2497 = vsel %vm479, %v2472, 0
        %v2500 = vsel %vm479, %v2473, 0
        %v2503 = vsel %vm479, %v2474, 0
        %v2506 = vsel %vm479, %v2475, 0
        %v2509 = vsel %vm479, %v2476, 0
        %2511 = vmatprep.subr.mxu0 0.0
        %2512 = vmatpush1.msra.mxu0 %v2486
        %2513 = vmatprep.subr.mxu0 0.0
        %2514 = vmatpush1.msra.mxu0 0.0
        %2515 = vmatprep.subr.mxu0 0.0
        %2516 = vmatpush1.msra.mxu0 0.0
        %2517 = vmatprep.subr.mxu0 0.0
        %2518 = vmatpush1.msra.mxu0 0.0
        %2519 = vmatprep.subr.mxu0 0.0
        %2520 = vmatpush1.msra.mxu0 0.0
        %2521 = vmatprep.subr.mxu0 0.0
        %2522 = vmatpush1.msra.mxu0 0.0
        %2523 = vmatprep.subr.mxu0 0.0
        %2524 = vmatpush1.msra.mxu0 0.0
        %2525 = vmatprep.subr.mxu0 0.0
        %2526 = vmatpush1.msra.mxu0 0.0
        %2527 = vmatprep.subr.mxu0 0.0
        %2528 = vmatpush1.msra.mxu0 0.0
        %2529 = vmatprep.subr.mxu0 0.0
        %2530 = vmatpush1.msra.mxu0 0.0
        %2531 = vmatprep.subr.mxu0 0.0
        %2532 = vmatpush1.msra.mxu0 0.0
        %2533 = vmatprep.subr.mxu0 0.0
        %2534 = vmatpush1.msra.mxu0 0.0
        %2535 = vmatprep.subr.mxu0 0.0
        %2536 = vmatpush1.msra.mxu0 0.0
        %2537 = vmatprep.subr.mxu0 0.0
        %2538 = vmatpush1.msra.mxu0 0.0
        %2539 = vmatprep.subr.mxu0 0.0
        %2540 = vmatpush1.msra.mxu0 0.0
        %2541 = vmatprep.subr.mxu0 0.0
        %2542 = vmatpush1.msra.mxu0 0.0
        %2543 = vmatprep.subr.mxu0 0.0
        %2544 = vmatpush1.msra.mxu0 0.0
        %2545 = vmatprep.subr.mxu0 0.0
        %2546 = vmatpush1.msra.mxu0 0.0
        %2547 = vmatprep.subr.mxu0 0.0
        %2548 = vmatpush1.msra.mxu0 0.0
        %2549 = vmatprep.subr.mxu0 0.0
        %2550 = vmatpush1.msra.mxu0 0.0
        %2551 = vmatprep.subr.mxu0 0.0
        %2552 = vmatpush1.msra.mxu0 0.0
        %2553 = vmatprep.subr.mxu0 0.0
        %2554 = vmatpush1.msra.mxu0 0.0
        %2555 = vmatprep.subr.mxu0 0.0
        %2556 = vmatpush1.msra.mxu0 0.0
        %2557 = vmatprep.subr.mxu0 0.0
        %2558 = vmatpush1.msra.mxu0 0.0
        %2559 = vmatprep.subr.mxu0 0.0
        %2560 = vmatpush1.msra.mxu0 0.0
        %2561 = vmatprep.subr.mxu0 0.0
        %2562 = vmatpush1.msra.mxu0 0.0
        %2563 = vmatprep.subr.mxu0 0.0
        %2564 = vmatpush1.msra.mxu0 0.0
        %2565 = vmatprep.subr.mxu0 0.0
        %2566 = vmatpush1.msra.mxu0 0.0
        %2567 = vmatprep.subr.mxu0 0.0
        %2568 = vmatpush1.msra.mxu0 0.0
        %2569 = vmatprep.subr.mxu0 0.0
        %2570 = vmatpush1.msra.mxu0 0.0
        %2571 = vmatprep.subr.mxu0 0.0
        %2572 = vmatpush1.msra.mxu0 0.0
        %2573 = vmatprep.subr.mxu0 0.0
        %2574 = vmatpush1.msra.mxu0 0.0
        %2575 = vmatprep.mubr.f32.mxu0 0.0
        %2576 = vmatmul.mubr.f32.gmra.mrb[0].mxu0 %v2488
        %v2577 = vpop.f32.mrb[0].mxu0
        %v2578 = vadd.f32 0.0, %v2577
        %v2579 = vpop.f32.mrb[0].mxu0
        %2580 = vmatprep.mubr.f32.mxu0 0.0
        %2581 = vmatmul.mubr.f32.gmra.mrb[0].mxu0 %v2491
        %v2582 = vpop.f32.mrb[0].mxu0
        %v2583 = vadd.f32 0.0, %v2582
        %v2584 = vpop.f32.mrb[0].mxu0
        %2585 = vmatprep.mubr.f32.mxu0 0.0
        %2586 = vmatmul.mubr.f32.gmra.mrb[0].mxu0 %v2494
        %v2587 = vpop.f32.mrb[0].mxu0
        %v2588 = vadd.f32 0.0, %v2587
        %v2589 = vpop.f32.mrb[0].mxu0
        %2590 = vmatprep.mubr.f32.mxu0 0.0
        %2591 = vmatmul.mubr.f32.gmra.mrb[0].mxu0 %v2497
        %v2592 = vpop.f32.mrb[0].mxu0
        %v2593 = vadd.f32 0.0, %v2592
        %v2594 = vpop.f32.mrb[0].mxu0
        %2595 = vmatprep.mubr.f32.mxu0 0.0
        %2596 = vmatmul.mubr.f32.gmra.mrb[0].mxu0 %v2500
        %v2597 = vpop.f32.mrb[0].mxu0
        %v2598 = vadd.f32 0.0, %v2597
        %v2599 = vpop.f32.mrb[0].mxu0
        %2600 = vmatprep.mubr.f32.mxu0 0.0
        %2601 = vmatmul.mubr.f32.gmra.mrb[0].mxu0 %v2503
        %v2602 = vpop.f32.mrb[0].mxu0
        %v2603 = vadd.f32 0.0, %v2602
        %v2604 = vpop.f32.mrb[0].mxu0
        %2605 = vmatprep.mubr.f32.mxu0 0.0
        %2606 = vmatmul.mubr.f32.gmra.mrb[0].mxu0 %v2506
        %v2607 = vpop.f32.mrb[0].mxu0
        %v2608 = vadd.f32 0.0, %v2607
        %v2609 = vpop.f32.mrb[0].mxu0
        %2610 = vmatprep.mubr.f32.mxu0 0.0
        %2611 = vmatmul.mubr.f32.gmra.mrb[0].mxu0 %v2509
        %v2612 = vpop.f32.mrb[0].mxu0
        %v2613 = vadd.f32 0.0, %v2612
        %v2614 = vpop.f32.mrb[0].mxu0
        %2615 = vdwg.mxu0
        %v2616 = vadd.f32 %v2477, %v2578
        %v2617 = vadd.f32 %v2478, %v2583
        %v2618 = vadd.f32 %v2479, %v2588
        %v2619 = vadd.f32 %v2480, %v2593
        %v2620 = vadd.f32 %v2481, %v2598
        %v2621 = vadd.f32 %v2482, %v2603
        %v2622 = vadd.f32 %v2483, %v2608
        %v2623 = vadd.f32 %v2484, %v2613
        %2624 = vst.msk [vmem:[#allocation4] sm:$0xff] %vm479, %v2616
        %2625 = vst.msk [vmem:[#allocation4 + $0x8] sm:$0xff] %vm479, %v2617
        %2626 = vst.msk [vmem:[#allocation4 + $0x10] sm:$0xff] %vm479, %v2618
        %2627 = vst.msk [vmem:[#allocation4 + $0x18] sm:$0xff] %vm479, %v2619
        %2628 = vst.msk [vmem:[#allocation4 + $0x20] sm:$0xff] %vm479, %v2620
        %2629 = vst.msk [vmem:[#allocation4 + $0x28] sm:$0xff] %vm479, %v2621
        %2630 = vst.msk [vmem:[#allocation4 + $0x30] sm:$0xff] %vm479, %v2622
        %2631 = vst.msk [vmem:[#allocation4 + $0x38] sm:$0xff] %vm479, %v2623
        %v2632 = vld [vmem:[#allocation3 + $0x2] sm:$0xff]
        %v2633 = vld [vmem:[#allocation3 + $0x12] sm:$0xff]
        %v2634 = vld [vmem:[#allocation3 + $0x22] sm:$0xff]
        %v2635 = vld [vmem:[#allocation3 + $0x32] sm:$0xff]
        %v2636 = vld [vmem:[#allocation3 + $0x42] sm:$0xff]
        %v2637 = vld [vmem:[#allocation3 + $0x52] sm:$0xff]
        %v2638 = vld [vmem:[#allocation3 + $0x62] sm:$0xff]
        %v2639 = vld [vmem:[#allocation3 + $0x72] sm:$0xff]
        %v2640 = vld [vmem:[#allocation4] sm:$0xff]
        %v2641 = vld [vmem:[#allocation4 + $0x8] sm:$0xff]
        %v2642 = vld [vmem:[#allocation4 + $0x10] sm:$0xff]
        %v2643 = vld [vmem:[#allocation4 + $0x18] sm:$0xff]
        %v2644 = vld [vmem:[#allocation4 + $0x20] sm:$0xff]
        %v2645 = vld [vmem:[#allocation4 + $0x28] sm:$0xff]
        %v2646 = vld [vmem:[#allocation4 + $0x30] sm:$0xff]
        %v2647 = vld [vmem:[#allocation4 + $0x38] sm:$0xff]
        %s2648 = scalar_lea.vmem %s4, 16
        %v2649 = vld [vmem:[%s2648] sm:$0xff]
        %v2651 = vsel %vm479, %v2632, 0
        %v2654 = vsel %vm479, %v2633, 0
        %v2657 = vsel %vm479, %v2634, 0
        %v2660 = vsel %vm479, %v2635, 0
        %v2663 = vsel %vm479, %v2636, 0
        %v2666 = vsel %vm479, %v2637, 0
        %v2669 = vsel %vm479, %v2638, 0
        %v2672 = vsel %vm479, %v2639, 0
        %2674 = vmatprep.subr.mxu0 0.0
        %2675 = vmatpush1.msra.mxu0 %v2649
        %2676 = vmatprep.subr.mxu0 0.0
        %2677 = vmatpush1.msra.mxu0 0.0
        %2678 = vmatprep.subr.mxu0 0.0
        %2679 = vmatpush1.msra.mxu0 0.0
        %2680 = vmatprep.subr.mxu0 0.0
        %2681 = vmatpush1.msra.mxu0 0.0
        %2682 = vmatprep.subr.mxu0 0.0
        %2683 = vmatpush1.msra.mxu0 0.0
        %2684 = vmatprep.subr.mxu0 0.0
        %2685 = vmatpush1.msra.mxu0 0.0
        %2686 = vmatprep.subr.mxu0 0.0
        %2687 = vmatpush1.msra.mxu0 0.0
        %2688 = vmatprep.subr.mxu0 0.0
        %2689 = vmatpush1.msra.mxu0 0.0
        %2690 = vmatprep.subr.mxu0 0.0
        %2691 = vmatpush1.msra.mxu0 0.0
        %2692 = vmatprep.subr.mxu0 0.0
        %2693 = vmatpush1.msra.mxu0 0.0
        %2694 = vmatprep.subr.mxu0 0.0
        %2695 = vmatpush1.msra.mxu0 0.0
        %2696 = vmatprep.subr.mxu0 0.0
        %2697 = vmatpush1.msra.mxu0 0.0
        %2698 = vmatprep.subr.mxu0 0.0
        %2699 = vmatpush1.msra.mxu0 0.0
        %2700 = vmatprep.subr.mxu0 0.0
        %2701 = vmatpush1.msra.mxu0 0.0
        %2702 = vmatprep.subr.mxu0 0.0
        %2703 = vmatpush1.msra.mxu0 0.0
        %2704 = vmatprep.subr.mxu0 0.0
        %2705 = vmatpush1.msra.mxu0 0.0
        %2706 = vmatprep.subr.mxu0 0.0
        %2707 = vmatpush1.msra.mxu0 0.0
        %2708 = vmatprep.subr.mxu0 0.0
        %2709 = vmatpush1.msra.mxu0 0.0
        %2710 = vmatprep.subr.mxu0 0.0
        %2711 = vmatpush1.msra.mxu0 0.0
        %2712 = vmatprep.subr.mxu0 0.0
        %2713 = vmatpush1.msra.mxu0 0.0
        %2714 = vmatprep.subr.mxu0 0.0
        %2715 = vmatpush1.msra.mxu0 0.0
        %2716 = vmatprep.subr.mxu0 0.0
        %2717 = vmatpush1.msra.mxu0 0.0
        %2718 = vmatprep.subr.mxu0 0.0
        %2719 = vmatpush1.msra.mxu0 0.0
        %2720 = vmatprep.subr.mxu0 0.0
        %2721 = vmatpush1.msra.mxu0 0.0
        %2722 = vmatprep.subr.mxu0 0.0
        %2723 = vmatpush1.msra.mxu0 0.0
        %2724 = vmatprep.subr.mxu0 0.0
        %2725 = vmatpush1.msra.mxu0 0.0
        %2726 = vmatprep.subr.mxu0 0.0
        %2727 = vmatpush1.msra.mxu0 0.0
        %2728 = vmatprep.subr.mxu0 0.0
        %2729 = vmatpush1.msra.mxu0 0.0
        %2730 = vmatprep.subr.mxu0 0.0
        %2731 = vmatpush1.msra.mxu0 0.0
        %2732 = vmatprep.subr.mxu0 0.0
        %2733 = vmatpush1.msra.mxu0 0.0
        %2734 = vmatprep.subr.mxu0 0.0
        %2735 = vmatpush1.msra.mxu0 0.0
        %2736 = vmatprep.subr.mxu0 0.0
        %2737 = vmatpush1.msra.mxu0 0.0
        %2738 = vmatprep.mubr.f32.mxu0 0.0
        %2739 = vmatmul.mubr.f32.gmra.mrb[0].mxu0 %v2651
        %v2740 = vpop.f32.mrb[0].mxu0
        %v2741 = vadd.f32 0.0, %v2740
        %v2742 = vpop.f32.mrb[0].mxu0
        %2743 = vmatprep.mubr.f32.mxu0 0.0
        %2744 = vmatmul.mubr.f32.gmra.mrb[0].mxu0 %v2654
        %v2745 = vpop.f32.mrb[0].mxu0
        %v2746 = vadd.f32 0.0, %v2745
        %v2747 = vpop.f32.mrb[0].mxu0
        %2748 = vmatprep.mubr.f32.mxu0 0.0
        %2749 = vmatmul.mubr.f32.gmra.mrb[0].mxu0 %v2657
        %v2750 = vpop.f32.mrb[0].mxu0
        %v2751 = vadd.f32 0.0, %v2750
        %v2752 = vpop.f32.mrb[0].mxu0
        %2753 = vmatprep.mubr.f32.mxu0 0.0
        %2754 = vmatmul.mubr.f32.gmra.mrb[0].mxu0 %v2660
        %v2755 = vpop.f32.mrb[0].mxu0
        %v2756 = vadd.f32 0.0, %v2755
        %v2757 = vpop.f32.mrb[0].mxu0
        %2758 = vmatprep.mubr.f32.mxu0 0.0
        %2759 = vmatmul.mubr.f32.gmra.mrb[0].mxu0 %v2663
        %v2760 = vpop.f32.mrb[0].mxu0
        %v2761 = vadd.f32 0.0, %v2760
        %v2762 = vpop.f32.mrb[0].mxu0
        %2763 = vmatprep.mubr.f32.mxu0 0.0
        %2764 = vmatmul.mubr.f32.gmra.mrb[0].mxu0 %v2666
        %v2765 = vpop.f32.mrb[0].mxu0
        %v2766 = vadd.f32 0.0, %v2765
        %v2767 = vpop.f32.mrb[0].mxu0
        %2768 = vmatprep.mubr.f32.mxu0 0.0
        %2769 = vmatmul.mubr.f32.gmra.mrb[0].mxu0 %v2669
        %v2770 = vpop.f32.mrb[0].mxu0
        %v2771 = vadd.f32 0.0, %v2770
        %v2772 = vpop.f32.mrb[0].mxu0
        %2773 = vmatprep.mubr.f32.mxu0 0.0
        %2774 = vmatmul.mubr.f32.gmra.mrb[0].mxu0 %v2672
        %v2775 = vpop.f32.mrb[0].mxu0
        %v2776 = vadd.f32 0.0, %v2775
        %v2777 = vpop.f32.mrb[0].mxu0
        %2778 = vdwg.mxu0
        %v2779 = vadd.f32 %v2640, %v2741
        %v2780 = vadd.f32 %v2641, %v2746
        %v2781 = vadd.f32 %v2642, %v2751
        %v2782 = vadd.f32 %v2643, %v2756
        %v2783 = vadd.f32 %v2644, %v2761
        %v2784 = vadd.f32 %v2645, %v2766
        %v2785 = vadd.f32 %v2646, %v2771
        %v2786 = vadd.f32 %v2647, %v2776
        %2787 = vst.msk [vmem:[#allocation4] sm:$0xff] %vm479, %v2779
        %2788 = vst.msk [vmem:[#allocation4 + $0x8] sm:$0xff] %vm479, %v2780
        %2789 = vst.msk [vmem:[#allocation4 + $0x10] sm:$0xff] %vm479, %v2781
        %2790 = vst.msk [vmem:[#allocation4 + $0x18] sm:$0xff] %vm479, %v2782
        %2791 = vst.msk [vmem:[#allocation4 + $0x20] sm:$0xff] %vm479, %v2783
        %2792 = vst.msk [vmem:[#allocation4 + $0x28] sm:$0xff] %vm479, %v2784
        %2793 = vst.msk [vmem:[#allocation4 + $0x30] sm:$0xff] %vm479, %v2785
        %2794 = vst.msk [vmem:[#allocation4 + $0x38] sm:$0xff] %vm479, %v2786
        %v2795 = vld [vmem:[%s2119] sm:$0xff]
        %v2796 = vld [vmem:[%s2119 + $0x10] sm:$0xff]
        %v2797 = vld [vmem:[%s2119 + $0x20] sm:$0xff]
        %v2798 = vld [vmem:[%s2119 + $0x30] sm:$0xff]
        %v2799 = vld [vmem:[%s2119 + $0x40] sm:$0xff]
        %v2800 = vld [vmem:[%s2119 + $0x50] sm:$0xff]
        %v2801 = vld [vmem:[%s2119 + $0x60] sm:$0xff]
        %v2802 = vld [vmem:[%s2119 + $0x70] sm:$0xff]
        %v2803 = vld [vmem:[#allocation4] sm:$0xff]
        %v2804 = vld [vmem:[#allocation4 + $0x8] sm:$0xff]
        %v2805 = vld [vmem:[#allocation4 + $0x10] sm:$0xff]
        %v2806 = vld [vmem:[#allocation4 + $0x18] sm:$0xff]
        %v2807 = vld [vmem:[#allocation4 + $0x20] sm:$0xff]
        %v2808 = vld [vmem:[#allocation4 + $0x28] sm:$0xff]
        %v2809 = vld [vmem:[#allocation4 + $0x30] sm:$0xff]
        %v2810 = vld [vmem:[#allocation4 + $0x38] sm:$0xff]
        %s2811 = scalar_lea.vmem %s4, 24
        %v2812 = vld [vmem:[%s2811] sm:$0xff]
        %v2814 = vsel %vm479, %v2795, 0
        %v2817 = vsel %vm479, %v2796, 0
        %v2820 = vsel %vm479, %v2797, 0
        %v2823 = vsel %vm479, %v2798, 0
        %v2826 = vsel %vm479, %v2799, 0
        %v2829 = vsel %vm479, %v2800, 0
        %v2832 = vsel %vm479, %v2801, 0
        %v2835 = vsel %vm479, %v2802, 0
        %2837 = vmatprep.subr.mxu0 0.0
        %2838 = vmatpush1.msra.mxu0 %v2812
        %2839 = vmatprep.subr.mxu0 0.0
        %2840 = vmatpush1.msra.mxu0 0.0
        %2841 = vmatprep.subr.mxu0 0.0
        %2842 = vmatpush1.msra.mxu0 0.0
        %2843 = vmatprep.subr.mxu0 0.0
        %2844 = vmatpush1.msra.mxu0 0.0
        %2845 = vmatprep.subr.mxu0 0.0
        %2846 = vmatpush1.msra.mxu0 0.0
        %2847 = vmatprep.subr.mxu0 0.0
        %2848 = vmatpush1.msra.mxu0 0.0
        %2849 = vmatprep.subr.mxu0 0.0
        %2850 = vmatpush1.msra.mxu0 0.0
        %2851 = vmatprep.subr.mxu0 0.0
        %2852 = vmatpush1.msra.mxu0 0.0
        %2853 = vmatprep.subr.mxu0 0.0
        %2854 = vmatpush1.msra.mxu0 0.0
        %2855 = vmatprep.subr.mxu0 0.0
        %2856 = vmatpush1.msra.mxu0 0.0
        %2857 = vmatprep.subr.mxu0 0.0
        %2858 = vmatpush1.msra.mxu0 0.0
        %2859 = vmatprep.subr.mxu0 0.0
        %2860 = vmatpush1.msra.mxu0 0.0
        %2861 = vmatprep.subr.mxu0 0.0
        %2862 = vmatpush1.msra.mxu0 0.0
        %2863 = vmatprep.subr.mxu0 0.0
        %2864 = vmatpush1.msra.mxu0 0.0
        %2865 = vmatprep.subr.mxu0 0.0
        %2866 = vmatpush1.msra.mxu0 0.0
        %2867 = vmatprep.subr.mxu0 0.0
        %2868 = vmatpush1.msra.mxu0 0.0
        %2869 = vmatprep.subr.mxu0 0.0
        %2870 = vmatpush1.msra.mxu0 0.0
        %2871 = vmatprep.subr.mxu0 0.0
        %2872 = vmatpush1.msra.mxu0 0.0
        %2873 = vmatprep.subr.mxu0 0.0
        %2874 = vmatpush1.msra.mxu0 0.0
        %2875 = vmatprep.subr.mxu0 0.0
        %2876 = vmatpush1.msra.mxu0 0.0
        %2877 = vmatprep.subr.mxu0 0.0
        %2878 = vmatpush1.msra.mxu0 0.0
        %2879 = vmatprep.subr.mxu0 0.0
        %2880 = vmatpush1.msra.mxu0 0.0
        %2881 = vmatprep.subr.mxu0 0.0
        %2882 = vmatpush1.msra.mxu0 0.0
        %2883 = vmatprep.subr.mxu0 0.0
        %2884 = vmatpush1.msra.mxu0 0.0
        %2885 = vmatprep.subr.mxu0 0.0
        %2886 = vmatpush1.msra.mxu0 0.0
        %2887 = vmatprep.subr.mxu0 0.0
        %2888 = vmatpush1.msra.mxu0 0.0
        %2889 = vmatprep.subr.mxu0 0.0
        %2890 = vmatpush1.msra.mxu0 0.0
        %2891 = vmatprep.subr.mxu0 0.0
        %2892 = vmatpush1.msra.mxu0 0.0
        %2893 = vmatprep.subr.mxu0 0.0
        %2894 = vmatpush1.msra.mxu0 0.0
        %2895 = vmatprep.subr.mxu0 0.0
        %2896 = vmatpush1.msra.mxu0 0.0
        %2897 = vmatprep.subr.mxu0 0.0
        %2898 = vmatpush1.msra.mxu0 0.0
        %2899 = vmatprep.subr.mxu0 0.0
        %2900 = vmatpush1.msra.mxu0 0.0
        %2901 = vmatprep.mubr.f32.mxu0 0.0
        %2902 = vmatmul.mubr.f32.gmra.mrb[0].mxu0 %v2814
        %v2903 = vpop.f32.mrb[0].mxu0
        %v2904 = vadd.f32 0.0, %v2903
        %v2905 = vpop.f32.mrb[0].mxu0
        %2906 = vmatprep.mubr.f32.mxu0 0.0
        %2907 = vmatmul.mubr.f32.gmra.mrb[0].mxu0 %v2817
        %v2908 = vpop.f32.mrb[0].mxu0
        %v2909 = vadd.f32 0.0, %v2908
        %v2910 = vpop.f32.mrb[0].mxu0
        %2911 = vmatprep.mubr.f32.mxu0 0.0
        %2912 = vmatmul.mubr.f32.gmra.mrb[0].mxu0 %v2820
        %v2913 = vpop.f32.mrb[0].mxu0
        %v2914 = vadd.f32 0.0, %v2913
        %v2915 = vpop.f32.mrb[0].mxu0
        %2916 = vmatprep.mubr.f32.mxu0 0.0
        %2917 = vmatmul.mubr.f32.gmra.mrb[0].mxu0 %v2823
        %v2918 = vpop.f32.mrb[0].mxu0
        %v2919 = vadd.f32 0.0, %v2918
        %v2920 = vpop.f32.mrb[0].mxu0
        %2921 = vmatprep.mubr.f32.mxu0 0.0
        %2922 = vmatmul.mubr.f32.gmra.mrb[0].mxu0 %v2826
        %v2923 = vpop.f32.mrb[0].mxu0
        %v2924 = vadd.f32 0.0, %v2923
        %v2925 = vpop.f32.mrb[0].mxu0
        %2926 = vmatprep.mubr.f32.mxu0 0.0
        %2927 = vmatmul.mubr.f32.gmra.mrb[0].mxu0 %v2829
        %v2928 = vpop.f32.mrb[0].mxu0
        %v2929 = vadd.f32 0.0, %v2928
        %v2930 = vpop.f32.mrb[0].mxu0
        %2931 = vmatprep.mubr.f32.mxu0 0.0
        %2932 = vmatmul.mubr.f32.gmra.mrb[0].mxu0 %v2832
        %v2933 = vpop.f32.mrb[0].mxu0
        %v2934 = vadd.f32 0.0, %v2933
        %v2935 = vpop.f32.mrb[0].mxu0
        %2936 = vmatprep.mubr.f32.mxu0 0.0
        %2937 = vmatmul.mubr.f32.gmra.mrb[0].mxu0 %v2835
        %v2938 = vpop.f32.mrb[0].mxu0
        %v2939 = vadd.f32 0.0, %v2938
        %v2940 = vpop.f32.mrb[0].mxu0
        %2941 = vdwg.mxu0
        %v2942 = vadd.f32 %v2803, %v2904
        %v2943 = vadd.f32 %v2804, %v2909
        %v2944 = vadd.f32 %v2805, %v2914
        %v2945 = vadd.f32 %v2806, %v2919
        %v2946 = vadd.f32 %v2807, %v2924
        %v2947 = vadd.f32 %v2808, %v2929
        %v2948 = vadd.f32 %v2809, %v2934
        %v2949 = vadd.f32 %v2810, %v2939
        %2950 = vst.msk [vmem:[#allocation4] sm:$0xff] %vm479, %v2942
        %2951 = vst.msk [vmem:[#allocation4 + $0x8] sm:$0xff] %vm479, %v2943
        %2952 = vst.msk [vmem:[#allocation4 + $0x10] sm:$0xff] %vm479, %v2944
        %2953 = vst.msk [vmem:[#allocation4 + $0x18] sm:$0xff] %vm479, %v2945
        %2954 = vst.msk [vmem:[#allocation4 + $0x20] sm:$0xff] %vm479, %v2946
        %2955 = vst.msk [vmem:[#allocation4 + $0x28] sm:$0xff] %vm479, %v2947
        %2956 = vst.msk [vmem:[#allocation4 + $0x30] sm:$0xff] %vm479, %v2948
        %2957 = vst.msk [vmem:[#allocation4 + $0x38] sm:$0xff] %vm479, %v2949
        %v2958 = vld [vmem:[%s2119 + $0x1] sm:$0xff]
        %v2959 = vld [vmem:[%s2119 + $0x11] sm:$0xff]
        %v2960 = vld [vmem:[%s2119 + $0x21] sm:$0xff]
        %v2961 = vld [vmem:[%s2119 + $0x31] sm:$0xff]
        %v2962 = vld [vmem:[%s2119 + $0x41] sm:$0xff]
        %v2963 = vld [vmem:[%s2119 + $0x51] sm:$0xff]
        %v2964 = vld [vmem:[%s2119 + $0x61] sm:$0xff]
        %v2965 = vld [vmem:[%s2119 + $0x71] sm:$0xff]
        %v2966 = vld [vmem:[#allocation4] sm:$0xff]
        %v2967 = vld [vmem:[#allocation4 + $0x8] sm:$0xff]
        %v2968 = vld [vmem:[#allocation4 + $0x10] sm:$0xff]
        %v2969 = vld [vmem:[#allocation4 + $0x18] sm:$0xff]
        %v2970 = vld [vmem:[#allocation4 + $0x20] sm:$0xff]
        %v2971 = vld [vmem:[#allocation4 + $0x28] sm:$0xff]
        %v2972 = vld [vmem:[#allocation4 + $0x30] sm:$0xff]
        %v2973 = vld [vmem:[#allocation4 + $0x38] sm:$0xff]
        %s2974 = scalar_lea.vmem %s4, 32
        %v2975 = vld [vmem:[%s2974] sm:$0xff]
        %v2977 = vsel %vm479, %v2958, 0
        %v2980 = vsel %vm479, %v2959, 0
        %v2983 = vsel %vm479, %v2960, 0
        %v2986 = vsel %vm479, %v2961, 0
        %v2989 = vsel %vm479, %v2962, 0
        %v2992 = vsel %vm479, %v2963, 0
        %v2995 = vsel %vm479, %v2964, 0
        %v2998 = vsel %vm479, %v2965, 0
        %3000 = vmatprep.subr.mxu0 0.0
        %3001 = vmatpush1.msra.mxu0 %v2975
        %3002 = vmatprep.subr.mxu0 0.0
        %3003 = vmatpush1.msra.mxu0 0.0
        %3004 = vmatprep.subr.mxu0 0.0
        %3005 = vmatpush1.msra.mxu0 0.0
        %3006 = vmatprep.subr.mxu0 0.0
        %3007 = vmatpush1.msra.mxu0 0.0
        %3008 = vmatprep.subr.mxu0 0.0
        %3009 = vmatpush1.msra.mxu0 0.0
        %3010 = vmatprep.subr.mxu0 0.0
        %3011 = vmatpush1.msra.mxu0 0.0
        %3012 = vmatprep.subr.mxu0 0.0
        %3013 = vmatpush1.msra.mxu0 0.0
        %3014 = vmatprep.subr.mxu0 0.0
        %3015 = vmatpush1.msra.mxu0 0.0
        %3016 = vmatprep.subr.mxu0 0.0
        %3017 = vmatpush1.msra.mxu0 0.0
        %3018 = vmatprep.subr.mxu0 0.0
        %3019 = vmatpush1.msra.mxu0 0.0
        %3020 = vmatprep.subr.mxu0 0.0
        %3021 = vmatpush1.msra.mxu0 0.0
        %3022 = vmatprep.subr.mxu0 0.0
        %3023 = vmatpush1.msra.mxu0 0.0
        %3024 = vmatprep.subr.mxu0 0.0
        %3025 = vmatpush1.msra.mxu0 0.0
        %3026 = vmatprep.subr.mxu0 0.0
        %3027 = vmatpush1.msra.mxu0 0.0
        %3028 = vmatprep.subr.mxu0 0.0
        %3029 = vmatpush1.msra.mxu0 0.0
        %3030 = vmatprep.subr.mxu0 0.0
        %3031 = vmatpush1.msra.mxu0 0.0
        %3032 = vmatprep.subr.mxu0 0.0
        %3033 = vmatpush1.msra.mxu0 0.0
        %3034 = vmatprep.subr.mxu0 0.0
        %3035 = vmatpush1.msra.mxu0 0.0
        %3036 = vmatprep.subr.mxu0 0.0
        %3037 = vmatpush1.msra.mxu0 0.0
        %3038 = vmatprep.subr.mxu0 0.0
        %3039 = vmatpush1.msra.mxu0 0.0
        %3040 = vmatprep.subr.mxu0 0.0
        %3041 = vmatpush1.msra.mxu0 0.0
        %3042 = vmatprep.subr.mxu0 0.0
        %3043 = vmatpush1.msra.mxu0 0.0
        %3044 = vmatprep.subr.mxu0 0.0
        %3045 = vmatpush1.msra.mxu0 0.0
        %3046 = vmatprep.subr.mxu0 0.0
        %3047 = vmatpush1.msra.mxu0 0.0
        %3048 = vmatprep.subr.mxu0 0.0
        %3049 = vmatpush1.msra.mxu0 0.0
        %3050 = vmatprep.subr.mxu0 0.0
        %3051 = vmatpush1.msra.mxu0 0.0
        %3052 = vmatprep.subr.mxu0 0.0
        %3053 = vmatpush1.msra.mxu0 0.0
        %3054 = vmatprep.subr.mxu0 0.0
        %3055 = vmatpush1.msra.mxu0 0.0
        %3056 = vmatprep.subr.mxu0 0.0
        %3057 = vmatpush1.msra.mxu0 0.0
        %3058 = vmatprep.subr.mxu0 0.0
        %3059 = vmatpush1.msra.mxu0 0.0
        %3060 = vmatprep.subr.mxu0 0.0
        %3061 = vmatpush1.msra.mxu0 0.0
        %3062 = vmatprep.subr.mxu0 0.0
        %3063 = vmatpush1.msra.mxu0 0.0
        %3064 = vmatprep.mubr.f32.mxu0 0.0
        %3065 = vmatmul.mubr.f32.gmra.mrb[0].mxu0 %v2977
        %v3066 = vpop.f32.mrb[0].mxu0
        %v3067 = vadd.f32 0.0, %v3066
        %v3068 = vpop.f32.mrb[0].mxu0
        %3069 = vmatprep.mubr.f32.mxu0 0.0
        %3070 = vmatmul.mubr.f32.gmra.mrb[0].mxu0 %v2980
        %v3071 = vpop.f32.mrb[0].mxu0
        %v3072 = vadd.f32 0.0, %v3071
        %v3073 = vpop.f32.mrb[0].mxu0
        %3074 = vmatprep.mubr.f32.mxu0 0.0
        %3075 = vmatmul.mubr.f32.gmra.mrb[0].mxu0 %v2983
        %v3076 = vpop.f32.mrb[0].mxu0
        %v3077 = vadd.f32 0.0, %v3076
        %v3078 = vpop.f32.mrb[0].mxu0
        %3079 = vmatprep.mubr.f32.mxu0 0.0
        %3080 = vmatmul.mubr.f32.gmra.mrb[0].mxu0 %v2986
        %v3081 = vpop.f32.mrb[0].mxu0
        %v3082 = vadd.f32 0.0, %v3081
        %v3083 = vpop.f32.mrb[0].mxu0
        %3084 = vmatprep.mubr.f32.mxu0 0.0
        %3085 = vmatmul.mubr.f32.gmra.mrb[0].mxu0 %v2989
        %v3086 = vpop.f32.mrb[0].mxu0
        %v3087 = vadd.f32 0.0, %v3086
        %v3088 = vpop.f32.mrb[0].mxu0
        %3089 = vmatprep.mubr.f32.mxu0 0.0
        %3090 = vmatmul.mubr.f32.gmra.mrb[0].mxu0 %v2992
        %v3091 = vpop.f32.mrb[0].mxu0
        %v3092 = vadd.f32 0.0, %v3091
        %v3093 = vpop.f32.mrb[0].mxu0
        %3094 = vmatprep.mubr.f32.mxu0 0.0
        %3095 = vmatmul.mubr.f32.gmra.mrb[0].mxu0 %v2995
        %v3096 = vpop.f32.mrb[0].mxu0
        %v3097 = vadd.f32 0.0, %v3096
        %v3098 = vpop.f32.mrb[0].mxu0
        %3099 = vmatprep.mubr.f32.mxu0 0.0
        %3100 = vmatmul.mubr.f32.gmra.mrb[0].mxu0 %v2998
        %v3101 = vpop.f32.mrb[0].mxu0
        %v3102 = vadd.f32 0.0, %v3101
        %v3103 = vpop.f32.mrb[0].mxu0
        %3104 = vdwg.mxu0
        %v3105 = vadd.f32 %v2966, %v3067
        %v3106 = vadd.f32 %v2967, %v3072
        %v3107 = vadd.f32 %v2968, %v3077
        %v3108 = vadd.f32 %v2969, %v3082
        %v3109 = vadd.f32 %v2970, %v3087
        %v3110 = vadd.f32 %v2971, %v3092
        %v3111 = vadd.f32 %v2972, %v3097
        %v3112 = vadd.f32 %v2973, %v3102
        %3113 = vst.msk [vmem:[#allocation4] sm:$0xff] %vm479, %v3105
        %3114 = vst.msk [vmem:[#allocation4 + $0x8] sm:$0xff] %vm479, %v3106
        %3115 = vst.msk [vmem:[#allocation4 + $0x10] sm:$0xff] %vm479, %v3107
        %3116 = vst.msk [vmem:[#allocation4 + $0x18] sm:$0xff] %vm479, %v3108
        %3117 = vst.msk [vmem:[#allocation4 + $0x20] sm:$0xff] %vm479, %v3109
        %3118 = vst.msk [vmem:[#allocation4 + $0x28] sm:$0xff] %vm479, %v3110
        %3119 = vst.msk [vmem:[#allocation4 + $0x30] sm:$0xff] %vm479, %v3111
        %3120 = vst.msk [vmem:[#allocation4 + $0x38] sm:$0xff] %vm479, %v3112
        %v3121 = vld [vmem:[%s2119 + $0x2] sm:$0xff]
        %v3122 = vld [vmem:[%s2119 + $0x12] sm:$0xff]
        %v3123 = vld [vmem:[%s2119 + $0x22] sm:$0xff]
        %v3124 = vld [vmem:[%s2119 + $0x32] sm:$0xff]
        %v3125 = vld [vmem:[%s2119 + $0x42] sm:$0xff]
        %v3126 = vld [vmem:[%s2119 + $0x52] sm:$0xff]
        %v3127 = vld [vmem:[%s2119 + $0x62] sm:$0xff]
        %v3128 = vld [vmem:[%s2119 + $0x72] sm:$0xff]
        %v3129 = vld [vmem:[#allocation4] sm:$0xff]
        %v3130 = vld [vmem:[#allocation4 + $0x8] sm:$0xff]
        %v3131 = vld [vmem:[#allocation4 + $0x10] sm:$0xff]
        %v3132 = vld [vmem:[#allocation4 + $0x18] sm:$0xff]
        %v3133 = vld [vmem:[#allocation4 + $0x20] sm:$0xff]
        %v3134 = vld [vmem:[#allocation4 + $0x28] sm:$0xff]
        %v3135 = vld [vmem:[#allocation4 + $0x30] sm:$0xff]
        %v3136 = vld [vmem:[#allocation4 + $0x38] sm:$0xff]
        %s3137 = scalar_lea.vmem %s4, 40
        %v3138 = vld [vmem:[%s3137] sm:$0xff]
        %v3140 = vsel %vm479, %v3121, 0
        %v3143 = vsel %vm479, %v3122, 0
        %v3146 = vsel %vm479, %v3123, 0
        %v3149 = vsel %vm479, %v3124, 0
        %v3152 = vsel %vm479, %v3125, 0
        %v3155 = vsel %vm479, %v3126, 0
        %v3158 = vsel %vm479, %v3127, 0
        %v3161 = vsel %vm479, %v3128, 0
        %3163 = vmatprep.subr.mxu0 0.0
        %3164 = vmatpush1.msra.mxu0 %v3138
        %3165 = vmatprep.subr.mxu0 0.0
        %3166 = vmatpush1.msra.mxu0 0.0
        %3167 = vmatprep.subr.mxu0 0.0
        %3168 = vmatpush1.msra.mxu0 0.0
        %3169 = vmatprep.subr.mxu0 0.0
        %3170 = vmatpush1.msra.mxu0 0.0
        %3171 = vmatprep.subr.mxu0 0.0
        %3172 = vmatpush1.msra.mxu0 0.0
        %3173 = vmatprep.subr.mxu0 0.0
        %3174 = vmatpush1.msra.mxu0 0.0
        %3175 = vmatprep.subr.mxu0 0.0
        %3176 = vmatpush1.msra.mxu0 0.0
        %3177 = vmatprep.subr.mxu0 0.0
        %3178 = vmatpush1.msra.mxu0 0.0
        %3179 = vmatprep.subr.mxu0 0.0
        %3180 = vmatpush1.msra.mxu0 0.0
        %3181 = vmatprep.subr.mxu0 0.0
        %3182 = vmatpush1.msra.mxu0 0.0
        %3183 = vmatprep.subr.mxu0 0.0
        %3184 = vmatpush1.msra.mxu0 0.0
        %3185 = vmatprep.subr.mxu0 0.0
        %3186 = vmatpush1.msra.mxu0 0.0
        %3187 = vmatprep.subr.mxu0 0.0
        %3188 = vmatpush1.msra.mxu0 0.0
        %3189 = vmatprep.subr.mxu0 0.0
        %3190 = vmatpush1.msra.mxu0 0.0
        %3191 = vmatprep.subr.mxu0 0.0
        %3192 = vmatpush1.msra.mxu0 0.0
        %3193 = vmatprep.subr.mxu0 0.0
        %3194 = vmatpush1.msra.mxu0 0.0
        %3195 = vmatprep.subr.mxu0 0.0
        %3196 = vmatpush1.msra.mxu0 0.0
        %3197 = vmatprep.subr.mxu0 0.0
        %3198 = vmatpush1.msra.mxu0 0.0
        %3199 = vmatprep.subr.mxu0 0.0
        %3200 = vmatpush1.msra.mxu0 0.0
        %3201 = vmatprep.subr.mxu0 0.0
        %3202 = vmatpush1.msra.mxu0 0.0
        %3203 = vmatprep.subr.mxu0 0.0
        %3204 = vmatpush1.msra.mxu0 0.0
        %3205 = vmatprep.subr.mxu0 0.0
        %3206 = vmatpush1.msra.mxu0 0.0
        %3207 = vmatprep.subr.mxu0 0.0
        %3208 = vmatpush1.msra.mxu0 0.0
        %3209 = vmatprep.subr.mxu0 0.0
        %3210 = vmatpush1.msra.mxu0 0.0
        %3211 = vmatprep.subr.mxu0 0.0
        %3212 = vmatpush1.msra.mxu0 0.0
        %3213 = vmatprep.subr.mxu0 0.0
        %3214 = vmatpush1.msra.mxu0 0.0
        %3215 = vmatprep.subr.mxu0 0.0
        %3216 = vmatpush1.msra.mxu0 0.0
        %3217 = vmatprep.subr.mxu0 0.0
        %3218 = vmatpush1.msra.mxu0 0.0
        %3219 = vmatprep.subr.mxu0 0.0
        %3220 = vmatpush1.msra.mxu0 0.0
        %3221 = vmatprep.subr.mxu0 0.0
        %3222 = vmatpush1.msra.mxu0 0.0
        %3223 = vmatprep.subr.mxu0 0.0
        %3224 = vmatpush1.msra.mxu0 0.0
        %3225 = vmatprep.subr.mxu0 0.0
        %3226 = vmatpush1.msra.mxu0 0.0
        %3227 = vmatprep.mubr.f32.mxu0 0.0
        %3228 = vmatmul.mubr.f32.gmra.mrb[0].mxu0 %v3140
        %v3229 = vpop.f32.mrb[0].mxu0
        %v3230 = vadd.f32 0.0, %v3229
        %v3231 = vpop.f32.mrb[0].mxu0
        %3232 = vmatprep.mubr.f32.mxu0 0.0
        %3233 = vmatmul.mubr.f32.gmra.mrb[0].mxu0 %v3143
        %v3234 = vpop.f32.mrb[0].mxu0
        %v3235 = vadd.f32 0.0, %v3234
        %v3236 = vpop.f32.mrb[0].mxu0
        %3237 = vmatprep.mubr.f32.mxu0 0.0
        %3238 = vmatmul.mubr.f32.gmra.mrb[0].mxu0 %v3146
        %v3239 = vpop.f32.mrb[0].mxu0
        %v3240 = vadd.f32 0.0, %v3239
        %v3241 = vpop.f32.mrb[0].mxu0
        %3242 = vmatprep.mubr.f32.mxu0 0.0
        %3243 = vmatmul.mubr.f32.gmra.mrb[0].mxu0 %v3149
        %v3244 = vpop.f32.mrb[0].mxu0
        %v3245 = vadd.f32 0.0, %v3244
        %v3246 = vpop.f32.mrb[0].mxu0
        %3247 = vmatprep.mubr.f32.mxu0 0.0
        %3248 = vmatmul.mubr.f32.gmra.mrb[0].mxu0 %v3152
        %v3249 = vpop.f32.mrb[0].mxu0
        %v3250 = vadd.f32 0.0, %v3249
        %v3251 = vpop.f32.mrb[0].mxu0
        %3252 = vmatprep.mubr.f32.mxu0 0.0
        %3253 = vmatmul.mubr.f32.gmra.mrb[0].mxu0 %v3155
        %v3254 = vpop.f32.mrb[0].mxu0
        %v3255 = vadd.f32 0.0, %v3254
        %v3256 = vpop.f32.mrb[0].mxu0
        %3257 = vmatprep.mubr.f32.mxu0 0.0
        %3258 = vmatmul.mubr.f32.gmra.mrb[0].mxu0 %v3158
        %v3259 = vpop.f32.mrb[0].mxu0
        %v3260 = vadd.f32 0.0, %v3259
        %v3261 = vpop.f32.mrb[0].mxu0
        %3262 = vmatprep.mubr.f32.mxu0 0.0
        %3263 = vmatmul.mubr.f32.gmra.mrb[0].mxu0 %v3161
        %v3264 = vpop.f32.mrb[0].mxu0
        %v3265 = vadd.f32 0.0, %v3264
        %v3266 = vpop.f32.mrb[0].mxu0
        %3267 = vdwg.mxu0
        %v3268 = vadd.f32 %v3129, %v3230
        %v3269 = vadd.f32 %v3130, %v3235
        %v3270 = vadd.f32 %v3131, %v3240
        %v3271 = vadd.f32 %v3132, %v3245
        %v3272 = vadd.f32 %v3133, %v3250
        %v3273 = vadd.f32 %v3134, %v3255
        %v3274 = vadd.f32 %v3135, %v3260
        %v3275 = vadd.f32 %v3136, %v3265
        %3276 = vst.msk [vmem:[#allocation4] sm:$0xff] %vm479, %v3268
        %3277 = vst.msk [vmem:[#allocation4 + $0x8] sm:$0xff] %vm479, %v3269
        %3278 = vst.msk [vmem:[#allocation4 + $0x10] sm:$0xff] %vm479, %v3270
        %3279 = vst.msk [vmem:[#allocation4 + $0x18] sm:$0xff] %vm479, %v3271
        %3280 = vst.msk [vmem:[#allocation4 + $0x20] sm:$0xff] %vm479, %v3272
        %3281 = vst.msk [vmem:[#allocation4 + $0x28] sm:$0xff] %vm479, %v3273
        %3282 = vst.msk [vmem:[#allocation4 + $0x30] sm:$0xff] %vm479, %v3274
        %3283 = vst.msk [vmem:[#allocation4 + $0x38] sm:$0xff] %vm479, %v3275
        %s3284 = scalar_lea.vmem [#allocation3], 32
        %v3285 = vld [vmem:[%s3284] sm:$0xff]
        %v3286 = vld [vmem:[%s3284 + $0x10] sm:$0xff]
        %v3287 = vld [vmem:[%s3284 + $0x20] sm:$0xff]
        %v3288 = vld [vmem:[%s3284 + $0x30] sm:$0xff]
        %v3289 = vld [vmem:[%s3284 + $0x40] sm:$0xff]
        %v3290 = vld [vmem:[%s3284 + $0x50] sm:$0xff]
        %v3291 = vld [vmem:[%s3284 + $0x60] sm:$0xff]
        %v3292 = vld [vmem:[%s3284 + $0x70] sm:$0xff]
        %v3293 = vld [vmem:[#allocation4] sm:$0xff]
        %v3294 = vld [vmem:[#allocation4 + $0x8] sm:$0xff]
        %v3295 = vld [vmem:[#allocation4 + $0x10] sm:$0xff]
        %v3296 = vld [vmem:[#allocation4 + $0x18] sm:$0xff]
        %v3297 = vld [vmem:[#allocation4 + $0x20] sm:$0xff]
        %v3298 = vld [vmem:[#allocation4 + $0x28] sm:$0xff]
        %v3299 = vld [vmem:[#allocation4 + $0x30] sm:$0xff]
        %v3300 = vld [vmem:[#allocation4 + $0x38] sm:$0xff]
        %s3301 = scalar_lea.vmem %s4, 48
        %v3302 = vld [vmem:[%s3301] sm:$0xff]
        %v3304 = vsel %vm479, %v3285, 0
        %v3307 = vsel %vm479, %v3286, 0
        %v3310 = vsel %vm479, %v3287, 0
        %v3313 = vsel %vm479, %v3288, 0
        %v3316 = vsel %vm479, %v3289, 0
        %v3319 = vsel %vm479, %v3290, 0
        %v3322 = vsel %vm479, %v3291, 0
        %v3325 = vsel %vm479, %v3292, 0
        %3327 = vmatprep.subr.mxu0 0.0
        %3328 = vmatpush1.msra.mxu0 %v3302
        %3329 = vmatprep.subr.mxu0 0.0
        %3330 = vmatpush1.msra.mxu0 0.0
        %3331 = vmatprep.subr.mxu0 0.0
        %3332 = vmatpush1.msra.mxu0 0.0
        %3333 = vmatprep.subr.mxu0 0.0
        %3334 = vmatpush1.msra.mxu0 0.0
        %3335 = vmatprep.subr.mxu0 0.0
        %3336 = vmatpush1.msra.mxu0 0.0
        %3337 = vmatprep.subr.mxu0 0.0
        %3338 = vmatpush1.msra.mxu0 0.0
        %3339 = vmatprep.subr.mxu0 0.0
        %3340 = vmatpush1.msra.mxu0 0.0
        %3341 = vmatprep.subr.mxu0 0.0
        %3342 = vmatpush1.msra.mxu0 0.0
        %3343 = vmatprep.subr.mxu0 0.0
        %3344 = vmatpush1.msra.mxu0 0.0
        %3345 = vmatprep.subr.mxu0 0.0
        %3346 = vmatpush1.msra.mxu0 0.0
        %3347 = vmatprep.subr.mxu0 0.0
        %3348 = vmatpush1.msra.mxu0 0.0
        %3349 = vmatprep.subr.mxu0 0.0
        %3350 = vmatpush1.msra.mxu0 0.0
        %3351 = vmatprep.subr.mxu0 0.0
        %3352 = vmatpush1.msra.mxu0 0.0
        %3353 = vmatprep.subr.mxu0 0.0
        %3354 = vmatpush1.msra.mxu0 0.0
        %3355 = vmatprep.subr.mxu0 0.0
        %3356 = vmatpush1.msra.mxu0 0.0
        %3357 = vmatprep.subr.mxu0 0.0
        %3358 = vmatpush1.msra.mxu0 0.0
        %3359 = vmatprep.subr.mxu0 0.0
        %3360 = vmatpush1.msra.mxu0 0.0
        %3361 = vmatprep.subr.mxu0 0.0
        %3362 = vmatpush1.msra.mxu0 0.0
        %3363 = vmatprep.subr.mxu0 0.0
        %3364 = vmatpush1.msra.mxu0 0.0
        %3365 = vmatprep.subr.mxu0 0.0
        %3366 = vmatpush1.msra.mxu0 0.0
        %3367 = vmatprep.subr.mxu0 0.0
        %3368 = vmatpush1.msra.mxu0 0.0
        %3369 = vmatprep.subr.mxu0 0.0
        %3370 = vmatpush1.msra.mxu0 0.0
        %3371 = vmatprep.subr.mxu0 0.0
        %3372 = vmatpush1.msra.mxu0 0.0
        %3373 = vmatprep.subr.mxu0 0.0
        %3374 = vmatpush1.msra.mxu0 0.0
        %3375 = vmatprep.subr.mxu0 0.0
        %3376 = vmatpush1.msra.mxu0 0.0
        %3377 = vmatprep.subr.mxu0 0.0
        %3378 = vmatpush1.msra.mxu0 0.0
        %3379 = vmatprep.subr.mxu0 0.0
        %3380 = vmatpush1.msra.mxu0 0.0
        %3381 = vmatprep.subr.mxu0 0.0
        %3382 = vmatpush1.msra.mxu0 0.0
        %3383 = vmatprep.subr.mxu0 0.0
        %3384 = vmatpush1.msra.mxu0 0.0
        %3385 = vmatprep.subr.mxu0 0.0
        %3386 = vmatpush1.msra.mxu0 0.0
        %3387 = vmatprep.subr.mxu0 0.0
        %3388 = vmatpush1.msra.mxu0 0.0
        %3389 = vmatprep.subr.mxu0 0.0
        %3390 = vmatpush1.msra.mxu0 0.0
        %3391 = vmatprep.mubr.f32.mxu0 0.0
        %3392 = vmatmul.mubr.f32.gmra.mrb[0].mxu0 %v3304
        %v3393 = vpop.f32.mrb[0].mxu0
        %v3394 = vadd.f32 0.0, %v3393
        %v3395 = vpop.f32.mrb[0].mxu0
        %3396 = vmatprep.mubr.f32.mxu0 0.0
        %3397 = vmatmul.mubr.f32.gmra.mrb[0].mxu0 %v3307
        %v3398 = vpop.f32.mrb[0].mxu0
        %v3399 = vadd.f32 0.0, %v3398
        %v3400 = vpop.f32.mrb[0].mxu0
        %3401 = vmatprep.mubr.f32.mxu0 0.0
        %3402 = vmatmul.mubr.f32.gmra.mrb[0].mxu0 %v3310
        %v3403 = vpop.f32.mrb[0].mxu0
        %v3404 = vadd.f32 0.0, %v3403
        %v3405 = vpop.f32.mrb[0].mxu0
        %3406 = vmatprep.mubr.f32.mxu0 0.0
        %3407 = vmatmul.mubr.f32.gmra.mrb[0].mxu0 %v3313
        %v3408 = vpop.f32.mrb[0].mxu0
        %v3409 = vadd.f32 0.0, %v3408
        %v3410 = vpop.f32.mrb[0].mxu0
        %3411 = vmatprep.mubr.f32.mxu0 0.0
        %3412 = vmatmul.mubr.f32.gmra.mrb[0].mxu0 %v3316
        %v3413 = vpop.f32.mrb[0].mxu0
        %v3414 = vadd.f32 0.0, %v3413
        %v3415 = vpop.f32.mrb[0].mxu0
        %3416 = vmatprep.mubr.f32.mxu0 0.0
        %3417 = vmatmul.mubr.f32.gmra.mrb[0].mxu0 %v3319
        %v3418 = vpop.f32.mrb[0].mxu0
        %v3419 = vadd.f32 0.0, %v3418
        %v3420 = vpop.f32.mrb[0].mxu0
        %3421 = vmatprep.mubr.f32.mxu0 0.0
        %3422 = vmatmul.mubr.f32.gmra.mrb[0].mxu0 %v3322
        %v3423 = vpop.f32.mrb[0].mxu0
        %v3424 = vadd.f32 0.0, %v3423
        %v3425 = vpop.f32.mrb[0].mxu0
        %3426 = vmatprep.mubr.f32.mxu0 0.0
        %3427 = vmatmul.mubr.f32.gmra.mrb[0].mxu0 %v3325
        %v3428 = vpop.f32.mrb[0].mxu0
        %v3429 = vadd.f32 0.0, %v3428
        %v3430 = vpop.f32.mrb[0].mxu0
        %3431 = vdwg.mxu0
        %v3432 = vadd.f32 %v3293, %v3394
        %v3433 = vadd.f32 %v3294, %v3399
        %v3434 = vadd.f32 %v3295, %v3404
        %v3435 = vadd.f32 %v3296, %v3409
        %v3436 = vadd.f32 %v3297, %v3414
        %v3437 = vadd.f32 %v3298, %v3419
        %v3438 = vadd.f32 %v3299, %v3424
        %v3439 = vadd.f32 %v3300, %v3429
        %3440 = vst.msk [vmem:[#allocation4] sm:$0xff] %vm479, %v3432
        %3441 = vst.msk [vmem:[#allocation4 + $0x8] sm:$0xff] %vm479, %v3433
        %3442 = vst.msk [vmem:[#allocation4 + $0x10] sm:$0xff] %vm479, %v3434
        %3443 = vst.msk [vmem:[#allocation4 + $0x18] sm:$0xff] %vm479, %v3435
        %3444 = vst.msk [vmem:[#allocation4 + $0x20] sm:$0xff] %vm479, %v3436
        %3445 = vst.msk [vmem:[#allocation4 + $0x28] sm:$0xff] %vm479, %v3437
        %3446 = vst.msk [vmem:[#allocation4 + $0x30] sm:$0xff] %vm479, %v3438
        %3447 = vst.msk [vmem:[#allocation4 + $0x38] sm:$0xff] %vm479, %v3439
        %v3448 = vld [vmem:[%s3284 + $0x1] sm:$0xff]
        %v3449 = vld [vmem:[%s3284 + $0x11] sm:$0xff]
        %v3450 = vld [vmem:[%s3284 + $0x21] sm:$0xff]
        %v3451 = vld [vmem:[%s3284 + $0x31] sm:$0xff]
        %v3452 = vld [vmem:[%s3284 + $0x41] sm:$0xff]
        %v3453 = vld [vmem:[%s3284 + $0x51] sm:$0xff]
        %v3454 = vld [vmem:[%s3284 + $0x61] sm:$0xff]
        %v3455 = vld [vmem:[%s3284 + $0x71] sm:$0xff]
        %v3456 = vld [vmem:[#allocation4] sm:$0xff]
        %v3457 = vld [vmem:[#allocation4 + $0x8] sm:$0xff]
        %v3458 = vld [vmem:[#allocation4 + $0x10] sm:$0xff]
        %v3459 = vld [vmem:[#allocation4 + $0x18] sm:$0xff]
        %v3460 = vld [vmem:[#allocation4 + $0x20] sm:$0xff]
        %v3461 = vld [vmem:[#allocation4 + $0x28] sm:$0xff]
        %v3462 = vld [vmem:[#allocation4 + $0x30] sm:$0xff]
        %v3463 = vld [vmem:[#allocation4 + $0x38] sm:$0xff]
        %s3464 = scalar_lea.vmem %s4, 56
        %v3465 = vld [vmem:[%s3464] sm:$0xff]
        %v3467 = vsel %vm479, %v3448, 0
        %v3470 = vsel %vm479, %v3449, 0
        %v3473 = vsel %vm479, %v3450, 0
        %v3476 = vsel %vm479, %v3451, 0
        %v3479 = vsel %vm479, %v3452, 0
        %v3482 = vsel %vm479, %v3453, 0
        %v3485 = vsel %vm479, %v3454, 0
        %v3488 = vsel %vm479, %v3455, 0
        %3490 = vmatprep.subr.mxu0 0.0
        %3491 = vmatpush1.msra.mxu0 %v3465
        %3492 = vmatprep.subr.mxu0 0.0
        %3493 = vmatpush1.msra.mxu0 0.0
        %3494 = vmatprep.subr.mxu0 0.0
        %3495 = vmatpush1.msra.mxu0 0.0
        %3496 = vmatprep.subr.mxu0 0.0
        %3497 = vmatpush1.msra.mxu0 0.0
        %3498 = vmatprep.subr.mxu0 0.0
        %3499 = vmatpush1.msra.mxu0 0.0
        %3500 = vmatprep.subr.mxu0 0.0
        %3501 = vmatpush1.msra.mxu0 0.0
        %3502 = vmatprep.subr.mxu0 0.0
        %3503 = vmatpush1.msra.mxu0 0.0
        %3504 = vmatprep.subr.mxu0 0.0
        %3505 = vmatpush1.msra.mxu0 0.0
        %3506 = vmatprep.subr.mxu0 0.0
        %3507 = vmatpush1.msra.mxu0 0.0
        %3508 = vmatprep.subr.mxu0 0.0
        %3509 = vmatpush1.msra.mxu0 0.0
        %3510 = vmatprep.subr.mxu0 0.0
        %3511 = vmatpush1.msra.mxu0 0.0
        %3512 = vmatprep.subr.mxu0 0.0
        %3513 = vmatpush1.msra.mxu0 0.0
        %3514 = vmatprep.subr.mxu0 0.0
        %3515 = vmatpush1.msra.mxu0 0.0
        %3516 = vmatprep.subr.mxu0 0.0
        %3517 = vmatpush1.msra.mxu0 0.0
        %3518 = vmatprep.subr.mxu0 0.0
        %3519 = vmatpush1.msra.mxu0 0.0
        %3520 = vmatprep.subr.mxu0 0.0
        %3521 = vmatpush1.msra.mxu0 0.0
        %3522 = vmatprep.subr.mxu0 0.0
        %3523 = vmatpush1.msra.mxu0 0.0
        %3524 = vmatprep.subr.mxu0 0.0
        %3525 = vmatpush1.msra.mxu0 0.0
        %3526 = vmatprep.subr.mxu0 0.0
        %3527 = vmatpush1.msra.mxu0 0.0
        %3528 = vmatprep.subr.mxu0 0.0
        %3529 = vmatpush1.msra.mxu0 0.0
        %3530 = vmatprep.subr.mxu0 0.0
        %3531 = vmatpush1.msra.mxu0 0.0
        %3532 = vmatprep.subr.mxu0 0.0
        %3533 = vmatpush1.msra.mxu0 0.0
        %3534 = vmatprep.subr.mxu0 0.0
        %3535 = vmatpush1.msra.mxu0 0.0
        %3536 = vmatprep.subr.mxu0 0.0
        %3537 = vmatpush1.msra.mxu0 0.0
        %3538 = vmatprep.subr.mxu0 0.0
        %3539 = vmatpush1.msra.mxu0 0.0
        %3540 = vmatprep.subr.mxu0 0.0
        %3541 = vmatpush1.msra.mxu0 0.0
        %3542 = vmatprep.subr.mxu0 0.0
        %3543 = vmatpush1.msra.mxu0 0.0
        %3544 = vmatprep.subr.mxu0 0.0
        %3545 = vmatpush1.msra.mxu0 0.0
        %3546 = vmatprep.subr.mxu0 0.0
        %3547 = vmatpush1.msra.mxu0 0.0
        %3548 = vmatprep.subr.mxu0 0.0
        %3549 = vmatpush1.msra.mxu0 0.0
        %3550 = vmatprep.subr.mxu0 0.0
        %3551 = vmatpush1.msra.mxu0 0.0
        %3552 = vmatprep.subr.mxu0 0.0
        %3553 = vmatpush1.msra.mxu0 0.0
        %3554 = vmatprep.mubr.f32.mxu0 0.0
        %3555 = vmatmul.mubr.f32.gmra.mrb[0].mxu0 %v3467
        %v3556 = vpop.f32.mrb[0].mxu0
        %v3557 = vadd.f32 0.0, %v3556
        %v3558 = vpop.f32.mrb[0].mxu0
        %3559 = vmatprep.mubr.f32.mxu0 0.0
        %3560 = vmatmul.mubr.f32.gmra.mrb[0].mxu0 %v3470
        %v3561 = vpop.f32.mrb[0].mxu0
        %v3562 = vadd.f32 0.0, %v3561
        %v3563 = vpop.f32.mrb[0].mxu0
        %3564 = vmatprep.mubr.f32.mxu0 0.0
        %3565 = vmatmul.mubr.f32.gmra.mrb[0].mxu0 %v3473
        %v3566 = vpop.f32.mrb[0].mxu0
        %v3567 = vadd.f32 0.0, %v3566
        %v3568 = vpop.f32.mrb[0].mxu0
        %3569 = vmatprep.mubr.f32.mxu0 0.0
        %3570 = vmatmul.mubr.f32.gmra.mrb[0].mxu0 %v3476
        %v3571 = vpop.f32.mrb[0].mxu0
        %v3572 = vadd.f32 0.0, %v3571
        %v3573 = vpop.f32.mrb[0].mxu0
        %3574 = vmatprep.mubr.f32.mxu0 0.0
        %3575 = vmatmul.mubr.f32.gmra.mrb[0].mxu0 %v3479
        %v3576 = vpop.f32.mrb[0].mxu0
        %v3577 = vadd.f32 0.0, %v3576
        %v3578 = vpop.f32.mrb[0].mxu0
        %3579 = vmatprep.mubr.f32.mxu0 0.0
        %3580 = vmatmul.mubr.f32.gmra.mrb[0].mxu0 %v3482
        %v3581 = vpop.f32.mrb[0].mxu0
        %v3582 = vadd.f32 0.0, %v3581
        %v3583 = vpop.f32.mrb[0].mxu0
        %3584 = vmatprep.mubr.f32.mxu0 0.0
        %3585 = vmatmul.mubr.f32.gmra.mrb[0].mxu0 %v3485
        %v3586 = vpop.f32.mrb[0].mxu0
        %v3587 = vadd.f32 0.0, %v3586
        %v3588 = vpop.f32.mrb[0].mxu0
        %3589 = vmatprep.mubr.f32.mxu0 0.0
        %3590 = vmatmul.mubr.f32.gmra.mrb[0].mxu0 %v3488
        %v3591 = vpop.f32.mrb[0].mxu0
        %v3592 = vadd.f32 0.0, %v3591
        %v3593 = vpop.f32.mrb[0].mxu0
        %3594 = vdwg.mxu0
        %v3595 = vadd.f32 %v3456, %v3557
        %v3596 = vadd.f32 %v3457, %v3562
        %v3597 = vadd.f32 %v3458, %v3567
        %v3598 = vadd.f32 %v3459, %v3572
        %v3599 = vadd.f32 %v3460, %v3577
        %v3600 = vadd.f32 %v3461, %v3582
        %v3601 = vadd.f32 %v3462, %v3587
        %v3602 = vadd.f32 %v3463, %v3592
        %3603 = vst.msk [vmem:[#allocation4] sm:$0xff] %vm479, %v3595
        %3604 = vst.msk [vmem:[#allocation4 + $0x8] sm:$0xff] %vm479, %v3596
        %3605 = vst.msk [vmem:[#allocation4 + $0x10] sm:$0xff] %vm479, %v3597
        %3606 = vst.msk [vmem:[#allocation4 + $0x18] sm:$0xff] %vm479, %v3598
        %3607 = vst.msk [vmem:[#allocation4 + $0x20] sm:$0xff] %vm479, %v3599
        %3608 = vst.msk [vmem:[#allocation4 + $0x28] sm:$0xff] %vm479, %v3600
        %3609 = vst.msk [vmem:[#allocation4 + $0x30] sm:$0xff] %vm479, %v3601
        %3610 = vst.msk [vmem:[#allocation4 + $0x38] sm:$0xff] %vm479, %v3602
        %v3611 = vld [vmem:[%s3284 + $0x2] sm:$0xff]
        %v3612 = vld [vmem:[%s3284 + $0x12] sm:$0xff]
        %v3613 = vld [vmem:[%s3284 + $0x22] sm:$0xff]
        %v3614 = vld [vmem:[%s3284 + $0x32] sm:$0xff]
        %v3615 = vld [vmem:[%s3284 + $0x42] sm:$0xff]
        %v3616 = vld [vmem:[%s3284 + $0x52] sm:$0xff]
        %v3617 = vld [vmem:[%s3284 + $0x62] sm:$0xff]
        %v3618 = vld [vmem:[%s3284 + $0x72] sm:$0xff]
        %v3619 = vld [vmem:[#allocation4] sm:$0xff]
        %v3620 = vld [vmem:[#allocation4 + $0x8] sm:$0xff]
        %v3621 = vld [vmem:[#allocation4 + $0x10] sm:$0xff]
        %v3622 = vld [vmem:[#allocation4 + $0x18] sm:$0xff]
        %v3623 = vld [vmem:[#allocation4 + $0x20] sm:$0xff]
        %v3624 = vld [vmem:[#allocation4 + $0x28] sm:$0xff]
        %v3625 = vld [vmem:[#allocation4 + $0x30] sm:$0xff]
        %v3626 = vld [vmem:[#allocation4 + $0x38] sm:$0xff]
        %s3627 = scalar_lea.vmem %s4, 64
        %v3628 = vld [vmem:[%s3627] sm:$0xff]
        %v3630 = vsel %vm479, %v3611, 0
        %v3633 = vsel %vm479, %v3612, 0
        %v3636 = vsel %vm479, %v3613, 0
        %v3639 = vsel %vm479, %v3614, 0
        %v3642 = vsel %vm479, %v3615, 0
        %v3645 = vsel %vm479, %v3616, 0
        %v3648 = vsel %vm479, %v3617, 0
        %v3651 = vsel %vm479, %v3618, 0
        %3653 = vmatprep.subr.mxu0 0.0
        %3654 = vmatpush1.msra.mxu0 %v3628
        %3655 = vmatprep.subr.mxu0 0.0
        %3656 = vmatpush1.msra.mxu0 0.0
        %3657 = vmatprep.subr.mxu0 0.0
        %3658 = vmatpush1.msra.mxu0 0.0
        %3659 = vmatprep.subr.mxu0 0.0
        %3660 = vmatpush1.msra.mxu0 0.0
        %3661 = vmatprep.subr.mxu0 0.0
        %3662 = vmatpush1.msra.mxu0 0.0
        %3663 = vmatprep.subr.mxu0 0.0
        %3664 = vmatpush1.msra.mxu0 0.0
        %3665 = vmatprep.subr.mxu0 0.0
        %3666 = vmatpush1.msra.mxu0 0.0
        %3667 = vmatprep.subr.mxu0 0.0
        %3668 = vmatpush1.msra.mxu0 0.0
        %3669 = vmatprep.subr.mxu0 0.0
        %3670 = vmatpush1.msra.mxu0 0.0
        %3671 = vmatprep.subr.mxu0 0.0
        %3672 = vmatpush1.msra.mxu0 0.0
        %3673 = vmatprep.subr.mxu0 0.0
        %3674 = vmatpush1.msra.mxu0 0.0
        %3675 = vmatprep.subr.mxu0 0.0
        %3676 = vmatpush1.msra.mxu0 0.0
        %3677 = vmatprep.subr.mxu0 0.0
        %3678 = vmatpush1.msra.mxu0 0.0
        %3679 = vmatprep.subr.mxu0 0.0
        %3680 = vmatpush1.msra.mxu0 0.0
        %3681 = vmatprep.subr.mxu0 0.0
        %3682 = vmatpush1.msra.mxu0 0.0
        %3683 = vmatprep.subr.mxu0 0.0
        %3684 = vmatpush1.msra.mxu0 0.0
        %3685 = vmatprep.subr.mxu0 0.0
        %3686 = vmatpush1.msra.mxu0 0.0
        %3687 = vmatprep.subr.mxu0 0.0
        %3688 = vmatpush1.msra.mxu0 0.0
        %3689 = vmatprep.subr.mxu0 0.0
        %3690 = vmatpush1.msra.mxu0 0.0
        %3691 = vmatprep.subr.mxu0 0.0
        %3692 = vmatpush1.msra.mxu0 0.0
        %3693 = vmatprep.subr.mxu0 0.0
        %3694 = vmatpush1.msra.mxu0 0.0
        %3695 = vmatprep.subr.mxu0 0.0
        %3696 = vmatpush1.msra.mxu0 0.0
        %3697 = vmatprep.subr.mxu0 0.0
        %3698 = vmatpush1.msra.mxu0 0.0
        %3699 = vmatprep.subr.mxu0 0.0
        %3700 = vmatpush1.msra.mxu0 0.0
        %3701 = vmatprep.subr.mxu0 0.0
        %3702 = vmatpush1.msra.mxu0 0.0
        %3703 = vmatprep.subr.mxu0 0.0
        %3704 = vmatpush1.msra.mxu0 0.0
        %3705 = vmatprep.subr.mxu0 0.0
        %3706 = vmatpush1.msra.mxu0 0.0
        %3707 = vmatprep.subr.mxu0 0.0
        %3708 = vmatpush1.msra.mxu0 0.0
        %3709 = vmatprep.subr.mxu0 0.0
        %3710 = vmatpush1.msra.mxu0 0.0
        %3711 = vmatprep.subr.mxu0 0.0
        %3712 = vmatpush1.msra.mxu0 0.0
        %3713 = vmatprep.subr.mxu0 0.0
        %3714 = vmatpush1.msra.mxu0 0.0
        %3715 = vmatprep.subr.mxu0 0.0
        %3716 = vmatpush1.msra.mxu0 0.0
        %3717 = vmatprep.mubr.f32.mxu0 0.0
        %3718 = vmatmul.mubr.f32.gmra.mrb[0].mxu0 %v3630
        %v3719 = vpop.f32.mrb[0].mxu0
        %v3720 = vadd.f32 0.0, %v3719
        %v3721 = vpop.f32.mrb[0].mxu0
        %3722 = vmatprep.mubr.f32.mxu0 0.0
        %3723 = vmatmul.mubr.f32.gmra.mrb[0].mxu0 %v3633
        %v3724 = vpop.f32.mrb[0].mxu0
        %v3725 = vadd.f32 0.0, %v3724
        %v3726 = vpop.f32.mrb[0].mxu0
        %3727 = vmatprep.mubr.f32.mxu0 0.0
        %3728 = vmatmul.mubr.f32.gmra.mrb[0].mxu0 %v3636
        %v3729 = vpop.f32.mrb[0].mxu0
        %v3730 = vadd.f32 0.0, %v3729
        %v3731 = vpop.f32.mrb[0].mxu0
        %3732 = vmatprep.mubr.f32.mxu0 0.0
        %3733 = vmatmul.mubr.f32.gmra.mrb[0].mxu0 %v3639
        %v3734 = vpop.f32.mrb[0].mxu0
        %v3735 = vadd.f32 0.0, %v3734
        %v3736 = vpop.f32.mrb[0].mxu0
        %3737 = vmatprep.mubr.f32.mxu0 0.0
        %3738 = vmatmul.mubr.f32.gmra.mrb[0].mxu0 %v3642
        %v3739 = vpop.f32.mrb[0].mxu0
        %v3740 = vadd.f32 0.0, %v3739
        %v3741 = vpop.f32.mrb[0].mxu0
        %3742 = vmatprep.mubr.f32.mxu0 0.0
        %3743 = vmatmul.mubr.f32.gmra.mrb[0].mxu0 %v3645
        %v3744 = vpop.f32.mrb[0].mxu0
        %v3745 = vadd.f32 0.0, %v3744
        %v3746 = vpop.f32.mrb[0].mxu0
        %3747 = vmatprep.mubr.f32.mxu0 0.0
        %3748 = vmatmul.mubr.f32.gmra.mrb[0].mxu0 %v3648
        %v3749 = vpop.f32.mrb[0].mxu0
        %v3750 = vadd.f32 0.0, %v3749
        %v3751 = vpop.f32.mrb[0].mxu0
        %3752 = vmatprep.mubr.f32.mxu0 0.0
        %3753 = vmatmul.mubr.f32.gmra.mrb[0].mxu0 %v3651
        %v3754 = vpop.f32.mrb[0].mxu0
        %v3755 = vadd.f32 0.0, %v3754
        %v3756 = vpop.f32.mrb[0].mxu0
        %3757 = vdwg.mxu0
        %v3758 = vadd.f32 %v3619, %v3720
        %v3759 = vadd.f32 %v3620, %v3725
        %v3760 = vadd.f32 %v3621, %v3730
        %v3761 = vadd.f32 %v3622, %v3735
        %v3762 = vadd.f32 %v3623, %v3740
        %v3763 = vadd.f32 %v3624, %v3745
        %v3764 = vadd.f32 %v3625, %v3750
        %v3765 = vadd.f32 %v3626, %v3755
        %3766 = vst.msk [vmem:[#allocation4] sm:$0xff] %vm479, %v3758
        %3767 = vst.msk [vmem:[#allocation4 + $0x8] sm:$0xff] %vm479, %v3759
        %3768 = vst.msk [vmem:[#allocation4 + $0x10] sm:$0xff] %vm479, %v3760
        %3769 = vst.msk [vmem:[#allocation4 + $0x18] sm:$0xff] %vm479, %v3761
        %3770 = vst.msk [vmem:[#allocation4 + $0x20] sm:$0xff] %vm479, %v3762
        %3771 = vst.msk [vmem:[#allocation4 + $0x28] sm:$0xff] %vm479, %v3763
        %3772 = vst.msk [vmem:[#allocation4 + $0x30] sm:$0xff] %vm479, %v3764
        %3773 = vst.msk [vmem:[#allocation4 + $0x38] sm:$0xff] %vm479, %v3765
        %v3774 = vld [vmem:[#allocation4] sm:$0xff]
        %v3775 = vld [vmem:[#allocation4 + $0x8] sm:$0xff]
        %v3776 = vld [vmem:[#allocation4 + $0x10] sm:$0xff]
        %v3777 = vld [vmem:[#allocation4 + $0x18] sm:$0xff]
        %v3778 = vld [vmem:[#allocation4 + $0x20] sm:$0xff]
        %v3779 = vld [vmem:[#allocation4 + $0x28] sm:$0xff]
        %v3780 = vld [vmem:[#allocation4 + $0x30] sm:$0xff]
        %v3781 = vld [vmem:[#allocation4 + $0x38] sm:$0xff]
        %v3782 = vld [vmem:[%s5] sm:$0x1]
        %v3784 = vlaneseq
        %v3785 = vshrl.u32 %v3784, 7
        %v3786 = vsub.s32 0, %v3785
        %v3787 = vrot.slane %v3782, %v3786
        %v3789 = vmul.f32 %v3774, %v3787
        %v3790 = vmul.f32 %v3775, %v3787
        %v3791 = vmul.f32 %v3776, %v3787
        %v3792 = vmul.f32 %v3777, %v3787
        %v3793 = vmul.f32 %v3778, %v3787
        %v3794 = vmul.f32 %v3779, %v3787
        %v3795 = vmul.f32 %v3780, %v3787
        %v3796 = vmul.f32 %v3781, %v3787
        %v3797 = vld [vmem:[%s6] sm:$0x1]
        %v3799 = vlaneseq
        %v3800 = vshrl.u32 %v3799, 7
        %v3801 = vsub.s32 0, %v3800
        %v3802 = vrot.slane %v3797, %v3801
        %v3804 = vadd.f32 %v3789, %v3802
        %v3805 = vadd.f32 %v3790, %v3802
        %v3806 = vadd.f32 %v3791, %v3802
        %v3807 = vadd.f32 %v3792, %v3802
        %v3808 = vadd.f32 %v3793, %v3802
        %v3809 = vadd.f32 %v3794, %v3802
        %v3810 = vadd.f32 %v3795, %v3802
        %v3811 = vadd.f32 %v3796, %v3802
        %v3812 = vadd.f32 %v3804, %v2291
        %v3813 = vadd.f32 %v3805, %v2292
        %v3814 = vadd.f32 %v3806, %v2293
        %v3815 = vadd.f32 %v3807, %v2294
        %v3816 = vadd.f32 %v3808, %v2295
        %v3817 = vadd.f32 %v3809, %v2296
        %v3818 = vadd.f32 %v3810, %v2297
        %v3819 = vadd.f32 %v3811, %v2298
        %v3820 = vmax.f32 %v3812, 0.0
        %v3821 = vmax.f32 %v3813, 0.0
        %v3822 = vmax.f32 %v3814, 0.0
        %v3823 = vmax.f32 %v3815, 0.0
        %v3824 = vmax.f32 %v3816, 0.0
        %v3825 = vmax.f32 %v3817, 0.0
        %v3826 = vmax.f32 %v3818, 0.0
        %v3827 = vmax.f32 %v3819, 0.0
        %3828 = vst.msk [vmem:[%s352] sm:$0xff] %vm479, %v3820
        %3829 = vst.msk [vmem:[%s352 + $0x8] sm:$0xff] %vm479, %v3821
        %3830 = vst.msk [vmem:[%s352 + $0x10] sm:$0xff] %vm479, %v3822
        %3831 = vst.msk [vmem:[%s352 + $0x18] sm:$0xff] %vm479, %v3823
        %3832 = vst.msk [vmem:[%s352 + $0x20] sm:$0xff] %vm479, %v3824
        %3833 = vst.msk [vmem:[%s352 + $0x28] sm:$0xff] %vm479, %v3825
        %3834 = vst.msk [vmem:[%s352 + $0x30] sm:$0xff] %vm479, %v3826
        %3835 = vst.msk [vmem:[%s352 + $0x38] sm:$0xff] %vm479, %v3827
        %s3836 = sand.u32 %s247, 1
        %s3837 = scalar_lea.sflag [#allocation6], %s3836
        %s3838 = sand.u32 %s247, 1
        %s3839 = smul.addr %s3838, 64
        %s3840 = scalar_lea.vmem [#allocation5], %s3839
        // Predicated region
        $region61: #{tpu_custom_call.1} parent=59 // pred_check
          %p3841 = pneg %p257
        $region62: #{tpu_custom_call.1} parent=59 // pred_check_branch
          %3843 = sbr.rel (%p3841) target = $region64
        $region63: #{tpu_custom_call.1} parent=59 // pred_region
          %s3845 = ssub.s32 1024, 1024
          %3846 = vsyncadd %s3837, %s3845
          %s3847 = smul.addr %s24, 8
          %s3848 = smul.addr %s3847, 128
          %s3849 = scalar_lea.hbm %s10, %s3848
          %s3850 = sshll.u32 %s3840, 4
          %s3851 = int_to_ptr.vmem [resolvable:$true] %s3850
          %3856 = dma.vmem_to_hbm [thread:$0]  %s3851, 1024, %s3849, %s3837, 128, 128, 8
        $region64: #{tpu_custom_call.1} parent=59 // pred_fallthru
          _
      $region60: #{tpu_custom_call.1} parent=5 // pred_fallthru
        _
      %p3857 = scmp.le.s32.totalorder 2, %s19
      // Predicated region
      $region65: #{tpu_custom_call.1} parent=5 // pred_check
        %p3858 = pneg %p3857
      $region66: #{tpu_custom_call.1} parent=5 // pred_check_branch
        %3860 = sbr.rel (%p3858) target = $region68
      $region67: #{tpu_custom_call.1} parent=5 // pred_region
        %s3861 = ssub.s32 %s19, 2
        // Predicated region
        $region69: #{tpu_custom_call.1} parent=67 // pred_check
          %p3862 = pneg %p263
        $region70: #{tpu_custom_call.1} parent=67 // pred_check_branch
          %3864 = sbr.rel (%p3862) target = $region72
        $region71: #{tpu_custom_call.1} parent=67 // pred_region
          %s3865 = sand.u32 %s248, 1
          %s3866 = scalar_lea.sflag [#allocation6], %s3865
          %s3867 = sand.u32 %s248, 1
          %s3868 = smul.addr %s3867, 64
          %s3869 = scalar_lea.vmem [#allocation5], %s3868
          %3870 = dma.done %s3866, 1024
        $region72: #{tpu_custom_call.1} parent=67 // pred_fallthru
          _
      $region68: #{tpu_custom_call.1} parent=5 // pred_fallthru
        _
    $region6: #{tpu_custom_call.1} parent=1 // loop_footer
      %s23 = sadd.s32 1, %s19
    $region7: #{tpu_custom_call.1} parent=1 // loop_footer_branch
      %18 = sbr.rel target = $region3
    $region8: #{tpu_custom_call.1} parent=1 // loop_exit
      _
    %3871 = vsyncpa [#allocation6], 1
    %s3872 = scalar_lea.sflag [#allocation6], 1
    %3873 = vsyncpa %s3872, 1

</llo_original>
